<compile_context>
chip_gen: v6e
topology: v6e:2x2x1
jax: 0.10.0
libtpu: 0.0.40
codegen_flags: <defaults>
</compile_context>

<pallas_src>
import functools
import math

import jax
import jax.numpy as jnp
from jax import lax
from jax.experimental import pallas as pl
from jax.experimental.pallas import tpu as pltpu


# ----------------------------------------------------------------------------
# Kernel: one (batch b, head h) grid step
# ----------------------------------------------------------------------------
def _mha_head_kernel(hm_ref, vm_ref, xq_ref, xk_ref, xv_ref,
                     wq_ref, wk_ref, wv_ref, wo_ref, b_ref,
                     out_ref, acc_ref, *, causal, compute_dtype):
    h = pl.program_id(1)

    @pl.when(h == 0)
    def _init():
        acc_ref[...] = jnp.zeros_like(acc_ref)

    # MXU operands in compute_dtype (bf16 fast path), f32 accumulation everywhere.
    dot_kwargs = dict(preferred_element_type=jnp.float32)
    if compute_dtype == jnp.float32:
        # exact f32 passes so the f32 path matches the PyTorch-faithful reference
        dot_kwargs["precision"] = lax.Precision.HIGHEST

    xq = xq_ref[0]            # (T, dm)   already compute_dtype (cast once in wrapper)
    xk = xk_ref[0]
    xv = xv_ref[0]
    wq = wq_ref[0]            # (dm, d_k) this head's block (BlockSpec-selected)
    wk = wk_ref[0]
    wv = wv_ref[0]            # (dm, d_v)
    wo = wo_ref[0]            # (d_v, dm) this head's slice of W_o^T

    d_k = wq.shape[-1]

    q = jnp.dot(xq, wq, **dot_kwargs)      # (T, d_k) f32
    k = jnp.dot(xk, wk, **dot_kwargs)      # (T, d_k) f32
    v = jnp.dot(xv, wv, **dot_kwargs)      # (T, d_v) f32

    # scores = q @ k^T / d_k  (contract last axes -> no in-kernel transpose;
    # the PyTorch module divides by d_k, NOT sqrt(d_k))
    scores = lax.dot_general(q.astype(compute_dtype), k.astype(compute_dtype),
                             (((1,), (1,)), ((), ())), **dot_kwargs)
    scores = scores * jnp.float32(1.0 / d_k)

    # Padding mask built in-kernel from (T,1) x (1,T) vectors (one VPU outer product)
    # instead of a materialized (B,T,T) HBM mask stream.
    pad = hm_ref[0] * vm_ref[0]                               # (T,1)*(1,T) -> (T,T) f32
    scores = scores * pad
    # torch: new_scores.masked_fill(new_scores == 0, 1e-10)
    scores = jnp.where(scores == 0.0, jnp.float32(1e-10), scores)

    if causal:
        T = scores.shape[0]
        row = lax.broadcasted_iota(jnp.int32, (T, T), 0)
        col = lax.broadcasted_iota(jnp.int32, (T, T), 1)
        scores = jnp.where(col > row, -jnp.inf, scores)       # triu(-inf, diagonal=1)

    # Softmax over keys. Elementwise math stays f32; exact reciprocal (the approx EUP
    # reciprocal was part of the previous correctness failure).
    m = jnp.max(scores, axis=-1, keepdims=True)
    e = jnp.exp(scores - m)
    p = e / jnp.sum(e, axis=-1, keepdims=True)

    oh = jnp.dot(p.astype(compute_dtype), v.astype(compute_dtype), **dot_kwargs)  # (T, d_v)

    # Fused nn.Linear: accumulate this head's contribution of concat @ W_o^T.
    acc_ref[...] += jnp.dot(oh.astype(compute_dtype), wo, **dot_kwargs)

    @pl.when(h == pl.num_programs(1) - 1)
    def _finalize():
        out_ref[0] = (acc_ref[...] + b_ref[...]).astype(out_ref.dtype)


# ----------------------------------------------------------------------------
# One-time parameter prep (hoisted out of the per-call path)
# ----------------------------------------------------------------------------
def pack_params(params, compute_dtype=jnp.bfloat16):
    H, dm, _ = params["w_q"].shape
    d_v = params["w_v"].shape[-1]
    w_q = params["w_q"].astype(compute_dtype)                 # (H, dm, d_k)
    w_k = params["w_k"].astype(compute_dtype)
    w_v = params["w_v"].astype(compute_dtype)                 # (H, dm, d_v)
    # nn.Linear(d_v*H, dm): y = concat @ W^T + b; per-head slice of W^T is (d_v, dm)
    w_o3 = params["w_o"].T.reshape(H, d_v, dm).astype(compute_dtype)
    b2 = params["b_o"].reshape(1, dm).astype(jnp.float32)
    return {"w_q": w_q, "w_k": w_k, "w_v": w_v, "w_o3": w_o3, "b2": b2}


# ----------------------------------------------------------------------------
# Wrapper
# ----------------------------------------------------------------------------
def multi_head_attention(xq, xk, xv, vmask, hmask, packed, *, causal):
    w_q, w_k, w_v = packed["w_q"], packed["w_k"], packed["w_v"]
    w_o3, b2 = packed["w_o3"], packed["b2"]
    compute_dtype = w_q.dtype

    B, T, dm = xq.shape
    H, _, d_k = w_q.shape
    d_v = w_v.shape[-1]

    # bf16 activations halve the HBM stream on the fast path (no-op for the f32 check).
    xq = xq.astype(compute_dtype)
    xk = xk.astype(compute_dtype)
    xv = xv.astype(compute_dtype)

    # (B,T) pad-mask vectors; the (T,T) outer product is formed in-kernel.
    hm3 = hmask.astype(jnp.float32).reshape(B, T, 1)   # masks query rows
    vm3 = vmask.astype(jnp.float32).reshape(B, 1, T)   # masks key columns

    # vmem_limit sized from the actual blocks (double-buffered) + scratch + margin.
    act_bytes = jnp.dtype(compute_dtype).itemsize
    blocks = (3 * T * dm * act_bytes + 2 * T * 4 + dm * 4 + T * dm * 4
              + (2 * dm * d_k + dm * d_v + d_v * dm) * act_bytes)
    vmem_limit = int(min(max(4 * (2 * blocks + T * dm * 4), 16 * 2**20), 48 * 2**20))

    kernel = functools.partial(_mha_head_kernel, causal=causal,
                               compute_dtype=compute_dtype)

    return pl.pallas_call(
        kernel,
        out_shape=jax.ShapeDtypeStruct((B, T, dm), jnp.float32),
        grid=(B, H),   # batch parallel (feeds both v7x TCs), heads = reduction axis
        in_specs=[
            pl.BlockSpec((1, T, 1), lambda b, h: (b, 0, 0)),      # hmask (query rows)
            pl.BlockSpec((1, 1, T), lambda b, h: (b, 0, 0)),      # vmask (key cols)
            pl.BlockSpec((1, T, dm), lambda b, h: (b, 0, 0)),     # xq (resident across h)
            pl.BlockSpec((1, T, dm), lambda b, h: (b, 0, 0)),     # xk
            pl.BlockSpec((1, T, dm), lambda b, h: (b, 0, 0)),     # xv
            pl.BlockSpec((1, dm, d_k), lambda b, h: (h, 0, 0)),   # w_q[h]
            pl.BlockSpec((1, dm, d_k), lambda b, h: (h, 0, 0)),   # w_k[h]
            pl.BlockSpec((1, dm, d_v), lambda b, h: (h, 0, 0)),   # w_v[h]
            pl.BlockSpec((1, d_v, dm), lambda b, h: (h, 0, 0)),   # W_o^T[h]
            pl.BlockSpec((1, dm), lambda b, h: (0, 0)),           # bias (resident)
        ],
        out_specs=pl.BlockSpec((1, T, dm), lambda b, h: (b, 0, 0)),  # lane-dense (T, dm)
        scratch_shapes=[pltpu.VMEM((T, dm), jnp.float32)],           # fused-proj accumulator
        compiler_params=pltpu.CompilerParams(
            dimension_semantics=("parallel", "arbitrary"),
            vmem_limit_bytes=vmem_limit),
    )(hm3, vm3, xq, xk, xv, w_q, w_k, w_v, w_o3, b2)


# ----------------------------------------------------------------------------
# Pure-JAX reference (mirrors the PyTorch forward exactly; full-f32 contractions)
# ----------------------------------------------------------------------------
def reference(xq, xk, xv, vmask, hmask, params, *, causal):
    hp = lax.Precision.HIGHEST
    w_q, w_k, w_v = params["w_q"], params["w_k"], params["w_v"]
    w_o, b_o = params["w_o"], params["b_o"]
    B, T, dm = xq.shape
    d_k = w_q.shape[-1]

    q = jnp.einsum("btd,hdk->bhtk", xq, w_q, precision=hp)
    k = jnp.einsum("btd,hdk->bhtk", xk, w_k, precision=hp)
    v = jnp.einsum("btd,hdv->bhtv", xv, w_v, precision=hp)
    scores = jnp.einsum("bhik,bhjk->bhij", q, k, precision=hp) / jnp.float32(d_k)
    pad = hmask[:, None, :, None] * vmask[:, None, None, :]
    scores = scores * pad
    scores = jnp.where(scores == 0.0, jnp.float32(1e-10), scores)
    if causal:
        tri = jnp.triu(jnp.full((T, T), -jnp.inf, dtype=jnp.float32), k=1)
        scores = scores + tri
    p = jax.nn.softmax(scores, axis=-1)
    out = jnp.einsum("bhij,bhjv->bhiv", p, v, precision=hp)
    concat = jnp.transpose(out, (0, 2, 1, 3)).reshape(B, T, -1)
    return jnp.einsum("btf,df->btd", concat, w_o, precision=hp) + b_o


if __name__ == "__main__":
    # Small shapes consistent with the module
    B, T, dm = 2, 8, 32
    H, d_k, d_v = 2, 8, 8
    use_mask = True        # SelfAttention causal-mask flag
    use_bias = True        # Linear bias flag

    key = jax.random.PRNGKey(0)
    keys = jax.random.split(key, 10)

    # Deterministic parameter init (shapes match the PyTorch __init__)
    std_k = 1.0 / math.sqrt(d_k)
    std_v = 1.0 / math.sqrt(d_v)
    params = {
        "w_q": jax.random.normal(keys[0], (H, dm, d_k), jnp.float32) * std_k,
        "w_k": jax.random.normal(keys[1], (H, dm, d_k), jnp.float32) * std_k,
        "w_v": jax.random.normal(keys[2], (H, dm, d_v), jnp.float32) * std_v,
        "w_o": jax.random.uniform(keys[3], (dm, d_v * H), jnp.float32,
                                  minval=-1.0 / math.sqrt(d_v * H),
                                  maxval=1.0 / math.sqrt(d_v * H)),
        "b_o": (jax.random.uniform(keys[4], (dm,), jnp.float32,
                                   minval=-1.0 / math.sqrt(d_v * H),
                                   maxval=1.0 / math.sqrt(d_v * H))
                if use_bias else jnp.zeros((dm,), jnp.float32)),
    }

    xq = jax.random.normal(keys[5], (B, T, dm), jnp.float32)
    xk = jax.random.normal(keys[6], (B, T, dm), jnp.float32)
    xv = jax.random.normal(keys[7], (B, T, dm), jnp.float32)
    vmask = (jax.random.uniform(keys[8], (B, T)) > 0.3).astype(jnp.float32)
    hmask = (jax.random.uniform(keys[9], (B, T)) > 0.3).astype(jnp.float32)

    ref = reference(xq, xk, xv, vmask, hmask, params, causal=use_mask)

    # --- f32 MXU-operand path: tight check against the PyTorch-faithful reference ---
    packed_f32 = pack_params(params, compute_dtype=jnp.float32)
    out_f32 = multi_head_attention(xq, xk, xv, vmask, hmask, packed_f32, causal=use_mask)
    out_f32 = jax.block_until_ready(out_f32)
    assert out_f32.shape == (B, T, dm)
    assert jnp.allclose(out_f32, ref, rtol=2e-3, atol=2e-3), "f32 kernel mismatch vs reference"

    # --- bf16 MXU-operand path (perf config): bf16-appropriate tolerance ---
    packed_bf16 = pack_params(params, compute_dtype=jnp.bfloat16)
    out_bf16 = multi_head_attention(xq, xk, xv, vmask, hmask, packed_bf16, causal=use_mask)
    out_bf16 = jax.block_until_ready(out_bf16)
    assert out_bf16.shape == (B, T, dm)
    assert jnp.allclose(out_bf16, ref, rtol=6e-2, atol=1e-1), "bf16 kernel mismatch vs reference"

    print("KERNEL_OK")
</pallas_src>

<mosaic_0001>
module attributes {stable_mosaic.version = 11 : i64} {
  func.func @_mha_head_kernel(%arg0: i32, %arg1: i32, %arg2: memref<1x8x1xf32, #tpu.memory_space<vmem>>, %arg3: memref<1x1x8xf32, #tpu.memory_space<vmem>>, %arg4: memref<1x8x32xf32, #tpu.memory_space<vmem>>, %arg5: memref<1x8x32xf32, #tpu.memory_space<vmem>>, %arg6: memref<1x8x32xf32, #tpu.memory_space<vmem>>, %arg7: memref<1x32x8xf32, #tpu.memory_space<vmem>>, %arg8: memref<1x32x8xf32, #tpu.memory_space<vmem>>, %arg9: memref<1x32x8xf32, #tpu.memory_space<vmem>>, %arg10: memref<1x8x32xf32, #tpu.memory_space<vmem>>, %arg11: memref<1x32xf32, #tpu.memory_space<vmem>>, %arg12: memref<1x8x32xf32, #tpu.memory_space<vmem>>, %arg13: memref<8x32xf32, #tpu.memory_space<vmem>>) attributes {dimension_semantics = [#tpu.dimension_semantics<parallel>, #tpu.dimension_semantics<arbitrary>], iteration_bounds = array<i64: 2, 2>, scalar_prefetch = 0 : i64, scratch_operands = 1 : i64, tpu.core_type = #tpu.core_type<tc>, window_params = [{transform_indices = @transform_0, window_bounds = array<i64: 1, 8, 1>}, {transform_indices = @transform_1, window_bounds = array<i64: 1, 1, 8>}, {transform_indices = @transform_2, window_bounds = array<i64: 1, 8, 32>}, {transform_indices = @transform_3, window_bounds = array<i64: 1, 8, 32>}, {transform_indices = @transform_4, window_bounds = array<i64: 1, 8, 32>}, {transform_indices = @transform_5, window_bounds = array<i64: 1, 32, 8>}, {transform_indices = @transform_6, window_bounds = array<i64: 1, 32, 8>}, {transform_indices = @transform_7, window_bounds = array<i64: 1, 32, 8>}, {transform_indices = @transform_8, window_bounds = array<i64: 1, 8, 32>}, {pipeline_mode = #tpu.pipeline_mode<synchronous>, transform_indices = @transform_9, window_bounds = array<i64: 1, 32>}, {transform_indices = @transform_10, window_bounds = array<i64: 1, 8, 32>}]} {
    %c0_i32 = arith.constant 0 : i32
    %0 = arith.cmpi eq, %arg1, %c0_i32 : i32
    %1 = arith.extui %0 : i1 to i32
    %c0_i32_0 = arith.constant 0 : i32
    %2 = arith.cmpi ne, %1, %c0_i32_0 : i32
    scf.if %2 {
      %cst_43 = arith.constant 0.000000e+00 : f32
      %57 = vector.broadcast %cst_43 : f32 to vector<8x32xf32>
      %c0_44 = arith.constant 0 : index
      %c0_45 = arith.constant 0 : index
      %58 = vector.load %arg13[%c0_44, %c0_45] : memref<8x32xf32, #tpu.memory_space<vmem>>, vector<8x32xf32>
      tpu.vector_store %arg13[%c0_44, %c0_45], %57 {strides = array<i32>} : memref<8x32xf32, #tpu.memory_space<vmem>>, vector<8x32xf32>,
    } else {
    }
    %c0 = arith.constant 0 : index
    %c0_1 = arith.constant 0 : index
    %c0_2 = arith.constant 0 : index
    %3 = vector.load %arg4[%c0, %c0_1, %c0_2] : memref<1x8x32xf32, #tpu.memory_space<vmem>>, vector<1x8x32xf32>
    %4 = vector.shape_cast %3 : vector<1x8x32xf32> to vector<8x32xf32>
    %c0_3 = arith.constant 0 : index
    %c0_4 = arith.constant 0 : index
    %c0_5 = arith.constant 0 : index
    %5 = vector.load %arg5[%c0_3, %c0_4, %c0_5] : memref<1x8x32xf32, #tpu.memory_space<vmem>>, vector<1x8x32xf32>
    %6 = vector.shape_cast %5 : vector<1x8x32xf32> to vector<8x32xf32>
    %c0_6 = arith.constant 0 : index
    %c0_7 = arith.constant 0 : index
    %c0_8 = arith.constant 0 : index
    %7 = vector.load %arg6[%c0_6, %c0_7, %c0_8] : memref<1x8x32xf32, #tpu.memory_space<vmem>>, vector<1x8x32xf32>
    %8 = vector.shape_cast %7 : vector<1x8x32xf32> to vector<8x32xf32>
    %c0_9 = arith.constant 0 : index
    %c0_10 = arith.constant 0 : index
    %c0_11 = arith.constant 0 : index
    %9 = vector.load %arg7[%c0_9, %c0_10, %c0_11] : memref<1x32x8xf32, #tpu.memory_space<vmem>>, vector<1x32x8xf32>
    %10 = vector.shape_cast %9 : vector<1x32x8xf32> to vector<32x8xf32>
    %c0_12 = arith.constant 0 : index
    %c0_13 = arith.constant 0 : index
    %c0_14 = arith.constant 0 : index
    %11 = vector.load %arg8[%c0_12, %c0_13, %c0_14] : memref<1x32x8xf32, #tpu.memory_space<vmem>>, vector<1x32x8xf32>
    %12 = vector.shape_cast %11 : vector<1x32x8xf32> to vector<32x8xf32>
    %c0_15 = arith.constant 0 : index
    %c0_16 = arith.constant 0 : index
    %c0_17 = arith.constant 0 : index
    %13 = vector.load %arg9[%c0_15, %c0_16, %c0_17] : memref<1x32x8xf32, #tpu.memory_space<vmem>>, vector<1x32x8xf32>
    %14 = vector.shape_cast %13 : vector<1x32x8xf32> to vector<32x8xf32>
    %c0_18 = arith.constant 0 : index
    %c0_19 = arith.constant 0 : index
    %c0_20 = arith.constant 0 : index
    %15 = vector.load %arg10[%c0_18, %c0_19, %c0_20] : memref<1x8x32xf32, #tpu.memory_space<vmem>>, vector<1x8x32xf32>
    %16 = vector.shape_cast %15 : vector<1x8x32xf32> to vector<8x32xf32>
    %cst = arith.constant dense<0.000000e+00> : vector<8x8xf32>
    %17 = tpu.matmul %4, %10, %cst {dimension_numbers = #tpu.dot_dimension_numbers<[1], [0], [0], [1], [0, 0, 1, 1], [], []>, precision = #tpu.contract_precision<fp32>} : vector<8x32xf32>, vector<32x8xf32>, vector<8x8xf32> -> vector<8x8xf32>
    %cst_21 = arith.constant dense<0.000000e+00> : vector<8x8xf32>
    %18 = tpu.matmul %6, %12, %cst_21 {dimension_numbers = #tpu.dot_dimension_numbers<[1], [0], [0], [1], [0, 0, 1, 1], [], []>, precision = #tpu.contract_precision<fp32>} : vector<8x32xf32>, vector<32x8xf32>, vector<8x8xf32> -> vector<8x8xf32>
    %cst_22 = arith.constant dense<0.000000e+00> : vector<8x8xf32>
    %19 = tpu.matmul %8, %14, %cst_22 {dimension_numbers = #tpu.dot_dimension_numbers<[1], [0], [0], [1], [0, 0, 1, 1], [], []>, precision = #tpu.contract_precision<fp32>} : vector<8x32xf32>, vector<32x8xf32>, vector<8x8xf32> -> vector<8x8xf32>
    %cst_23 = arith.constant dense<0.000000e+00> : vector<8x8xf32>
    %20 = tpu.matmul %17, %18, %cst_23 {dimension_numbers = #tpu.dot_dimension_numbers<[1], [1], [0], [0], [0, 0, 1, 0], [], []>, precision = #tpu.contract_precision<fp32>} : vector<8x8xf32>, vector<8x8xf32>, vector<8x8xf32> -> vector<8x8xf32>
    %cst_24 = arith.constant 1.250000e-01 : f32
    %21 = vector.broadcast %cst_24 : f32 to vector<8x8xf32>
    %22 = arith.mulf %20, %21 : vector<8x8xf32>
    %c0_25 = arith.constant 0 : index
    %c0_26 = arith.constant 0 : index
    %c0_27 = arith.constant 0 : index
    %23 = vector.load %arg2[%c0_25, %c0_26, %c0_27] : memref<1x8x1xf32, #tpu.memory_space<vmem>>, vector<1x8x1xf32>
    %24 = vector.shape_cast %23 : vector<1x8x1xf32> to vector<8x1xf32>
    %c0_28 = arith.constant 0 : index
    %c0_29 = arith.constant 0 : index
    %c0_30 = arith.constant 0 : index
    %25 = vector.load %arg3[%c0_28, %c0_29, %c0_30] : memref<1x1x8xf32, #tpu.memory_space<vmem>>, vector<1x1x8xf32>
    %26 = vector.shape_cast %25 : vector<1x1x8xf32> to vector<1x8xf32>
    %27 = vector.broadcast %24 : vector<8x1xf32> to vector<8x8xf32>
    %28 = vector.broadcast %26 : vector<1x8xf32> to vector<8x8xf32>
    %29 = arith.mulf %27, %28 : vector<8x8xf32>
    %30 = arith.mulf %22, %29 : vector<8x8xf32>
    %cst_31 = arith.constant 0.000000e+00 : f32
    %31 = vector.broadcast %cst_31 : f32 to vector<8x8xf32>
    %32 = arith.cmpf oeq, %30, %31 : vector<8x8xf32>
    %cst_32 = arith.constant 1.000000e-10 : f32
    %33 = vector.broadcast %cst_32 : f32 to vector<8x8xf32>
    %34 = arith.select %32, %33, %30 : vector<8x8xi1>, vector<8x8xf32>
    %35 = tpu.iota {dimensions = array<i32: 0>} : vector<8x8xi32>
    %36 = tpu.iota {dimensions = array<i32: 1>} : vector<8x8xi32>
    %37 = arith.cmpi sgt, %36, %35 : vector<8x8xi32>
    %cst_33 = arith.constant 0xFF800000 : f32
    %38 = vector.broadcast %cst_33 : f32 to vector<8x8xf32>
    %39 = arith.select %37, %38, %34 : vector<8x8xi1>, vector<8x8xf32>
    %cst_34 = arith.constant dense<0xFF800000> : vector<8xf32>
    %40 = vector.multi_reduction <maximumf>, %39, %cst_34 [1] : vector<8x8xf32> to vector<8xf32>
    %41 = vector.shape_cast %40 : vector<8xf32> to vector<8x1xf32>
    %42 = vector.broadcast %41 : vector<8x1xf32> to vector<8x8xf32>
    %43 = arith.subf %39, %42 : vector<8x8xf32>
    %44 = math.exp %43 : vector<8x8xf32>
    %cst_35 = arith.constant dense<0.000000e+00> : vector<8xf32>
    %45 = vector.multi_reduction <add>, %44, %cst_35 [1] : vector<8x8xf32> to vector<8xf32>
    %46 = vector.shape_cast %45 : vector<8xf32> to vector<8x1xf32>
    %47 = vector.broadcast %46 : vector<8x1xf32> to vector<8x8xf32>
    %48 = arith.divf %44, %47 : vector<8x8xf32>
    %cst_36 = arith.constant dense<0.000000e+00> : vector<8x8xf32>
    %49 = tpu.matmul %48, %19, %cst_36 {dimension_numbers = #tpu.dot_dimension_numbers<[1], [0], [0], [1], [0, 0, 1, 1], [], []>, precision = #tpu.contract_precision<fp32>} : vector<8x8xf32>, vector<8x8xf32>, vector<8x8xf32> -> vector<8x8xf32>
    %c0_37 = arith.constant 0 : index
    %c0_38 = arith.constant 0 : index
    %50 = vector.load %arg13[%c0_37, %c0_38] : memref<8x32xf32, #tpu.memory_space<vmem>>, vector<8x32xf32>
    %cst_39 = arith.constant dense<0.000000e+00> : vector<8x32xf32>
    %51 = tpu.matmul %49, %16, %cst_39 {dimension_numbers = #tpu.dot_dimension_numbers<[1], [0], [0], [1], [0, 0, 1, 1], [], []>, precision = #tpu.contract_precision<fp32>} : vector<8x8xf32>, vector<8x32xf32>, vector<8x32xf32> -> vector<8x32xf32>
    %52 = arith.addf %50, %51 : vector<8x32xf32>
    %c0_40 = arith.constant 0 : index
    %c0_41 = arith.constant 0 : index
    %53 = vector.load %arg13[%c0_40, %c0_41] : memref<8x32xf32, #tpu.memory_space<vmem>>, vector<8x32xf32>
    tpu.vector_store %arg13[%c0_40, %c0_41], %52 {strides = array<i32>} : memref<8x32xf32, #tpu.memory_space<vmem>>, vector<8x32xf32>,
    %c1_i32 = arith.constant 1 : i32
    %54 = arith.cmpi eq, %arg1, %c1_i32 : i32
    %55 = arith.extui %54 : i1 to i32
    %c0_i32_42 = arith.constant 0 : i32
    %56 = arith.cmpi ne, %55, %c0_i32_42 : i32
    scf.if %56 {
      %c0_43 = arith.constant 0 : index
      %c0_44 = arith.constant 0 : index
      %57 = vector.load %arg13[%c0_43, %c0_44] : memref<8x32xf32, #tpu.memory_space<vmem>>, vector<8x32xf32>
      %c0_45 = arith.constant 0 : index
      %c0_46 = arith.constant 0 : index
      %58 = vector.load %arg11[%c0_45, %c0_46] : memref<1x32xf32, #tpu.memory_space<vmem>>, vector<1x32xf32>
      %59 = vector.broadcast %58 : vector<1x32xf32> to vector<8x32xf32>
      %60 = arith.addf %57, %59 : vector<8x32xf32>
      %c0_47 = arith.constant 0 : index
      %c0_48 = arith.constant 0 : index
      %c0_49 = arith.constant 0 : index
      %61 = vector.load %arg12[%c0_47, %c0_48, %c0_49] : memref<1x8x32xf32, #tpu.memory_space<vmem>>, vector<1x8x32xf32>
      %62 = vector.shape_cast %61 : vector<1x8x32xf32> to vector<8x32xf32>
      %63 = vector.shape_cast %60 : vector<8x32xf32> to vector<1x8x32xf32>
      tpu.vector_store %arg12[%c0_47, %c0_48, %c0_49], %63 {strides = array<i32>} : memref<1x8x32xf32, #tpu.memory_space<vmem>>, vector<1x8x32xf32>,
    } else {
    }
    return
  }
  func.func @transform_0(%arg0: i32, %arg1: i32) -> (i32, i32, i32) {
    %c0_i32 = arith.constant 0 : i32
    %c0_i32_0 = arith.constant 0 : i32
    %c0_i32_1 = arith.constant 0 : i32
    return %arg0, %c0_i32, %c0_i32_0 : i32, i32, i32
  }
  func.func @transform_1(%arg0: i32, %arg1: i32) -> (i32, i32, i32) {
    %c0_i32 = arith.constant 0 : i32
    %c0_i32_0 = arith.constant 0 : i32
    %c0_i32_1 = arith.constant 0 : i32
    return %arg0, %c0_i32, %c0_i32_0 : i32, i32, i32
  }
  func.func @transform_2(%arg0: i32, %arg1: i32) -> (i32, i32, i32) {
    %c0_i32 = arith.constant 0 : i32
    %c0_i32_0 = arith.constant 0 : i32
    %c0_i32_1 = arith.constant 0 : i32
    return %arg0, %c0_i32, %c0_i32_0 : i32, i32, i32
  }
  func.func @transform_3(%arg0: i32, %arg1: i32) -> (i32, i32, i32) {
    %c0_i32 = arith.constant 0 : i32
    %c0_i32_0 = arith.constant 0 : i32
    %c0_i32_1 = arith.constant 0 : i32
    return %arg0, %c0_i32, %c0_i32_0 : i32, i32, i32
  }
  func.func @transform_4(%arg0: i32, %arg1: i32) -> (i32, i32, i32) {
    %c0_i32 = arith.constant 0 : i32
    %c0_i32_0 = arith.constant 0 : i32
    %c0_i32_1 = arith.constant 0 : i32
    return %arg0, %c0_i32, %c0_i32_0 : i32, i32, i32
  }
  func.func @transform_5(%arg0: i32, %arg1: i32) -> (i32, i32, i32) {
    %c0_i32 = arith.constant 0 : i32
    %c0_i32_0 = arith.constant 0 : i32
    %c0_i32_1 = arith.constant 0 : i32
    return %arg1, %c0_i32, %c0_i32_0 : i32, i32, i32
  }
  func.func @transform_6(%arg0: i32, %arg1: i32) -> (i32, i32, i32) {
    %c0_i32 = arith.constant 0 : i32
    %c0_i32_0 = arith.constant 0 : i32
    %c0_i32_1 = arith.constant 0 : i32
    return %arg1, %c0_i32, %c0_i32_0 : i32, i32, i32
  }
  func.func @transform_7(%arg0: i32, %arg1: i32) -> (i32, i32, i32) {
    %c0_i32 = arith.constant 0 : i32
    %c0_i32_0 = arith.constant 0 : i32
    %c0_i32_1 = arith.constant 0 : i32
    return %arg1, %c0_i32, %c0_i32_0 : i32, i32, i32
  }
  func.func @transform_8(%arg0: i32, %arg1: i32) -> (i32, i32, i32) {
    %c0_i32 = arith.constant 0 : i32
    %c0_i32_0 = arith.constant 0 : i32
    %c0_i32_1 = arith.constant 0 : i32
    return %arg1, %c0_i32, %c0_i32_0 : i32, i32, i32
  }
  func.func @transform_9(%arg0: i32, %arg1: i32) -> (i32, i32) {
    %c0_i32 = arith.constant 0 : i32
    %c0_i32_0 = arith.constant 0 : i32
    %c0_i32_1 = arith.constant 0 : i32
    return %c0_i32, %c0_i32_0 : i32, i32
  }
  func.func @transform_10(%arg0: i32, %arg1: i32) -> (i32, i32, i32) {
    %c0_i32 = arith.constant 0 : i32
    %c0_i32_0 = arith.constant 0 : i32
    %c0_i32_1 = arith.constant 0 : i32
    return %arg0, %c0_i32, %c0_i32_0 : i32, i32, i32
  }
}

</mosaic_0001>

<llo_original>
// kernel: tpu_custom_call.1
$region0: #{tpu_custom_call.1}
  #allocation0 [shape = 'u32[]', space=smem, size = 0x4, offset = 0x4, fixed_abs, tag = 'smem constant byte address 0x4 - core index']
  #allocation1 [shape = 'u32[144,128]{1,0:T(1,128)}', space=vmem, size = 0x12000, scoped, tag = 'internal scratch']
  #allocation2 [shape = 'f32[8,32]{1,0:T(8,128)}', space=vmem, size = 0x1000, scoped, tag = 'scratch operand']
  %s0 = inlined_call_operand.vmem [shape: f32[2,8,1], index: 0, kind: input, shape index: {}]
  %s1 = inlined_call_operand.vmem [shape: f32[2,1,8], index: 1, kind: input, shape index: {}]
  %s2 = inlined_call_operand.vmem [shape: f32[2,8,32], index: 2, kind: input, shape index: {}]
  %s3 = inlined_call_operand.vmem [shape: f32[2,8,32], index: 3, kind: input, shape index: {}]
  %s4 = inlined_call_operand.vmem [shape: f32[2,8,32], index: 4, kind: input, shape index: {}]
  %s5 = inlined_call_operand.vmem [shape: f32[2,32,8], index: 5, kind: input, shape index: {}]
  %s6 = inlined_call_operand.vmem [shape: f32[2,32,8], index: 6, kind: input, shape index: {}]
  %s7 = inlined_call_operand.vmem [shape: f32[2,32,8], index: 7, kind: input, shape index: {}]
  %s8 = inlined_call_operand.vmem [shape: f32[2,8,32], index: 8, kind: input, shape index: {}]
  %s9 = inlined_call_operand.vmem [shape: f32[1,32], index: 9, kind: input, shape index: {}]
  %s10 = inlined_call_operand.hbm [shape: f32[2,8,32], index: 10, kind: output, shape index: {}]
  %s11 = sld [smem:[#allocation0]]
  $region81: #{tpu_custom_call.1} parent=0
    _
  %s13 = ssub.s32 1, %s11
  %s14 = scalar_select 0, %s13, %s11
  $region1: #{tpu_custom_call.1} parent=0
    #allocation3 [shape = 'u8[8192]{0}', space=vmem, size = 0x2000, scoped, tag = 'output window, operand 0']
    #allocation4 [shape = 's32[2]{0}', space=sflag, size = 0x8, scoped, tag = 'scoped memory for tpu_custom_call.1']
    %15 = vsyncpa [#allocation4], 0
    %s16 = scalar_lea.sflag [#allocation4], 1
    %17 = vsyncpa %s16, 0
    loop: start=0, step=1, limit=6
    $region2: #{tpu_custom_call.1} parent=1 // loop_pre_header
      _
    $region3: #{tpu_custom_call.1} parent=1 // loop_header
      %s19 = sphi 0, %s23
      %p20 = scmp.ge.s32.totalorder %s19, 6
      %s26 = sphi 0, %s38
      %s27 = sphi 0, %s34
      %s28 = sphi 0, %s26
      %s29 = sphi 0, %s27
      %s30 = sphi 0, %s28
      %s31 = sphi 0, %s29
      %s41 = sphi 0, %s43
      %s44 = sphi 0, %s41
      %s45 = sphi 0, %s44
      %s61 = sphi 0, %s45
      %s67 = sphi 0, %s69
      %s70 = sphi 0, %s67
      %s71 = sphi 0, %s70
      %s87 = sphi 0, %s71
      %s93 = sphi 0, %s95
      %s96 = sphi 0, %s93
      %s97 = sphi 0, %s96
      %s113 = sphi 0, %s97
      %s119 = sphi 0, %s121
      %s122 = sphi 0, %s119
      %s123 = sphi 0, %s122
      %s139 = sphi 0, %s123
      %s145 = sphi 0, %s147
      %s148 = sphi 0, %s145
      %s149 = sphi 0, %s148
      %s165 = sphi 0, %s149
      %s171 = sphi 0, %s173
      %s174 = sphi 0, %s171
      %s175 = sphi 0, %s174
      %s191 = sphi 0, %s175
      %s197 = sphi 0, %s199
      %s200 = sphi 0, %s197
      %s201 = sphi 0, %s200
      %s217 = sphi 0, %s201
      %s223 = sphi 0, %s225
      %s226 = sphi 0, %s223
      %s227 = sphi 0, %s226
      %s243 = sphi 0, %s227
      %s249 = sphi 0, %s251
      %s252 = sphi 0, %s249
      %s253 = sphi 0, %s252
      %s269 = sphi 0, %s253
      %s273 = sphi 0, %s273
      %s275 = sphi 0, %s273
      %s276 = sphi 0, %s275
      %s290 = sphi 0, %s276
      %s296 = sphi 0, %s298
      %s299 = sphi 0, %s296
      %s300 = sphi 0, %s299
      %s316 = sphi 0, %s300
    $region4: #{tpu_custom_call.1} parent=1 // loop_header_branch
      %22 = sbr.rel (%p20) target = $region8
    $region5: #{tpu_custom_call.1} parent=1 // loop_body
      %s24 = ssub.s32 %s19, 1
      %s25 = ssub.s32 %s19, 2
      %s32 = sadd.s32 1, %s27
      %p33 = scmp.ge.s32.totalorder %s32, 2
      %s34 = scalar_select %p33, 0, %s32
      %s35 = sadd.s32 1, %s26
      %s36 = scalar_select %p33, %s35, %s26
      %p37 = scmp.ge.s32.totalorder %s36, 2
      %s38 = scalar_select %p37, 0, %s36
      %s39 = ssub.s32 %s26, %s38
      %p40 = scmp.eq.s32.totalorder %s39, 0
      %s42 = sadd.s32 %s41, 1
      %s43 = scalar_select %p40, %s41, %s42
      %p46 = pneg %p40
      %p47 = scmp.eq.s32.totalorder %s19, 3
      %p48 = por %p46, %p47
      %p49 = scmp.ne.s32.totalorder %s41, %s44
      %p50 = scmp.eq.s32.totalorder %s19, 0
      %p51 = por %p49, %p50
      %p52 = scmp.ne.s32.totalorder %s41, %s44
      %p53 = scmp.eq.s32.totalorder %s24, 3
      %p54 = por %p52, %p53
      %p55 = scmp.ne.s32.totalorder %s44, %s45
      %p56 = scmp.eq.s32.totalorder %s24, 0
      %p57 = por %p55, %p56
      %p58 = scmp.ne.s32.totalorder %s44, %s45
      %p59 = scmp.eq.s32.totalorder %s25, 3
      %p60 = por %p58, %p59
      %p62 = scmp.ne.s32.totalorder %s45, %s61
      %p63 = scmp.eq.s32.totalorder %s25, 0
      %p64 = por %p62, %p63
      %s65 = ssub.s32 %s26, %s38
      %p66 = scmp.eq.s32.totalorder %s65, 0
      %s68 = sadd.s32 %s67, 1
      %s69 = scalar_select %p66, %s67, %s68
      %p72 = pneg %p66
      %p73 = scmp.eq.s32.totalorder %s19, 3
      %p74 = por %p72, %p73
      %p75 = scmp.ne.s32.totalorder %s67, %s70
      %p76 = scmp.eq.s32.totalorder %s19, 0
      %p77 = por %p75, %p76
      %p78 = scmp.ne.s32.totalorder %s67, %s70
      %p79 = scmp.eq.s32.totalorder %s24, 3
      %p80 = por %p78, %p79
      %p81 = scmp.ne.s32.totalorder %s70, %s71
      %p82 = scmp.eq.s32.totalorder %s24, 0
      %p83 = por %p81, %p82
      %p84 = scmp.ne.s32.totalorder %s70, %s71
      %p85 = scmp.eq.s32.totalorder %s25, 3
      %p86 = por %p84, %p85
      %p88 = scmp.ne.s32.totalorder %s71, %s87
      %p89 = scmp.eq.s32.totalorder %s25, 0
      %p90 = por %p88, %p89
      %s91 = ssub.s32 %s26, %s38
      %p92 = scmp.eq.s32.totalorder %s91, 0
      %s94 = sadd.s32 %s93, 1
      %s95 = scalar_select %p92, %s93, %s94
      %p98 = pneg %p92
      %p99 = scmp.eq.s32.totalorder %s19, 3
      %p100 = por %p98, %p99
      %p101 = scmp.ne.s32.totalorder %s93, %s96
      %p102 = scmp.eq.s32.totalorder %s19, 0
      %p103 = por %p101, %p102
      %p104 = scmp.ne.s32.totalorder %s93, %s96
      %p105 = scmp.eq.s32.totalorder %s24, 3
      %p106 = por %p104, %p105
      %p107 = scmp.ne.s32.totalorder %s96, %s97
      %p108 = scmp.eq.s32.totalorder %s24, 0
      %p109 = por %p107, %p108
      %p110 = scmp.ne.s32.totalorder %s96, %s97
      %p111 = scmp.eq.s32.totalorder %s25, 3
      %p112 = por %p110, %p111
      %p114 = scmp.ne.s32.totalorder %s97, %s113
      %p115 = scmp.eq.s32.totalorder %s25, 0
      %p116 = por %p114, %p115
      %s117 = ssub.s32 %s26, %s38
      %p118 = scmp.eq.s32.totalorder %s117, 0
      %s120 = sadd.s32 %s119, 1
      %s121 = scalar_select %p118, %s119, %s120
      %p124 = pneg %p118
      %p125 = scmp.eq.s32.totalorder %s19, 3
      %p126 = por %p124, %p125
      %p127 = scmp.ne.s32.totalorder %s119, %s122
      %p128 = scmp.eq.s32.totalorder %s19, 0
      %p129 = por %p127, %p128
      %p130 = scmp.ne.s32.totalorder %s119, %s122
      %p131 = scmp.eq.s32.totalorder %s24, 3
      %p132 = por %p130, %p131
      %p133 = scmp.ne.s32.totalorder %s122, %s123
      %p134 = scmp.eq.s32.totalorder %s24, 0
      %p135 = por %p133, %p134
      %p136 = scmp.ne.s32.totalorder %s122, %s123
      %p137 = scmp.eq.s32.totalorder %s25, 3
      %p138 = por %p136, %p137
      %p140 = scmp.ne.s32.totalorder %s123, %s139
      %p141 = scmp.eq.s32.totalorder %s25, 0
      %p142 = por %p140, %p141
      %s143 = ssub.s32 %s26, %s38
      %p144 = scmp.eq.s32.totalorder %s143, 0
      %s146 = sadd.s32 %s145, 1
      %s147 = scalar_select %p144, %s145, %s146
      %p150 = pneg %p144
      %p151 = scmp.eq.s32.totalorder %s19, 3
      %p152 = por %p150, %p151
      %p153 = scmp.ne.s32.totalorder %s145, %s148
      %p154 = scmp.eq.s32.totalorder %s19, 0
      %p155 = por %p153, %p154
      %p156 = scmp.ne.s32.totalorder %s145, %s148
      %p157 = scmp.eq.s32.totalorder %s24, 3
      %p158 = por %p156, %p157
      %p159 = scmp.ne.s32.totalorder %s148, %s149
      %p160 = scmp.eq.s32.totalorder %s24, 0
      %p161 = por %p159, %p160
      %p162 = scmp.ne.s32.totalorder %s148, %s149
      %p163 = scmp.eq.s32.totalorder %s25, 3
      %p164 = por %p162, %p163
      %p166 = scmp.ne.s32.totalorder %s149, %s165
      %p167 = scmp.eq.s32.totalorder %s25, 0
      %p168 = por %p166, %p167
      %s169 = ssub.s32 %s27, %s34
      %p170 = scmp.eq.s32.totalorder %s169, 0
      %s172 = sadd.s32 %s171, 1
      %s173 = scalar_select %p170, %s171, %s172
      %p176 = pneg %p170
      %p177 = scmp.eq.s32.totalorder %s19, 3
      %p178 = por %p176, %p177
      %p179 = scmp.ne.s32.totalorder %s171, %s174
      %p180 = scmp.eq.s32.totalorder %s19, 0
      %p181 = por %p179, %p180
      %p182 = scmp.ne.s32.totalorder %s171, %s174
      %p183 = scmp.eq.s32.totalorder %s24, 3
      %p184 = por %p182, %p183
      %p185 = scmp.ne.s32.totalorder %s174, %s175
      %p186 = scmp.eq.s32.totalorder %s24, 0
      %p187 = por %p185, %p186
      %p188 = scmp.ne.s32.totalorder %s174, %s175
      %p189 = scmp.eq.s32.totalorder %s25, 3
      %p190 = por %p188, %p189
      %p192 = scmp.ne.s32.totalorder %s175, %s191
      %p193 = scmp.eq.s32.totalorder %s25, 0
      %p194 = por %p192, %p193
      %s195 = ssub.s32 %s27, %s34
      %p196 = scmp.eq.s32.totalorder %s195, 0
      %s198 = sadd.s32 %s197, 1
      %s199 = scalar_select %p196, %s197, %s198
      %p202 = pneg %p196
      %p203 = scmp.eq.s32.totalorder %s19, 3
      %p204 = por %p202, %p203
      %p205 = scmp.ne.s32.totalorder %s197, %s200
      %p206 = scmp.eq.s32.totalorder %s19, 0
      %p207 = por %p205, %p206
      %p208 = scmp.ne.s32.totalorder %s197, %s200
      %p209 = scmp.eq.s32.totalorder %s24, 3
      %p210 = por %p208, %p209
      %p211 = scmp.ne.s32.totalorder %s200, %s201
      %p212 = scmp.eq.s32.totalorder %s24, 0
      %p213 = por %p211, %p212
      %p214 = scmp.ne.s32.totalorder %s200, %s201
      %p215 = scmp.eq.s32.totalorder %s25, 3
      %p216 = por %p214, %p215
      %p218 = scmp.ne.s32.totalorder %s201, %s217
      %p219 = scmp.eq.s32.totalorder %s25, 0
      %p220 = por %p218, %p219
      %s221 = ssub.s32 %s27, %s34
      %p222 = scmp.eq.s32.totalorder %s221, 0
      %s224 = sadd.s32 %s223, 1
      %s225 = scalar_select %p222, %s223, %s224
      %p228 = pneg %p222
      %p229 = scmp.eq.s32.totalorder %s19, 3
      %p230 = por %p228, %p229
      %p231 = scmp.ne.s32.totalorder %s223, %s226
      %p232 = scmp.eq.s32.totalorder %s19, 0
      %p233 = por %p231, %p232
      %p234 = scmp.ne.s32.totalorder %s223, %s226
      %p235 = scmp.eq.s32.totalorder %s24, 3
      %p236 = por %p234, %p235
      %p237 = scmp.ne.s32.totalorder %s226, %s227
      %p238 = scmp.eq.s32.totalorder %s24, 0
      %p239 = por %p237, %p238
      %p240 = scmp.ne.s32.totalorder %s226, %s227
      %p241 = scmp.eq.s32.totalorder %s25, 3
      %p242 = por %p240, %p241
      %p244 = scmp.ne.s32.totalorder %s227, %s243
      %p245 = scmp.eq.s32.totalorder %s25, 0
      %p246 = por %p244, %p245
      %s247 = ssub.s32 %s27, %s34
      %p248 = scmp.eq.s32.totalorder %s247, 0
      %s250 = sadd.s32 %s249, 1
      %s251 = scalar_select %p248, %s249, %s250
      %p254 = pneg %p248
      %p255 = scmp.eq.s32.totalorder %s19, 3
      %p256 = por %p254, %p255
      %p257 = scmp.ne.s32.totalorder %s249, %s252
      %p258 = scmp.eq.s32.totalorder %s19, 0
      %p259 = por %p257, %p258
      %p260 = scmp.ne.s32.totalorder %s249, %s252
      %p261 = scmp.eq.s32.totalorder %s24, 3
      %p262 = por %p260, %p261
      %p263 = scmp.ne.s32.totalorder %s252, %s253
      %p264 = scmp.eq.s32.totalorder %s24, 0
      %p265 = por %p263, %p264
      %p266 = scmp.ne.s32.totalorder %s252, %s253
      %p267 = scmp.eq.s32.totalorder %s25, 3
      %p268 = por %p266, %p267
      %p270 = scmp.ne.s32.totalorder %s253, %s269
      %p271 = scmp.eq.s32.totalorder %s25, 0
      %p272 = por %p270, %p271
      %s274 = sadd.s32 %s273, 1
      %p277 = scmp.eq.s32.totalorder %s19, 3
      %p278 = scmp.ne.s32.totalorder %s273, %s275
      %p279 = scmp.eq.s32.totalorder %s19, 0
      %p280 = por %p278, %p279
      %p281 = scmp.ne.s32.totalorder %s273, %s275
      %p282 = scmp.eq.s32.totalorder %s24, 3
      %p283 = por %p281, %p282
      %p284 = scmp.ne.s32.totalorder %s275, %s276
      %p285 = scmp.eq.s32.totalorder %s24, 0
      %p286 = por %p284, %p285
      %p287 = scmp.ne.s32.totalorder %s275, %s276
      %p288 = scmp.eq.s32.totalorder %s25, 3
      %p289 = por %p287, %p288
      %p291 = scmp.ne.s32.totalorder %s276, %s290
      %p292 = scmp.eq.s32.totalorder %s25, 0
      %p293 = por %p291, %p292
      %s294 = ssub.s32 %s26, %s38
      %p295 = scmp.eq.s32.totalorder %s294, 0
      %s297 = sadd.s32 %s296, 1
      %s298 = scalar_select %p295, %s296, %s297
      %p301 = pneg %p295
      %p302 = scmp.eq.s32.totalorder %s19, 3
      %p303 = por %p301, %p302
      %p304 = scmp.ne.s32.totalorder %s296, %s299
      %p305 = scmp.eq.s32.totalorder %s19, 0
      %p306 = por %p304, %p305
      %p307 = scmp.ne.s32.totalorder %s296, %s299
      %p308 = scmp.eq.s32.totalorder %s24, 3
      %p309 = por %p307, %p308
      %p310 = scmp.ne.s32.totalorder %s299, %s300
      %p311 = scmp.eq.s32.totalorder %s24, 0
      %p312 = por %p310, %p311
      %p313 = scmp.ne.s32.totalorder %s299, %s300
      %p314 = scmp.eq.s32.totalorder %s25, 3
      %p315 = por %p313, %p314
      %p317 = scmp.ne.s32.totalorder %s300, %s316
      %p318 = scmp.eq.s32.totalorder %s25, 0
      %p319 = por %p317, %p318
      %p320 = scmp.le.s32.totalorder 1, %s19
      %p321 = scmp.lt.s32.totalorder %s19, 5
      %p322 = pnand %p320, %p321
      %p323 = pneg %p322
      // Predicated region
      $region9: #{tpu_custom_call.1} parent=5 // pred_check
        _
      $region10: #{tpu_custom_call.1} parent=5 // pred_check_branch
        %325 = sbr.rel (%p322) target = $region12
      $region11: #{tpu_custom_call.1} parent=5 // pred_region
        %s326 = ssub.s32 %s19, 1
        // Predicated region
        $region13: #{tpu_custom_call.1} parent=11 // pred_check
          %p327 = pneg %p286
        $region14: #{tpu_custom_call.1} parent=11 // pred_check_branch
          %329 = sbr.rel (%p327) target = $region16
        $region15: #{tpu_custom_call.1} parent=11 // pred_region
          _
        $region16: #{tpu_custom_call.1} parent=11 // pred_fallthru
          _
      $region12: #{tpu_custom_call.1} parent=5 // pred_fallthru
        _
      %p330 = scmp.lt.s32.totalorder %s19, 4
      // Predicated region
      $region17: #{tpu_custom_call.1} parent=5 // pred_check
        %p331 = pneg %p330
      $region18: #{tpu_custom_call.1} parent=5 // pred_check_branch
        %333 = sbr.rel (%p331) target = $region20
      $region19: #{tpu_custom_call.1} parent=5 // pred_region
        // Predicated region
        $region21: #{tpu_custom_call.1} parent=19 // pred_check
          %p334 = pneg %p51
        $region22: #{tpu_custom_call.1} parent=19 // pred_check_branch
          %336 = sbr.rel (%p334) target = $region24
        $region23: #{tpu_custom_call.1} parent=19 // pred_region
          %p337 = scmp.lt.s32.totalorder %s26, 1
          %s338 = scalar_select %p337, %s26, 1
          %s339 = smul.addr %s338, 8
          %s340 = scalar_lea.vmem %s0, %s339
        $region24: #{tpu_custom_call.1} parent=19 // pred_fallthru
          _
        // Predicated region
        $region25: #{tpu_custom_call.1} parent=19 // pred_check
          %p341 = pneg %p77
        $region26: #{tpu_custom_call.1} parent=19 // pred_check_branch
          %343 = sbr.rel (%p341) target = $region28
        $region27: #{tpu_custom_call.1} parent=19 // pred_region
          %p344 = scmp.lt.s32.totalorder %s26, 1
          %s345 = scalar_select %p344, %s26, 1
          %s346 = scalar_lea.vmem %s1, %s345
        $region28: #{tpu_custom_call.1} parent=19 // pred_fallthru
          _
        // Predicated region
        $region29: #{tpu_custom_call.1} parent=19 // pred_check
          %p347 = pneg %p103
        $region30: #{tpu_custom_call.1} parent=19 // pred_check_branch
          %349 = sbr.rel (%p347) target = $region32
        $region31: #{tpu_custom_call.1} parent=19 // pred_region
          %p350 = scmp.lt.s32.totalorder %s26, 1
          %s351 = scalar_select %p350, %s26, 1
          %s352 = smul.addr %s351, 8
          %s353 = scalar_lea.vmem %s2, %s352
        $region32: #{tpu_custom_call.1} parent=19 // pred_fallthru
          _
        // Predicated region
        $region33: #{tpu_custom_call.1} parent=19 // pred_check
          %p354 = pneg %p129
        $region34: #{tpu_custom_call.1} parent=19 // pred_check_branch
          %356 = sbr.rel (%p354) target = $region36
        $region35: #{tpu_custom_call.1} parent=19 // pred_region
          %p357 = scmp.lt.s32.totalorder %s26, 1
          %s358 = scalar_select %p357, %s26, 1
          %s359 = smul.addr %s358, 8
          %s360 = scalar_lea.vmem %s3, %s359
        $region36: #{tpu_custom_call.1} parent=19 // pred_fallthru
          _
        // Predicated region
        $region37: #{tpu_custom_call.1} parent=19 // pred_check
          %p361 = pneg %p155
        $region38: #{tpu_custom_call.1} parent=19 // pred_check_branch
          %363 = sbr.rel (%p361) target = $region40
        $region39: #{tpu_custom_call.1} parent=19 // pred_region
          %p364 = scmp.lt.s32.totalorder %s26, 1
          %s365 = scalar_select %p364, %s26, 1
          %s366 = smul.addr %s365, 8
          %s367 = scalar_lea.vmem %s4, %s366
        $region40: #{tpu_custom_call.1} parent=19 // pred_fallthru
          _
        // Predicated region
        $region41: #{tpu_custom_call.1} parent=19 // pred_check
          %p368 = pneg %p181
        $region42: #{tpu_custom_call.1} parent=19 // pred_check_branch
          %370 = sbr.rel (%p368) target = $region44
        $region43: #{tpu_custom_call.1} parent=19 // pred_region
          %p371 = scmp.lt.s32.totalorder %s27, 1
          %s372 = scalar_select %p371, %s27, 1
          %s373 = smul.addr %s372, 4
          %s374 = smul.addr %s373, 8
          %s375 = scalar_lea.vmem %s5, %s374
        $region44: #{tpu_custom_call.1} parent=19 // pred_fallthru
          _
        // Predicated region
        $region45: #{tpu_custom_call.1} parent=19 // pred_check
          %p376 = pneg %p207
        $region46: #{tpu_custom_call.1} parent=19 // pred_check_branch
          %378 = sbr.rel (%p376) target = $region48
        $region47: #{tpu_custom_call.1} parent=19 // pred_region
          %p379 = scmp.lt.s32.totalorder %s27, 1
          %s380 = scalar_select %p379, %s27, 1
          %s381 = smul.addr %s380, 4
          %s382 = smul.addr %s381, 8
          %s383 = scalar_lea.vmem %s6, %s382
        $region48: #{tpu_custom_call.1} parent=19 // pred_fallthru
          _
        // Predicated region
        $region49: #{tpu_custom_call.1} parent=19 // pred_check
          %p384 = pneg %p233
        $region50: #{tpu_custom_call.1} parent=19 // pred_check_branch
          %386 = sbr.rel (%p384) target = $region52
        $region51: #{tpu_custom_call.1} parent=19 // pred_region
          %p387 = scmp.lt.s32.totalorder %s27, 1
          %s388 = scalar_select %p387, %s27, 1
          %s389 = smul.addr %s388, 4
          %s390 = smul.addr %s389, 8
          %s391 = scalar_lea.vmem %s7, %s390
        $region52: #{tpu_custom_call.1} parent=19 // pred_fallthru
          _
        // Predicated region
        $region53: #{tpu_custom_call.1} parent=19 // pred_check
          %p392 = pneg %p259
        $region54: #{tpu_custom_call.1} parent=19 // pred_check_branch
          %394 = sbr.rel (%p392) target = $region56
        $region55: #{tpu_custom_call.1} parent=19 // pred_region
          %p395 = scmp.lt.s32.totalorder %s27, 1
          %s396 = scalar_select %p395, %s27, 1
          %s397 = smul.addr %s396, 8
          %s398 = scalar_lea.vmem %s8, %s397
        $region56: #{tpu_custom_call.1} parent=19 // pred_fallthru
          _
      $region20: #{tpu_custom_call.1} parent=5 // pred_fallthru
        _
      %p399 = scmp.le.s32.totalorder 1, %s19
      %p400 = scmp.lt.s32.totalorder %s19, 5
      %p401 = pnand %p399, %p400
      %p402 = pneg %p401
      // Predicated region
      $region57: #{tpu_custom_call.1} parent=5 // pred_check
        _
      $region58: #{tpu_custom_call.1} parent=5 // pred_check_branch
        %404 = sbr.rel (%p401) target = $region60
      $region59: #{tpu_custom_call.1} parent=5 // pred_region
        %s405 = ssub.s32 %s19, 1
        %p406 = scmp.lt.s32.totalorder %s28, 1
        %s407 = scalar_select %p406, %s28, 1
        %s408 = smul.addr %s407, 8
        %s409 = scalar_lea.vmem %s0, %s408
        %p410 = pneg %p57
        %p411 = pneg %p54
        %p412 = scmp.lt.s32.totalorder %s28, 1
        %s413 = scalar_select %p412, %s28, 1
        %s414 = scalar_lea.vmem %s1, %s413
        %p415 = pneg %p83
        %p416 = pneg %p80
        %p417 = scmp.lt.s32.totalorder %s28, 1
        %s418 = scalar_select %p417, %s28, 1
        %s419 = smul.addr %s418, 8
        %s420 = scalar_lea.vmem %s2, %s419
        %p421 = pneg %p109
        %p422 = pneg %p106
        %p423 = scmp.lt.s32.totalorder %s28, 1
        %s424 = scalar_select %p423, %s28, 1
        %s425 = smul.addr %s424, 8
        %s426 = scalar_lea.vmem %s3, %s425
        %p427 = pneg %p135
        %p428 = pneg %p132
        %p429 = scmp.lt.s32.totalorder %s28, 1
        %s430 = scalar_select %p429, %s28, 1
        %s431 = smul.addr %s430, 8
        %s432 = scalar_lea.vmem %s4, %s431
        %p433 = pneg %p161
        %p434 = pneg %p158
        %p435 = scmp.lt.s32.totalorder %s29, 1
        %s436 = scalar_select %p435, %s29, 1
        %s437 = smul.addr %s436, 4
        %s438 = smul.addr %s437, 8
        %s439 = scalar_lea.vmem %s5, %s438
        %p440 = pneg %p187
        %p441 = pneg %p184
        %p442 = scmp.lt.s32.totalorder %s29, 1
        %s443 = scalar_select %p442, %s29, 1
        %s444 = smul.addr %s443, 4
        %s445 = smul.addr %s444, 8
        %s446 = scalar_lea.vmem %s6, %s445
        %p447 = pneg %p213
        %p448 = pneg %p210
        %p449 = scmp.lt.s32.totalorder %s29, 1
        %s450 = scalar_select %p449, %s29, 1
        %s451 = smul.addr %s450, 4
        %s452 = smul.addr %s451, 8
        %s453 = scalar_lea.vmem %s7, %s452
        %p454 = pneg %p239
        %p455 = pneg %p236
        %p456 = scmp.lt.s32.totalorder %s29, 1
        %s457 = scalar_select %p456, %s29, 1
        %s458 = smul.addr %s457, 8
        %s459 = scalar_lea.vmem %s8, %s458
        %p460 = pneg %p265
        %p461 = pneg %p262
        %p462 = pneg %p286
        %p463 = pneg %p283
        %p464 = pneg %p312
        %p465 = pneg %p309
        %s466 = sand.u32 %s299, 1
        %s467 = scalar_lea.sflag [#allocation4], %s466
        %s468 = sand.u32 %s299, 1
        %s469 = smul.addr %s468, 8
        %s470 = scalar_lea.vmem [#allocation3], %s469
        %p471 = scmp.lt.s32.totalorder %s28, 1
        %s472 = scalar_select %p471, %s28, 1
        %s473 = smul.addr %s472, 8
        %s474 = scalar_lea.vmem %s0, %s473
        %p475 = scmp.lt.s32.totalorder %s28, 1
        %s476 = scalar_select %p475, %s28, 1
        %s477 = scalar_lea.vmem %s1, %s476
        %p478 = scmp.lt.s32.totalorder %s28, 1
        %s479 = scalar_select %p478, %s28, 1
        %s480 = smul.addr %s479, 8
        %s481 = scalar_lea.vmem %s2, %s480
        %p482 = scmp.lt.s32.totalorder %s28, 1
        %s483 = scalar_select %p482, %s28, 1
        %s484 = smul.addr %s483, 8
        %s485 = scalar_lea.vmem %s3, %s484
        %p486 = scmp.lt.s32.totalorder %s28, 1
        %s487 = scalar_select %p486, %s28, 1
        %s488 = smul.addr %s487, 8
        %s489 = scalar_lea.vmem %s4, %s488
        %p490 = scmp.lt.s32.totalorder %s29, 1
        %s491 = scalar_select %p490, %s29, 1
        %s492 = smul.addr %s491, 4
        %s493 = smul.addr %s492, 8
        %s494 = scalar_lea.vmem %s5, %s493
        %p495 = scmp.lt.s32.totalorder %s29, 1
        %s496 = scalar_select %p495, %s29, 1
        %s497 = smul.addr %s496, 4
        %s498 = smul.addr %s497, 8
        %s499 = scalar_lea.vmem %s6, %s498
        %p500 = scmp.lt.s32.totalorder %s29, 1
        %s501 = scalar_select %p500, %s29, 1
        %s502 = smul.addr %s501, 4
        %s503 = smul.addr %s502, 8
        %s504 = scalar_lea.vmem %s7, %s503
        %p505 = scmp.lt.s32.totalorder %s29, 1
        %s506 = scalar_select %p505, %s29, 1
        %s507 = smul.addr %s506, 8
        %s508 = scalar_lea.vmem %s8, %s507
        %p509 = scmp.eq.s32.totalorder %s29, 0
        // Predicated region
        $region61: #{tpu_custom_call.1} parent=59 // pred_check
          %p510 = pneg %p509
        $region62: #{tpu_custom_call.1} parent=59 // pred_check_branch
          %512 = sbr.rel (%p510) target = $region64
        $region63: #{tpu_custom_call.1} parent=59 // pred_region
          %vm513 = vcmask 261120
          %514 = vst.msk [vmem:[#allocation2] sm:$0xff] %vm513, 0.0
        $region64: #{tpu_custom_call.1} parent=59 // pred_fallthru
          _
        %v515 = vld [vmem:[%s481] sm:$0xff]
        %v516 = vld [vmem:[%s485] sm:$0xff]
        %v517 = vld [vmem:[%s489] sm:$0xff]
        %v518 = vld [vmem:[%s494] sm:$0xff]
        %v519 = vld [vmem:[%s494 + $0x8] sm:$0xff]
        %v520 = vld [vmem:[%s494 + $0x10] sm:$0xff]
        %v521 = vld [vmem:[%s494 + $0x18] sm:$0xff]
        %v522 = vld [vmem:[%s499] sm:$0xff]
        %v523 = vld [vmem:[%s499 + $0x8] sm:$0xff]
        %v524 = vld [vmem:[%s499 + $0x10] sm:$0xff]
        %v525 = vld [vmem:[%s499 + $0x18] sm:$0xff]
        %v526 = vld [vmem:[%s504] sm:$0xff]
        %v527 = vld [vmem:[%s504 + $0x8] sm:$0xff]
        %v528 = vld [vmem:[%s504 + $0x10] sm:$0xff]
        %v529 = vld [vmem:[%s504 + $0x18] sm:$0xff]
        %v530 = vld [vmem:[%s508] sm:$0xff]
        %vm531 = vcmask 261120
        %v533 = vsel %vm531, %v515, 0
        %535 = vmatprep.subr.mxu0 0.0
        %536 = vmatpush1.msra.mxu0 0.0
        %537 = vmatprep.subr.mxu0 0.0
        %538 = vmatpush1.msra.mxu0 0.0
        %539 = vmatprep.subr.mxu0 0.0
        %540 = vmatpush1.msra.mxu0 0.0
        %541 = vmatprep.subr.mxu0 0.0
        %542 = vmatpush1.msra.mxu0 0.0
        %543 = vmatprep.subr.mxu0 0.0
        %544 = vmatpush1.msra.mxu0 0.0
        %545 = vmatprep.subr.mxu0 0.0
        %546 = vmatpush1.msra.mxu0 0.0
        %547 = vmatprep.subr.mxu0 0.0
        %548 = vmatpush1.msra.mxu0 0.0
        %549 = vmatprep.subr.mxu0 0.0
        %550 = vmatpush1.msra.mxu0 0.0
        %551 = vmatprep.subr.mxu0 0.0
        %552 = vmatpush1.msra.mxu0 0.0
        %553 = vmatprep.subr.mxu0 0.0
        %554 = vmatpush1.msra.mxu0 0.0
        %555 = vmatprep.subr.mxu0 0.0
        %556 = vmatpush1.msra.mxu0 0.0
        %557 = vmatprep.subr.mxu0 0.0
        %558 = vmatpush1.msra.mxu0 0.0
        %559 = vmatprep.subr.mxu0 0.0
        %v560 = vand.u32 %v521, 4294901760
        %561 = vmatpush1.msra.mxu0 %v560
        %562 = vmatprep.subr.mxu0 0.0
        %v563 = vand.u32 %v520, 4294901760
        %564 = vmatpush1.msra.mxu0 %v563
        %565 = vmatprep.subr.mxu0 0.0
        %v566 = vand.u32 %v519, 4294901760
        %567 = vmatpush1.msra.mxu0 %v566
        %568 = vmatprep.subr.mxu0 0.0
        %v569 = vand.u32 %v518, 4294901760
        %570 = vmatpush1.msra.mxu0 %v569
        %571 = vmatprep.subr.mxu0 0.0
        %572 = vmatpush2.msra.mxu0 0.0
        %573 = vmatprep.subr.mxu0 0.0
        %574 = vmatpush2.msra.mxu0 0.0
        %575 = vmatprep.subr.mxu0 0.0
        %576 = vmatpush2.msra.mxu0 0.0
        %577 = vmatprep.subr.mxu0 0.0
        %578 = vmatpush2.msra.mxu0 0.0
        %579 = vmatprep.subr.mxu0 0.0
        %580 = vmatpush2.msra.mxu0 0.0
        %581 = vmatprep.subr.mxu0 0.0
        %582 = vmatpush2.msra.mxu0 0.0
        %583 = vmatprep.subr.mxu0 0.0
        %584 = vmatpush2.msra.mxu0 0.0
        %585 = vmatprep.subr.mxu0 0.0
        %586 = vmatpush2.msra.mxu0 0.0
        %587 = vmatprep.subr.mxu0 0.0
        %588 = vmatpush2.msra.mxu0 0.0
        %589 = vmatprep.subr.mxu0 0.0
        %590 = vmatpush2.msra.mxu0 0.0
        %591 = vmatprep.subr.mxu0 0.0
        %592 = vmatpush2.msra.mxu0 0.0
        %593 = vmatprep.subr.mxu0 0.0
        %594 = vmatpush2.msra.mxu0 0.0
        %595 = vmatprep.subr.mxu0 0.0
        %596 = vmatpush2.msra.mxu0 0.0
        %597 = vmatprep.subr.mxu0 0.0
        %598 = vmatpush2.msra.mxu0 0.0
        %599 = vmatprep.subr.mxu0 0.0
        %600 = vmatpush2.msra.mxu0 0.0
        %601 = vmatprep.subr.mxu0 0.0
        %602 = vmatpush2.msra.mxu0 0.0
        %603 = vmatprep.mubr.f32.mxu0 0.0
        %v604 = vand.u32 %v533, 4294901760
        %v605 = vsub.f32 %v533, %v604
        %v606 = vand.u32 %v605, 4294901760
        %v607 = vsub.f32 %v605, %v606
        %v608 = vand.u32 %v607, 4294901760
        %609 = vmatmul.mubr.f32.gmra.mxu0 %v608
        %v610 = vpop.f32.mrf.mxu0
        %v611 = vadd.f32 0.0, %v610
        %v612 = vpop.f32.mrf.mxu0
        %613 = vdwg.mxu0
        %614 = vmatprep.subr.mxu0 0.0
        %615 = vmatpush1.msra.mxu0 0.0
        %616 = vmatprep.subr.mxu0 0.0
        %617 = vmatpush1.msra.mxu0 0.0
        %618 = vmatprep.subr.mxu0 0.0
        %619 = vmatpush1.msra.mxu0 0.0
        %620 = vmatprep.subr.mxu0 0.0
        %621 = vmatpush1.msra.mxu0 0.0
        %622 = vmatprep.subr.mxu0 0.0
        %623 = vmatpush1.msra.mxu0 0.0
        %624 = vmatprep.subr.mxu0 0.0
        %625 = vmatpush1.msra.mxu0 0.0
        %626 = vmatprep.subr.mxu0 0.0
        %627 = vmatpush1.msra.mxu0 0.0
        %628 = vmatprep.subr.mxu0 0.0
        %629 = vmatpush1.msra.mxu0 0.0
        %630 = vmatprep.subr.mxu0 0.0
        %631 = vmatpush1.msra.mxu0 0.0
        %632 = vmatprep.subr.mxu0 0.0
        %633 = vmatpush1.msra.mxu0 0.0
        %634 = vmatprep.subr.mxu0 0.0
        %635 = vmatpush1.msra.mxu0 0.0
        %636 = vmatprep.subr.mxu0 0.0
        %637 = vmatpush1.msra.mxu0 0.0
        %638 = vmatprep.subr.mxu0 0.0
        %v639 = vand.u32 %v521, 4294901760
        %v640 = vsub.f32 %v521, %v639
        %v641 = vand.u32 %v640, 4294901760
        %v642 = vsub.f32 %v640, %v641
        %v643 = vand.u32 %v642, 4294901760
        %644 = vmatpush1.msra.mxu0 %v643
        %645 = vmatprep.subr.mxu0 0.0
        %v646 = vand.u32 %v520, 4294901760
        %v647 = vsub.f32 %v520, %v646
        %v648 = vand.u32 %v647, 4294901760
        %v649 = vsub.f32 %v647, %v648
        %v650 = vand.u32 %v649, 4294901760
        %651 = vmatpush1.msra.mxu0 %v650
        %652 = vmatprep.subr.mxu0 0.0
        %v653 = vand.u32 %v519, 4294901760
        %v654 = vsub.f32 %v519, %v653
        %v655 = vand.u32 %v654, 4294901760
        %v656 = vsub.f32 %v654, %v655
        %v657 = vand.u32 %v656, 4294901760
        %658 = vmatpush1.msra.mxu0 %v657
        %659 = vmatprep.subr.mxu0 0.0
        %v660 = vand.u32 %v518, 4294901760
        %v661 = vsub.f32 %v518, %v660
        %v662 = vand.u32 %v661, 4294901760
        %v663 = vsub.f32 %v661, %v662
        %v664 = vand.u32 %v663, 4294901760
        %665 = vmatpush1.msra.mxu0 %v664
        %666 = vmatprep.subr.mxu0 0.0
        %667 = vmatpush2.msra.mxu0 0.0
        %668 = vmatprep.subr.mxu0 0.0
        %669 = vmatpush2.msra.mxu0 0.0
        %670 = vmatprep.subr.mxu0 0.0
        %671 = vmatpush2.msra.mxu0 0.0
        %672 = vmatprep.subr.mxu0 0.0
        %673 = vmatpush2.msra.mxu0 0.0
        %674 = vmatprep.subr.mxu0 0.0
        %675 = vmatpush2.msra.mxu0 0.0
        %676 = vmatprep.subr.mxu0 0.0
        %677 = vmatpush2.msra.mxu0 0.0
        %678 = vmatprep.subr.mxu0 0.0
        %679 = vmatpush2.msra.mxu0 0.0
        %680 = vmatprep.subr.mxu0 0.0
        %681 = vmatpush2.msra.mxu0 0.0
        %682 = vmatprep.subr.mxu0 0.0
        %683 = vmatpush2.msra.mxu0 0.0
        %684 = vmatprep.subr.mxu0 0.0
        %685 = vmatpush2.msra.mxu0 0.0
        %686 = vmatprep.subr.mxu0 0.0
        %687 = vmatpush2.msra.mxu0 0.0
        %688 = vmatprep.subr.mxu0 0.0
        %689 = vmatpush2.msra.mxu0 0.0
        %690 = vmatprep.subr.mxu0 0.0
        %691 = vmatpush2.msra.mxu0 0.0
        %692 = vmatprep.subr.mxu0 0.0
        %693 = vmatpush2.msra.mxu0 0.0
        %694 = vmatprep.subr.mxu0 0.0
        %695 = vmatpush2.msra.mxu0 0.0
        %696 = vmatprep.subr.mxu0 0.0
        %697 = vmatpush2.msra.mxu0 0.0
        %698 = vmatprep.mubr.f32.mxu0 0.0
        %v699 = vand.u32 %v533, 4294901760
        %700 = vmatmul.mubr.f32.gmra.mxu0 %v699
        %v701 = vpop.f32.mrf.mxu0
        %v702 = vadd.f32 %v611, %v701
        %v703 = vpop.f32.mrf.mxu0
        %704 = vdwg.mxu0
        %705 = vmatprep.subr.mxu0 0.0
        %706 = vmatpush1.msra.mxu0 0.0
        %707 = vmatprep.subr.mxu0 0.0
        %708 = vmatpush1.msra.mxu0 0.0
        %709 = vmatprep.subr.mxu0 0.0
        %710 = vmatpush1.msra.mxu0 0.0
        %711 = vmatprep.subr.mxu0 0.0
        %712 = vmatpush1.msra.mxu0 0.0
        %713 = vmatprep.subr.mxu0 0.0
        %714 = vmatpush1.msra.mxu0 0.0
        %715 = vmatprep.subr.mxu0 0.0
        %716 = vmatpush1.msra.mxu0 0.0
        %717 = vmatprep.subr.mxu0 0.0
        %718 = vmatpush1.msra.mxu0 0.0
        %719 = vmatprep.subr.mxu0 0.0
        %720 = vmatpush1.msra.mxu0 0.0
        %721 = vmatprep.subr.mxu0 0.0
        %722 = vmatpush1.msra.mxu0 0.0
        %723 = vmatprep.subr.mxu0 0.0
        %724 = vmatpush1.msra.mxu0 0.0
        %725 = vmatprep.subr.mxu0 0.0
        %726 = vmatpush1.msra.mxu0 0.0
        %727 = vmatprep.subr.mxu0 0.0
        %728 = vmatpush1.msra.mxu0 0.0
        %729 = vmatprep.subr.mxu0 0.0
        %v730 = vand.u32 %v521, 4294901760
        %v731 = vsub.f32 %v521, %v730
        %732 = vmatpush1.msra.mxu0 %v731
        %733 = vmatprep.subr.mxu0 0.0
        %v734 = vand.u32 %v520, 4294901760
        %v735 = vsub.f32 %v520, %v734
        %736 = vmatpush1.msra.mxu0 %v735
        %737 = vmatprep.subr.mxu0 0.0
        %v738 = vand.u32 %v519, 4294901760
        %v739 = vsub.f32 %v519, %v738
        %740 = vmatpush1.msra.mxu0 %v739
        %741 = vmatprep.subr.mxu0 0.0
        %v742 = vand.u32 %v518, 4294901760
        %v743 = vsub.f32 %v518, %v742
        %744 = vmatpush1.msra.mxu0 %v743
        %745 = vmatprep.subr.mxu0 0.0
        %746 = vmatpush2.msra.mxu0 0.0
        %747 = vmatprep.subr.mxu0 0.0
        %748 = vmatpush2.msra.mxu0 0.0
        %749 = vmatprep.subr.mxu0 0.0
        %750 = vmatpush2.msra.mxu0 0.0
        %751 = vmatprep.subr.mxu0 0.0
        %752 = vmatpush2.msra.mxu0 0.0
        %753 = vmatprep.subr.mxu0 0.0
        %754 = vmatpush2.msra.mxu0 0.0
        %755 = vmatprep.subr.mxu0 0.0
        %756 = vmatpush2.msra.mxu0 0.0
        %757 = vmatprep.subr.mxu0 0.0
        %758 = vmatpush2.msra.mxu0 0.0
        %759 = vmatprep.subr.mxu0 0.0
        %760 = vmatpush2.msra.mxu0 0.0
        %761 = vmatprep.subr.mxu0 0.0
        %762 = vmatpush2.msra.mxu0 0.0
        %763 = vmatprep.subr.mxu0 0.0
        %764 = vmatpush2.msra.mxu0 0.0
        %765 = vmatprep.subr.mxu0 0.0
        %766 = vmatpush2.msra.mxu0 0.0
        %767 = vmatprep.subr.mxu0 0.0
        %768 = vmatpush2.msra.mxu0 0.0
        %769 = vmatprep.subr.mxu0 0.0
        %770 = vmatpush2.msra.mxu0 0.0
        %771 = vmatprep.subr.mxu0 0.0
        %772 = vmatpush2.msra.mxu0 0.0
        %773 = vmatprep.subr.mxu0 0.0
        %774 = vmatpush2.msra.mxu0 0.0
        %775 = vmatprep.subr.mxu0 0.0
        %776 = vmatpush2.msra.mxu0 0.0
        %777 = vmatprep.mubr.f32.mxu0 0.0
        %v778 = vand.u32 %v533, 4294901760
        %v779 = vsub.f32 %v533, %v778
        %780 = vmatmul.mubr.f32.gmra.mxu0 %v779
        %v781 = vpop.f32.mrf.mxu0
        %v782 = vadd.f32 %v702, %v781
        %v783 = vpop.f32.mrf.mxu0
        %784 = vdwg.mxu0
        %785 = vmatprep.subr.mxu0 0.0
        %786 = vmatpush1.msra.mxu0 0.0
        %787 = vmatprep.subr.mxu0 0.0
        %788 = vmatpush1.msra.mxu0 0.0
        %789 = vmatprep.subr.mxu0 0.0
        %790 = vmatpush1.msra.mxu0 0.0
        %791 = vmatprep.subr.mxu0 0.0
        %792 = vmatpush1.msra.mxu0 0.0
        %793 = vmatprep.subr.mxu0 0.0
        %794 = vmatpush1.msra.mxu0 0.0
        %795 = vmatprep.subr.mxu0 0.0
        %796 = vmatpush1.msra.mxu0 0.0
        %797 = vmatprep.subr.mxu0 0.0
        %798 = vmatpush1.msra.mxu0 0.0
        %799 = vmatprep.subr.mxu0 0.0
        %800 = vmatpush1.msra.mxu0 0.0
        %801 = vmatprep.subr.mxu0 0.0
        %802 = vmatpush1.msra.mxu0 0.0
        %803 = vmatprep.subr.mxu0 0.0
        %804 = vmatpush1.msra.mxu0 0.0
        %805 = vmatprep.subr.mxu0 0.0
        %806 = vmatpush1.msra.mxu0 0.0
        %807 = vmatprep.subr.mxu0 0.0
        %808 = vmatpush1.msra.mxu0 0.0
        %809 = vmatprep.subr.mxu0 0.0
        %v810 = vand.u32 %v521, 4294901760
        %811 = vmatpush1.msra.mxu0 %v810
        %812 = vmatprep.subr.mxu0 0.0
        %v813 = vand.u32 %v520, 4294901760
        %814 = vmatpush1.msra.mxu0 %v813
        %815 = vmatprep.subr.mxu0 0.0
        %v816 = vand.u32 %v519, 4294901760
        %817 = vmatpush1.msra.mxu0 %v816
        %818 = vmatprep.subr.mxu0 0.0
        %v819 = vand.u32 %v518, 4294901760
        %820 = vmatpush1.msra.mxu0 %v819
        %821 = vmatprep.subr.mxu0 0.0
        %822 = vmatpush2.msra.mxu0 0.0
        %823 = vmatprep.subr.mxu0 0.0
        %824 = vmatpush2.msra.mxu0 0.0
        %825 = vmatprep.subr.mxu0 0.0
        %826 = vmatpush2.msra.mxu0 0.0
        %827 = vmatprep.subr.mxu0 0.0
        %828 = vmatpush2.msra.mxu0 0.0
        %829 = vmatprep.subr.mxu0 0.0
        %830 = vmatpush2.msra.mxu0 0.0
        %831 = vmatprep.subr.mxu0 0.0
        %832 = vmatpush2.msra.mxu0 0.0
        %833 = vmatprep.subr.mxu0 0.0
        %834 = vmatpush2.msra.mxu0 0.0
        %835 = vmatprep.subr.mxu0 0.0
        %836 = vmatpush2.msra.mxu0 0.0
        %837 = vmatprep.subr.mxu0 0.0
        %838 = vmatpush2.msra.mxu0 0.0
        %839 = vmatprep.subr.mxu0 0.0
        %840 = vmatpush2.msra.mxu0 0.0
        %841 = vmatprep.subr.mxu0 0.0
        %842 = vmatpush2.msra.mxu0 0.0
        %843 = vmatprep.subr.mxu0 0.0
        %844 = vmatpush2.msra.mxu0 0.0
        %845 = vmatprep.subr.mxu0 0.0
        %846 = vmatpush2.msra.mxu0 0.0
        %847 = vmatprep.subr.mxu0 0.0
        %848 = vmatpush2.msra.mxu0 0.0
        %849 = vmatprep.subr.mxu0 0.0
        %850 = vmatpush2.msra.mxu0 0.0
        %851 = vmatprep.subr.mxu0 0.0
        %852 = vmatpush2.msra.mxu0 0.0
        %853 = vmatprep.mubr.f32.mxu0 0.0
        %v854 = vand.u32 %v533, 4294901760
        %v855 = vsub.f32 %v533, %v854
        %v856 = vand.u32 %v855, 4294901760
        %857 = vmatmul.mubr.f32.gmra.mxu0 %v856
        %v858 = vpop.f32.mrf.mxu0
        %v859 = vadd.f32 %v782, %v858
        %v860 = vpop.f32.mrf.mxu0
        %861 = vdwg.mxu0
        %862 = vmatprep.subr.mxu0 0.0
        %863 = vmatpush1.msra.mxu0 0.0
        %864 = vmatprep.subr.mxu0 0.0
        %865 = vmatpush1.msra.mxu0 0.0
        %866 = vmatprep.subr.mxu0 0.0
        %867 = vmatpush1.msra.mxu0 0.0
        %868 = vmatprep.subr.mxu0 0.0
        %869 = vmatpush1.msra.mxu0 0.0
        %870 = vmatprep.subr.mxu0 0.0
        %871 = vmatpush1.msra.mxu0 0.0
        %872 = vmatprep.subr.mxu0 0.0
        %873 = vmatpush1.msra.mxu0 0.0
        %874 = vmatprep.subr.mxu0 0.0
        %875 = vmatpush1.msra.mxu0 0.0
        %876 = vmatprep.subr.mxu0 0.0
        %877 = vmatpush1.msra.mxu0 0.0
        %878 = vmatprep.subr.mxu0 0.0
        %879 = vmatpush1.msra.mxu0 0.0
        %880 = vmatprep.subr.mxu0 0.0
        %881 = vmatpush1.msra.mxu0 0.0
        %882 = vmatprep.subr.mxu0 0.0
        %883 = vmatpush1.msra.mxu0 0.0
        %884 = vmatprep.subr.mxu0 0.0
        %885 = vmatpush1.msra.mxu0 0.0
        %886 = vmatprep.subr.mxu0 0.0
        %v887 = vand.u32 %v521, 4294901760
        %v888 = vsub.f32 %v521, %v887
        %v889 = vand.u32 %v888, 4294901760
        %890 = vmatpush1.msra.mxu0 %v889
        %891 = vmatprep.subr.mxu0 0.0
        %v892 = vand.u32 %v520, 4294901760
        %v893 = vsub.f32 %v520, %v892
        %v894 = vand.u32 %v893, 4294901760
        %895 = vmatpush1.msra.mxu0 %v894
        %896 = vmatprep.subr.mxu0 0.0
        %v897 = vand.u32 %v519, 4294901760
        %v898 = vsub.f32 %v519, %v897
        %v899 = vand.u32 %v898, 4294901760
        %900 = vmatpush1.msra.mxu0 %v899
        %901 = vmatprep.subr.mxu0 0.0
        %v902 = vand.u32 %v518, 4294901760
        %v903 = vsub.f32 %v518, %v902
        %v904 = vand.u32 %v903, 4294901760
        %905 = vmatpush1.msra.mxu0 %v904
        %906 = vmatprep.subr.mxu0 0.0
        %907 = vmatpush2.msra.mxu0 0.0
        %908 = vmatprep.subr.mxu0 0.0
        %909 = vmatpush2.msra.mxu0 0.0
        %910 = vmatprep.subr.mxu0 0.0
        %911 = vmatpush2.msra.mxu0 0.0
        %912 = vmatprep.subr.mxu0 0.0
        %913 = vmatpush2.msra.mxu0 0.0
        %914 = vmatprep.subr.mxu0 0.0
        %915 = vmatpush2.msra.mxu0 0.0
        %916 = vmatprep.subr.mxu0 0.0
        %917 = vmatpush2.msra.mxu0 0.0
        %918 = vmatprep.subr.mxu0 0.0
        %919 = vmatpush2.msra.mxu0 0.0
        %920 = vmatprep.subr.mxu0 0.0
        %921 = vmatpush2.msra.mxu0 0.0
        %922 = vmatprep.subr.mxu0 0.0
        %923 = vmatpush2.msra.mxu0 0.0
        %924 = vmatprep.subr.mxu0 0.0
        %925 = vmatpush2.msra.mxu0 0.0
        %926 = vmatprep.subr.mxu0 0.0
        %927 = vmatpush2.msra.mxu0 0.0
        %928 = vmatprep.subr.mxu0 0.0
        %929 = vmatpush2.msra.mxu0 0.0
        %930 = vmatprep.subr.mxu0 0.0
        %931 = vmatpush2.msra.mxu0 0.0
        %932 = vmatprep.subr.mxu0 0.0
        %933 = vmatpush2.msra.mxu0 0.0
        %934 = vmatprep.subr.mxu0 0.0
        %935 = vmatpush2.msra.mxu0 0.0
        %936 = vmatprep.subr.mxu0 0.0
        %937 = vmatpush2.msra.mxu0 0.0
        %938 = vmatprep.mubr.f32.mxu0 0.0
        %v939 = vand.u32 %v533, 4294901760
        %940 = vmatmul.mubr.f32.gmra.mxu0 %v939
        %v941 = vpop.f32.mrf.mxu0
        %v942 = vadd.f32 %v859, %v941
        %v943 = vpop.f32.mrf.mxu0
        %944 = vdwg.mxu0
        %945 = vmatprep.subr.mxu0 0.0
        %946 = vmatpush1.msra.mxu0 0.0
        %947 = vmatprep.subr.mxu0 0.0
        %948 = vmatpush1.msra.mxu0 0.0
        %949 = vmatprep.subr.mxu0 0.0
        %950 = vmatpush1.msra.mxu0 0.0
        %951 = vmatprep.subr.mxu0 0.0
        %952 = vmatpush1.msra.mxu0 0.0
        %953 = vmatprep.subr.mxu0 0.0
        %954 = vmatpush1.msra.mxu0 0.0
        %955 = vmatprep.subr.mxu0 0.0
        %956 = vmatpush1.msra.mxu0 0.0
        %957 = vmatprep.subr.mxu0 0.0
        %958 = vmatpush1.msra.mxu0 0.0
        %959 = vmatprep.subr.mxu0 0.0
        %960 = vmatpush1.msra.mxu0 0.0
        %961 = vmatprep.subr.mxu0 0.0
        %962 = vmatpush1.msra.mxu0 0.0
        %963 = vmatprep.subr.mxu0 0.0
        %964 = vmatpush1.msra.mxu0 0.0
        %965 = vmatprep.subr.mxu0 0.0
        %966 = vmatpush1.msra.mxu0 0.0
        %967 = vmatprep.subr.mxu0 0.0
        %968 = vmatpush1.msra.mxu0 0.0
        %969 = vmatprep.subr.mxu0 0.0
        %v970 = vand.u32 %v521, 4294901760
        %971 = vmatpush1.msra.mxu0 %v970
        %972 = vmatprep.subr.mxu0 0.0
        %v973 = vand.u32 %v520, 4294901760
        %974 = vmatpush1.msra.mxu0 %v973
        %975 = vmatprep.subr.mxu0 0.0
        %v976 = vand.u32 %v519, 4294901760
        %977 = vmatpush1.msra.mxu0 %v976
        %978 = vmatprep.subr.mxu0 0.0
        %v979 = vand.u32 %v518, 4294901760
        %980 = vmatpush1.msra.mxu0 %v979
        %981 = vmatprep.subr.mxu0 0.0
        %982 = vmatpush2.msra.mxu0 0.0
        %983 = vmatprep.subr.mxu0 0.0
        %984 = vmatpush2.msra.mxu0 0.0
        %985 = vmatprep.subr.mxu0 0.0
        %986 = vmatpush2.msra.mxu0 0.0
        %987 = vmatprep.subr.mxu0 0.0
        %988 = vmatpush2.msra.mxu0 0.0
        %989 = vmatprep.subr.mxu0 0.0
        %990 = vmatpush2.msra.mxu0 0.0
        %991 = vmatprep.subr.mxu0 0.0
        %992 = vmatpush2.msra.mxu0 0.0
        %993 = vmatprep.subr.mxu0 0.0
        %994 = vmatpush2.msra.mxu0 0.0
        %995 = vmatprep.subr.mxu0 0.0
        %996 = vmatpush2.msra.mxu0 0.0
        %997 = vmatprep.subr.mxu0 0.0
        %998 = vmatpush2.msra.mxu0 0.0
        %999 = vmatprep.subr.mxu0 0.0
        %1000 = vmatpush2.msra.mxu0 0.0
        %1001 = vmatprep.subr.mxu0 0.0
        %1002 = vmatpush2.msra.mxu0 0.0
        %1003 = vmatprep.subr.mxu0 0.0
        %1004 = vmatpush2.msra.mxu0 0.0
        %1005 = vmatprep.subr.mxu0 0.0
        %1006 = vmatpush2.msra.mxu0 0.0
        %1007 = vmatprep.subr.mxu0 0.0
        %1008 = vmatpush2.msra.mxu0 0.0
        %1009 = vmatprep.subr.mxu0 0.0
        %1010 = vmatpush2.msra.mxu0 0.0
        %1011 = vmatprep.subr.mxu0 0.0
        %1012 = vmatpush2.msra.mxu0 0.0
        %1013 = vmatprep.mubr.f32.mxu0 0.0
        %v1014 = vand.u32 %v533, 4294901760
        %1015 = vmatmul.mubr.f32.gmra.mxu0 %v1014
        %v1016 = vpop.f32.mrf.mxu0
        %v1017 = vadd.f32 %v942, %v1016
        %v1018 = vpop.f32.mrf.mxu0
        %1019 = vdwg.mxu0
        %v1021 = vsel %vm531, %v516, 0
        %1023 = vmatprep.subr.mxu0 0.0
        %1024 = vmatpush1.msra.mxu0 0.0
        %1025 = vmatprep.subr.mxu0 0.0
        %1026 = vmatpush1.msra.mxu0 0.0
        %1027 = vmatprep.subr.mxu0 0.0
        %1028 = vmatpush1.msra.mxu0 0.0
        %1029 = vmatprep.subr.mxu0 0.0
        %1030 = vmatpush1.msra.mxu0 0.0
        %1031 = vmatprep.subr.mxu0 0.0
        %1032 = vmatpush1.msra.mxu0 0.0
        %1033 = vmatprep.subr.mxu0 0.0
        %1034 = vmatpush1.msra.mxu0 0.0
        %1035 = vmatprep.subr.mxu0 0.0
        %1036 = vmatpush1.msra.mxu0 0.0
        %1037 = vmatprep.subr.mxu0 0.0
        %1038 = vmatpush1.msra.mxu0 0.0
        %1039 = vmatprep.subr.mxu0 0.0
        %1040 = vmatpush1.msra.mxu0 0.0
        %1041 = vmatprep.subr.mxu0 0.0
        %1042 = vmatpush1.msra.mxu0 0.0
        %1043 = vmatprep.subr.mxu0 0.0
        %1044 = vmatpush1.msra.mxu0 0.0
        %1045 = vmatprep.subr.mxu0 0.0
        %1046 = vmatpush1.msra.mxu0 0.0
        %1047 = vmatprep.subr.mxu0 0.0
        %v1048 = vand.u32 %v525, 4294901760
        %1049 = vmatpush1.msra.mxu0 %v1048
        %1050 = vmatprep.subr.mxu0 0.0
        %v1051 = vand.u32 %v524, 4294901760
        %1052 = vmatpush1.msra.mxu0 %v1051
        %1053 = vmatprep.subr.mxu0 0.0
        %v1054 = vand.u32 %v523, 4294901760
        %1055 = vmatpush1.msra.mxu0 %v1054
        %1056 = vmatprep.subr.mxu0 0.0
        %v1057 = vand.u32 %v522, 4294901760
        %1058 = vmatpush1.msra.mxu0 %v1057
        %1059 = vmatprep.subr.mxu0 0.0
        %1060 = vmatpush2.msra.mxu0 0.0
        %1061 = vmatprep.subr.mxu0 0.0
        %1062 = vmatpush2.msra.mxu0 0.0
        %1063 = vmatprep.subr.mxu0 0.0
        %1064 = vmatpush2.msra.mxu0 0.0
        %1065 = vmatprep.subr.mxu0 0.0
        %1066 = vmatpush2.msra.mxu0 0.0
        %1067 = vmatprep.subr.mxu0 0.0
        %1068 = vmatpush2.msra.mxu0 0.0
        %1069 = vmatprep.subr.mxu0 0.0
        %1070 = vmatpush2.msra.mxu0 0.0
        %1071 = vmatprep.subr.mxu0 0.0
        %1072 = vmatpush2.msra.mxu0 0.0
        %1073 = vmatprep.subr.mxu0 0.0
        %1074 = vmatpush2.msra.mxu0 0.0
        %1075 = vmatprep.subr.mxu0 0.0
        %1076 = vmatpush2.msra.mxu0 0.0
        %1077 = vmatprep.subr.mxu0 0.0
        %1078 = vmatpush2.msra.mxu0 0.0
        %1079 = vmatprep.subr.mxu0 0.0
        %1080 = vmatpush2.msra.mxu0 0.0
        %1081 = vmatprep.subr.mxu0 0.0
        %1082 = vmatpush2.msra.mxu0 0.0
        %1083 = vmatprep.subr.mxu0 0.0
        %1084 = vmatpush2.msra.mxu0 0.0
        %1085 = vmatprep.subr.mxu0 0.0
        %1086 = vmatpush2.msra.mxu0 0.0
        %1087 = vmatprep.subr.mxu0 0.0
        %1088 = vmatpush2.msra.mxu0 0.0
        %1089 = vmatprep.subr.mxu0 0.0
        %1090 = vmatpush2.msra.mxu0 0.0
        %1091 = vmatprep.mubr.f32.mxu0 0.0
        %v1092 = vand.u32 %v1021, 4294901760
        %v1093 = vsub.f32 %v1021, %v1092
        %v1094 = vand.u32 %v1093, 4294901760
        %v1095 = vsub.f32 %v1093, %v1094
        %v1096 = vand.u32 %v1095, 4294901760
        %1097 = vmatmul.mubr.f32.gmra.mxu0 %v1096
        %v1098 = vpop.f32.mrf.mxu0
        %v1099 = vadd.f32 0.0, %v1098
        %v1100 = vpop.f32.mrf.mxu0
        %1101 = vdwg.mxu0
        %1102 = vmatprep.subr.mxu0 0.0
        %1103 = vmatpush1.msra.mxu0 0.0
        %1104 = vmatprep.subr.mxu0 0.0
        %1105 = vmatpush1.msra.mxu0 0.0
        %1106 = vmatprep.subr.mxu0 0.0
        %1107 = vmatpush1.msra.mxu0 0.0
        %1108 = vmatprep.subr.mxu0 0.0
        %1109 = vmatpush1.msra.mxu0 0.0
        %1110 = vmatprep.subr.mxu0 0.0
        %1111 = vmatpush1.msra.mxu0 0.0
        %1112 = vmatprep.subr.mxu0 0.0
        %1113 = vmatpush1.msra.mxu0 0.0
        %1114 = vmatprep.subr.mxu0 0.0
        %1115 = vmatpush1.msra.mxu0 0.0
        %1116 = vmatprep.subr.mxu0 0.0
        %1117 = vmatpush1.msra.mxu0 0.0
        %1118 = vmatprep.subr.mxu0 0.0
        %1119 = vmatpush1.msra.mxu0 0.0
        %1120 = vmatprep.subr.mxu0 0.0
        %1121 = vmatpush1.msra.mxu0 0.0
        %1122 = vmatprep.subr.mxu0 0.0
        %1123 = vmatpush1.msra.mxu0 0.0
        %1124 = vmatprep.subr.mxu0 0.0
        %1125 = vmatpush1.msra.mxu0 0.0
        %1126 = vmatprep.subr.mxu0 0.0
        %v1127 = vand.u32 %v525, 4294901760
        %v1128 = vsub.f32 %v525, %v1127
        %v1129 = vand.u32 %v1128, 4294901760
        %v1130 = vsub.f32 %v1128, %v1129
        %v1131 = vand.u32 %v1130, 4294901760
        %1132 = vmatpush1.msra.mxu0 %v1131
        %1133 = vmatprep.subr.mxu0 0.0
        %v1134 = vand.u32 %v524, 4294901760
        %v1135 = vsub.f32 %v524, %v1134
        %v1136 = vand.u32 %v1135, 4294901760
        %v1137 = vsub.f32 %v1135, %v1136
        %v1138 = vand.u32 %v1137, 4294901760
        %1139 = vmatpush1.msra.mxu0 %v1138
        %1140 = vmatprep.subr.mxu0 0.0
        %v1141 = vand.u32 %v523, 4294901760
        %v1142 = vsub.f32 %v523, %v1141
        %v1143 = vand.u32 %v1142, 4294901760
        %v1144 = vsub.f32 %v1142, %v1143
        %v1145 = vand.u32 %v1144, 4294901760
        %1146 = vmatpush1.msra.mxu0 %v1145
        %1147 = vmatprep.subr.mxu0 0.0
        %v1148 = vand.u32 %v522, 4294901760
        %v1149 = vsub.f32 %v522, %v1148
        %v1150 = vand.u32 %v1149, 4294901760
        %v1151 = vsub.f32 %v1149, %v1150
        %v1152 = vand.u32 %v1151, 4294901760
        %1153 = vmatpush1.msra.mxu0 %v1152
        %1154 = vmatprep.subr.mxu0 0.0
        %1155 = vmatpush2.msra.mxu0 0.0
        %1156 = vmatprep.subr.mxu0 0.0
        %1157 = vmatpush2.msra.mxu0 0.0
        %1158 = vmatprep.subr.mxu0 0.0
        %1159 = vmatpush2.msra.mxu0 0.0
        %1160 = vmatprep.subr.mxu0 0.0
        %1161 = vmatpush2.msra.mxu0 0.0
        %1162 = vmatprep.subr.mxu0 0.0
        %1163 = vmatpush2.msra.mxu0 0.0
        %1164 = vmatprep.subr.mxu0 0.0
        %1165 = vmatpush2.msra.mxu0 0.0
        %1166 = vmatprep.subr.mxu0 0.0
        %1167 = vmatpush2.msra.mxu0 0.0
        %1168 = vmatprep.subr.mxu0 0.0
        %1169 = vmatpush2.msra.mxu0 0.0
        %1170 = vmatprep.subr.mxu0 0.0
        %1171 = vmatpush2.msra.mxu0 0.0
        %1172 = vmatprep.subr.mxu0 0.0
        %1173 = vmatpush2.msra.mxu0 0.0
        %1174 = vmatprep.subr.mxu0 0.0
        %1175 = vmatpush2.msra.mxu0 0.0
        %1176 = vmatprep.subr.mxu0 0.0
        %1177 = vmatpush2.msra.mxu0 0.0
        %1178 = vmatprep.subr.mxu0 0.0
        %1179 = vmatpush2.msra.mxu0 0.0
        %1180 = vmatprep.subr.mxu0 0.0
        %1181 = vmatpush2.msra.mxu0 0.0
        %1182 = vmatprep.subr.mxu0 0.0
        %1183 = vmatpush2.msra.mxu0 0.0
        %1184 = vmatprep.subr.mxu0 0.0
        %1185 = vmatpush2.msra.mxu0 0.0
        %1186 = vmatprep.mubr.f32.mxu0 0.0
        %v1187 = vand.u32 %v1021, 4294901760
        %1188 = vmatmul.mubr.f32.gmra.mxu0 %v1187
        %v1189 = vpop.f32.mrf.mxu0
        %v1190 = vadd.f32 %v1099, %v1189
        %v1191 = vpop.f32.mrf.mxu0
        %1192 = vdwg.mxu0
        %1193 = vmatprep.subr.mxu0 0.0
        %1194 = vmatpush1.msra.mxu0 0.0
        %1195 = vmatprep.subr.mxu0 0.0
        %1196 = vmatpush1.msra.mxu0 0.0
        %1197 = vmatprep.subr.mxu0 0.0
        %1198 = vmatpush1.msra.mxu0 0.0
        %1199 = vmatprep.subr.mxu0 0.0
        %1200 = vmatpush1.msra.mxu0 0.0
        %1201 = vmatprep.subr.mxu0 0.0
        %1202 = vmatpush1.msra.mxu0 0.0
        %1203 = vmatprep.subr.mxu0 0.0
        %1204 = vmatpush1.msra.mxu0 0.0
        %1205 = vmatprep.subr.mxu0 0.0
        %1206 = vmatpush1.msra.mxu0 0.0
        %1207 = vmatprep.subr.mxu0 0.0
        %1208 = vmatpush1.msra.mxu0 0.0
        %1209 = vmatprep.subr.mxu0 0.0
        %1210 = vmatpush1.msra.mxu0 0.0
        %1211 = vmatprep.subr.mxu0 0.0
        %1212 = vmatpush1.msra.mxu0 0.0
        %1213 = vmatprep.subr.mxu0 0.0
        %1214 = vmatpush1.msra.mxu0 0.0
        %1215 = vmatprep.subr.mxu0 0.0
        %1216 = vmatpush1.msra.mxu0 0.0
        %1217 = vmatprep.subr.mxu0 0.0
        %v1218 = vand.u32 %v525, 4294901760
        %v1219 = vsub.f32 %v525, %v1218
        %1220 = vmatpush1.msra.mxu0 %v1219
        %1221 = vmatprep.subr.mxu0 0.0
        %v1222 = vand.u32 %v524, 4294901760
        %v1223 = vsub.f32 %v524, %v1222
        %1224 = vmatpush1.msra.mxu0 %v1223
        %1225 = vmatprep.subr.mxu0 0.0
        %v1226 = vand.u32 %v523, 4294901760
        %v1227 = vsub.f32 %v523, %v1226
        %1228 = vmatpush1.msra.mxu0 %v1227
        %1229 = vmatprep.subr.mxu0 0.0
        %v1230 = vand.u32 %v522, 4294901760
        %v1231 = vsub.f32 %v522, %v1230
        %1232 = vmatpush1.msra.mxu0 %v1231
        %1233 = vmatprep.subr.mxu0 0.0
        %1234 = vmatpush2.msra.mxu0 0.0
        %1235 = vmatprep.subr.mxu0 0.0
        %1236 = vmatpush2.msra.mxu0 0.0
        %1237 = vmatprep.subr.mxu0 0.0
        %1238 = vmatpush2.msra.mxu0 0.0
        %1239 = vmatprep.subr.mxu0 0.0
        %1240 = vmatpush2.msra.mxu0 0.0
        %1241 = vmatprep.subr.mxu0 0.0
        %1242 = vmatpush2.msra.mxu0 0.0
        %1243 = vmatprep.subr.mxu0 0.0
        %1244 = vmatpush2.msra.mxu0 0.0
        %1245 = vmatprep.subr.mxu0 0.0
        %1246 = vmatpush2.msra.mxu0 0.0
        %1247 = vmatprep.subr.mxu0 0.0
        %1248 = vmatpush2.msra.mxu0 0.0
        %1249 = vmatprep.subr.mxu0 0.0
        %1250 = vmatpush2.msra.mxu0 0.0
        %1251 = vmatprep.subr.mxu0 0.0
        %1252 = vmatpush2.msra.mxu0 0.0
        %1253 = vmatprep.subr.mxu0 0.0
        %1254 = vmatpush2.msra.mxu0 0.0
        %1255 = vmatprep.subr.mxu0 0.0
        %1256 = vmatpush2.msra.mxu0 0.0
        %1257 = vmatprep.subr.mxu0 0.0
        %1258 = vmatpush2.msra.mxu0 0.0
        %1259 = vmatprep.subr.mxu0 0.0
        %1260 = vmatpush2.msra.mxu0 0.0
        %1261 = vmatprep.subr.mxu0 0.0
        %1262 = vmatpush2.msra.mxu0 0.0
        %1263 = vmatprep.subr.mxu0 0.0
        %1264 = vmatpush2.msra.mxu0 0.0
        %1265 = vmatprep.mubr.f32.mxu0 0.0
        %v1266 = vand.u32 %v1021, 4294901760
        %v1267 = vsub.f32 %v1021, %v1266
        %1268 = vmatmul.mubr.f32.gmra.mxu0 %v1267
        %v1269 = vpop.f32.mrf.mxu0
        %v1270 = vadd.f32 %v1190, %v1269
        %v1271 = vpop.f32.mrf.mxu0
        %1272 = vdwg.mxu0
        %1273 = vmatprep.subr.mxu0 0.0
        %1274 = vmatpush1.msra.mxu0 0.0
        %1275 = vmatprep.subr.mxu0 0.0
        %1276 = vmatpush1.msra.mxu0 0.0
        %1277 = vmatprep.subr.mxu0 0.0
        %1278 = vmatpush1.msra.mxu0 0.0
        %1279 = vmatprep.subr.mxu0 0.0
        %1280 = vmatpush1.msra.mxu0 0.0
        %1281 = vmatprep.subr.mxu0 0.0
        %1282 = vmatpush1.msra.mxu0 0.0
        %1283 = vmatprep.subr.mxu0 0.0
        %1284 = vmatpush1.msra.mxu0 0.0
        %1285 = vmatprep.subr.mxu0 0.0
        %1286 = vmatpush1.msra.mxu0 0.0
        %1287 = vmatprep.subr.mxu0 0.0
        %1288 = vmatpush1.msra.mxu0 0.0
        %1289 = vmatprep.subr.mxu0 0.0
        %1290 = vmatpush1.msra.mxu0 0.0
        %1291 = vmatprep.subr.mxu0 0.0
        %1292 = vmatpush1.msra.mxu0 0.0
        %1293 = vmatprep.subr.mxu0 0.0
        %1294 = vmatpush1.msra.mxu0 0.0
        %1295 = vmatprep.subr.mxu0 0.0
        %1296 = vmatpush1.msra.mxu0 0.0
        %1297 = vmatprep.subr.mxu0 0.0
        %v1298 = vand.u32 %v525, 4294901760
        %1299 = vmatpush1.msra.mxu0 %v1298
        %1300 = vmatprep.subr.mxu0 0.0
        %v1301 = vand.u32 %v524, 4294901760
        %1302 = vmatpush1.msra.mxu0 %v1301
        %1303 = vmatprep.subr.mxu0 0.0
        %v1304 = vand.u32 %v523, 4294901760
        %1305 = vmatpush1.msra.mxu0 %v1304
        %1306 = vmatprep.subr.mxu0 0.0
        %v1307 = vand.u32 %v522, 4294901760
        %1308 = vmatpush1.msra.mxu0 %v1307
        %1309 = vmatprep.subr.mxu0 0.0
        %1310 = vmatpush2.msra.mxu0 0.0
        %1311 = vmatprep.subr.mxu0 0.0
        %1312 = vmatpush2.msra.mxu0 0.0
        %1313 = vmatprep.subr.mxu0 0.0
        %1314 = vmatpush2.msra.mxu0 0.0
        %1315 = vmatprep.subr.mxu0 0.0
        %1316 = vmatpush2.msra.mxu0 0.0
        %1317 = vmatprep.subr.mxu0 0.0
        %1318 = vmatpush2.msra.mxu0 0.0
        %1319 = vmatprep.subr.mxu0 0.0
        %1320 = vmatpush2.msra.mxu0 0.0
        %1321 = vmatprep.subr.mxu0 0.0
        %1322 = vmatpush2.msra.mxu0 0.0
        %1323 = vmatprep.subr.mxu0 0.0
        %1324 = vmatpush2.msra.mxu0 0.0
        %1325 = vmatprep.subr.mxu0 0.0
        %1326 = vmatpush2.msra.mxu0 0.0
        %1327 = vmatprep.subr.mxu0 0.0
        %1328 = vmatpush2.msra.mxu0 0.0
        %1329 = vmatprep.subr.mxu0 0.0
        %1330 = vmatpush2.msra.mxu0 0.0
        %1331 = vmatprep.subr.mxu0 0.0
        %1332 = vmatpush2.msra.mxu0 0.0
        %1333 = vmatprep.subr.mxu0 0.0
        %1334 = vmatpush2.msra.mxu0 0.0
        %1335 = vmatprep.subr.mxu0 0.0
        %1336 = vmatpush2.msra.mxu0 0.0
        %1337 = vmatprep.subr.mxu0 0.0
        %1338 = vmatpush2.msra.mxu0 0.0
        %1339 = vmatprep.subr.mxu0 0.0
        %1340 = vmatpush2.msra.mxu0 0.0
        %1341 = vmatprep.mubr.f32.mxu0 0.0
        %v1342 = vand.u32 %v1021, 4294901760
        %v1343 = vsub.f32 %v1021, %v1342
        %v1344 = vand.u32 %v1343, 4294901760
        %1345 = vmatmul.mubr.f32.gmra.mxu0 %v1344
        %v1346 = vpop.f32.mrf.mxu0
        %v1347 = vadd.f32 %v1270, %v1346
        %v1348 = vpop.f32.mrf.mxu0
        %1349 = vdwg.mxu0
        %1350 = vmatprep.subr.mxu0 0.0
        %1351 = vmatpush1.msra.mxu0 0.0
        %1352 = vmatprep.subr.mxu0 0.0
        %1353 = vmatpush1.msra.mxu0 0.0
        %1354 = vmatprep.subr.mxu0 0.0
        %1355 = vmatpush1.msra.mxu0 0.0
        %1356 = vmatprep.subr.mxu0 0.0
        %1357 = vmatpush1.msra.mxu0 0.0
        %1358 = vmatprep.subr.mxu0 0.0
        %1359 = vmatpush1.msra.mxu0 0.0
        %1360 = vmatprep.subr.mxu0 0.0
        %1361 = vmatpush1.msra.mxu0 0.0
        %1362 = vmatprep.subr.mxu0 0.0
        %1363 = vmatpush1.msra.mxu0 0.0
        %1364 = vmatprep.subr.mxu0 0.0
        %1365 = vmatpush1.msra.mxu0 0.0
        %1366 = vmatprep.subr.mxu0 0.0
        %1367 = vmatpush1.msra.mxu0 0.0
        %1368 = vmatprep.subr.mxu0 0.0
        %1369 = vmatpush1.msra.mxu0 0.0
        %1370 = vmatprep.subr.mxu0 0.0
        %1371 = vmatpush1.msra.mxu0 0.0
        %1372 = vmatprep.subr.mxu0 0.0
        %1373 = vmatpush1.msra.mxu0 0.0
        %1374 = vmatprep.subr.mxu0 0.0
        %v1375 = vand.u32 %v525, 4294901760
        %v1376 = vsub.f32 %v525, %v1375
        %v1377 = vand.u32 %v1376, 4294901760
        %1378 = vmatpush1.msra.mxu0 %v1377
        %1379 = vmatprep.subr.mxu0 0.0
        %v1380 = vand.u32 %v524, 4294901760
        %v1381 = vsub.f32 %v524, %v1380
        %v1382 = vand.u32 %v1381, 4294901760
        %1383 = vmatpush1.msra.mxu0 %v1382
        %1384 = vmatprep.subr.mxu0 0.0
        %v1385 = vand.u32 %v523, 4294901760
        %v1386 = vsub.f32 %v523, %v1385
        %v1387 = vand.u32 %v1386, 4294901760
        %1388 = vmatpush1.msra.mxu0 %v1387
        %1389 = vmatprep.subr.mxu0 0.0
        %v1390 = vand.u32 %v522, 4294901760
        %v1391 = vsub.f32 %v522, %v1390
        %v1392 = vand.u32 %v1391, 4294901760
        %1393 = vmatpush1.msra.mxu0 %v1392
        %1394 = vmatprep.subr.mxu0 0.0
        %1395 = vmatpush2.msra.mxu0 0.0
        %1396 = vmatprep.subr.mxu0 0.0
        %1397 = vmatpush2.msra.mxu0 0.0
        %1398 = vmatprep.subr.mxu0 0.0
        %1399 = vmatpush2.msra.mxu0 0.0
        %1400 = vmatprep.subr.mxu0 0.0
        %1401 = vmatpush2.msra.mxu0 0.0
        %1402 = vmatprep.subr.mxu0 0.0
        %1403 = vmatpush2.msra.mxu0 0.0
        %1404 = vmatprep.subr.mxu0 0.0
        %1405 = vmatpush2.msra.mxu0 0.0
        %1406 = vmatprep.subr.mxu0 0.0
        %1407 = vmatpush2.msra.mxu0 0.0
        %1408 = vmatprep.subr.mxu0 0.0
        %1409 = vmatpush2.msra.mxu0 0.0
        %1410 = vmatprep.subr.mxu0 0.0
        %1411 = vmatpush2.msra.mxu0 0.0
        %1412 = vmatprep.subr.mxu0 0.0
        %1413 = vmatpush2.msra.mxu0 0.0
        %1414 = vmatprep.subr.mxu0 0.0
        %1415 = vmatpush2.msra.mxu0 0.0
        %1416 = vmatprep.subr.mxu0 0.0
        %1417 = vmatpush2.msra.mxu0 0.0
        %1418 = vmatprep.subr.mxu0 0.0
        %1419 = vmatpush2.msra.mxu0 0.0
        %1420 = vmatprep.subr.mxu0 0.0
        %1421 = vmatpush2.msra.mxu0 0.0
        %1422 = vmatprep.subr.mxu0 0.0
        %1423 = vmatpush2.msra.mxu0 0.0
        %1424 = vmatprep.subr.mxu0 0.0
        %1425 = vmatpush2.msra.mxu0 0.0
        %1426 = vmatprep.mubr.f32.mxu0 0.0
        %v1427 = vand.u32 %v1021, 4294901760
        %1428 = vmatmul.mubr.f32.gmra.mxu0 %v1427
        %v1429 = vpop.f32.mrf.mxu0
        %v1430 = vadd.f32 %v1347, %v1429
        %v1431 = vpop.f32.mrf.mxu0
        %1432 = vdwg.mxu0
        %1433 = vmatprep.subr.mxu0 0.0
        %1434 = vmatpush1.msra.mxu0 0.0
        %1435 = vmatprep.subr.mxu0 0.0
        %1436 = vmatpush1.msra.mxu0 0.0
        %1437 = vmatprep.subr.mxu0 0.0
        %1438 = vmatpush1.msra.mxu0 0.0
        %1439 = vmatprep.subr.mxu0 0.0
        %1440 = vmatpush1.msra.mxu0 0.0
        %1441 = vmatprep.subr.mxu0 0.0
        %1442 = vmatpush1.msra.mxu0 0.0
        %1443 = vmatprep.subr.mxu0 0.0
        %1444 = vmatpush1.msra.mxu0 0.0
        %1445 = vmatprep.subr.mxu0 0.0
        %1446 = vmatpush1.msra.mxu0 0.0
        %1447 = vmatprep.subr.mxu0 0.0
        %1448 = vmatpush1.msra.mxu0 0.0
        %1449 = vmatprep.subr.mxu0 0.0
        %1450 = vmatpush1.msra.mxu0 0.0
        %1451 = vmatprep.subr.mxu0 0.0
        %1452 = vmatpush1.msra.mxu0 0.0
        %1453 = vmatprep.subr.mxu0 0.0
        %1454 = vmatpush1.msra.mxu0 0.0
        %1455 = vmatprep.subr.mxu0 0.0
        %1456 = vmatpush1.msra.mxu0 0.0
        %1457 = vmatprep.subr.mxu0 0.0
        %v1458 = vand.u32 %v525, 4294901760
        %1459 = vmatpush1.msra.mxu0 %v1458
        %1460 = vmatprep.subr.mxu0 0.0
        %v1461 = vand.u32 %v524, 4294901760
        %1462 = vmatpush1.msra.mxu0 %v1461
        %1463 = vmatprep.subr.mxu0 0.0
        %v1464 = vand.u32 %v523, 4294901760
        %1465 = vmatpush1.msra.mxu0 %v1464
        %1466 = vmatprep.subr.mxu0 0.0
        %v1467 = vand.u32 %v522, 4294901760
        %1468 = vmatpush1.msra.mxu0 %v1467
        %1469 = vmatprep.subr.mxu0 0.0
        %1470 = vmatpush2.msra.mxu0 0.0
        %1471 = vmatprep.subr.mxu0 0.0
        %1472 = vmatpush2.msra.mxu0 0.0
        %1473 = vmatprep.subr.mxu0 0.0
        %1474 = vmatpush2.msra.mxu0 0.0
        %1475 = vmatprep.subr.mxu0 0.0
        %1476 = vmatpush2.msra.mxu0 0.0
        %1477 = vmatprep.subr.mxu0 0.0
        %1478 = vmatpush2.msra.mxu0 0.0
        %1479 = vmatprep.subr.mxu0 0.0
        %1480 = vmatpush2.msra.mxu0 0.0
        %1481 = vmatprep.subr.mxu0 0.0
        %1482 = vmatpush2.msra.mxu0 0.0
        %1483 = vmatprep.subr.mxu0 0.0
        %1484 = vmatpush2.msra.mxu0 0.0
        %1485 = vmatprep.subr.mxu0 0.0
        %1486 = vmatpush2.msra.mxu0 0.0
        %1487 = vmatprep.subr.mxu0 0.0
        %1488 = vmatpush2.msra.mxu0 0.0
        %1489 = vmatprep.subr.mxu0 0.0
        %1490 = vmatpush2.msra.mxu0 0.0
        %1491 = vmatprep.subr.mxu0 0.0
        %1492 = vmatpush2.msra.mxu0 0.0
        %1493 = vmatprep.subr.mxu0 0.0
        %1494 = vmatpush2.msra.mxu0 0.0
        %1495 = vmatprep.subr.mxu0 0.0
        %1496 = vmatpush2.msra.mxu0 0.0
        %1497 = vmatprep.subr.mxu0 0.0
        %1498 = vmatpush2.msra.mxu0 0.0
        %1499 = vmatprep.subr.mxu0 0.0
        %1500 = vmatpush2.msra.mxu0 0.0
        %1501 = vmatprep.mubr.f32.mxu0 0.0
        %v1502 = vand.u32 %v1021, 4294901760
        %1503 = vmatmul.mubr.f32.gmra.mxu0 %v1502
        %v1504 = vpop.f32.mrf.mxu0
        %v1505 = vadd.f32 %v1430, %v1504
        %v1506 = vpop.f32.mrf.mxu0
        %1507 = vdwg.mxu0
        %v1509 = vsel %vm531, %v517, 0
        %1511 = vmatprep.subr.mxu0 0.0
        %1512 = vmatpush1.msra.mxu0 0.0
        %1513 = vmatprep.subr.mxu0 0.0
        %1514 = vmatpush1.msra.mxu0 0.0
        %1515 = vmatprep.subr.mxu0 0.0
        %1516 = vmatpush1.msra.mxu0 0.0
        %1517 = vmatprep.subr.mxu0 0.0
        %1518 = vmatpush1.msra.mxu0 0.0
        %1519 = vmatprep.subr.mxu0 0.0
        %1520 = vmatpush1.msra.mxu0 0.0
        %1521 = vmatprep.subr.mxu0 0.0
        %1522 = vmatpush1.msra.mxu0 0.0
        %1523 = vmatprep.subr.mxu0 0.0
        %1524 = vmatpush1.msra.mxu0 0.0
        %1525 = vmatprep.subr.mxu0 0.0
        %1526 = vmatpush1.msra.mxu0 0.0
        %1527 = vmatprep.subr.mxu0 0.0
        %1528 = vmatpush1.msra.mxu0 0.0
        %1529 = vmatprep.subr.mxu0 0.0
        %1530 = vmatpush1.msra.mxu0 0.0
        %1531 = vmatprep.subr.mxu0 0.0
        %1532 = vmatpush1.msra.mxu0 0.0
        %1533 = vmatprep.subr.mxu0 0.0
        %1534 = vmatpush1.msra.mxu0 0.0
        %1535 = vmatprep.subr.mxu0 0.0
        %v1536 = vand.u32 %v529, 4294901760
        %1537 = vmatpush1.msra.mxu0 %v1536
        %1538 = vmatprep.subr.mxu0 0.0
        %v1539 = vand.u32 %v528, 4294901760
        %1540 = vmatpush1.msra.mxu0 %v1539
        %1541 = vmatprep.subr.mxu0 0.0
        %v1542 = vand.u32 %v527, 4294901760
        %1543 = vmatpush1.msra.mxu0 %v1542
        %1544 = vmatprep.subr.mxu0 0.0
        %v1545 = vand.u32 %v526, 4294901760
        %1546 = vmatpush1.msra.mxu0 %v1545
        %1547 = vmatprep.subr.mxu0 0.0
        %1548 = vmatpush2.msra.mxu0 0.0
        %1549 = vmatprep.subr.mxu0 0.0
        %1550 = vmatpush2.msra.mxu0 0.0
        %1551 = vmatprep.subr.mxu0 0.0
        %1552 = vmatpush2.msra.mxu0 0.0
        %1553 = vmatprep.subr.mxu0 0.0
        %1554 = vmatpush2.msra.mxu0 0.0
        %1555 = vmatprep.subr.mxu0 0.0
        %1556 = vmatpush2.msra.mxu0 0.0
        %1557 = vmatprep.subr.mxu0 0.0
        %1558 = vmatpush2.msra.mxu0 0.0
        %1559 = vmatprep.subr.mxu0 0.0
        %1560 = vmatpush2.msra.mxu0 0.0
        %1561 = vmatprep.subr.mxu0 0.0
        %1562 = vmatpush2.msra.mxu0 0.0
        %1563 = vmatprep.subr.mxu0 0.0
        %1564 = vmatpush2.msra.mxu0 0.0
        %1565 = vmatprep.subr.mxu0 0.0
        %1566 = vmatpush2.msra.mxu0 0.0
        %1567 = vmatprep.subr.mxu0 0.0
        %1568 = vmatpush2.msra.mxu0 0.0
        %1569 = vmatprep.subr.mxu0 0.0
        %1570 = vmatpush2.msra.mxu0 0.0
        %1571 = vmatprep.subr.mxu0 0.0
        %1572 = vmatpush2.msra.mxu0 0.0
        %1573 = vmatprep.subr.mxu0 0.0
        %1574 = vmatpush2.msra.mxu0 0.0
        %1575 = vmatprep.subr.mxu0 0.0
        %1576 = vmatpush2.msra.mxu0 0.0
        %1577 = vmatprep.subr.mxu0 0.0
        %1578 = vmatpush2.msra.mxu0 0.0
        %1579 = vmatprep.mubr.f32.mxu0 0.0
        %v1580 = vand.u32 %v1509, 4294901760
        %v1581 = vsub.f32 %v1509, %v1580
        %v1582 = vand.u32 %v1581, 4294901760
        %v1583 = vsub.f32 %v1581, %v1582
        %v1584 = vand.u32 %v1583, 4294901760
        %1585 = vmatmul.mubr.f32.gmra.mxu0 %v1584
        %v1586 = vpop.f32.mrf.mxu0
        %v1587 = vadd.f32 0.0, %v1586
        %v1588 = vpop.f32.mrf.mxu0
        %1589 = vdwg.mxu0
        %1590 = vmatprep.subr.mxu0 0.0
        %1591 = vmatpush1.msra.mxu0 0.0
        %1592 = vmatprep.subr.mxu0 0.0
        %1593 = vmatpush1.msra.mxu0 0.0
        %1594 = vmatprep.subr.mxu0 0.0
        %1595 = vmatpush1.msra.mxu0 0.0
        %1596 = vmatprep.subr.mxu0 0.0
        %1597 = vmatpush1.msra.mxu0 0.0
        %1598 = vmatprep.subr.mxu0 0.0
        %1599 = vmatpush1.msra.mxu0 0.0
        %1600 = vmatprep.subr.mxu0 0.0
        %1601 = vmatpush1.msra.mxu0 0.0
        %1602 = vmatprep.subr.mxu0 0.0
        %1603 = vmatpush1.msra.mxu0 0.0
        %1604 = vmatprep.subr.mxu0 0.0
        %1605 = vmatpush1.msra.mxu0 0.0
        %1606 = vmatprep.subr.mxu0 0.0
        %1607 = vmatpush1.msra.mxu0 0.0
        %1608 = vmatprep.subr.mxu0 0.0
        %1609 = vmatpush1.msra.mxu0 0.0
        %1610 = vmatprep.subr.mxu0 0.0
        %1611 = vmatpush1.msra.mxu0 0.0
        %1612 = vmatprep.subr.mxu0 0.0
        %1613 = vmatpush1.msra.mxu0 0.0
        %1614 = vmatprep.subr.mxu0 0.0
        %v1615 = vand.u32 %v529, 4294901760
        %v1616 = vsub.f32 %v529, %v1615
        %v1617 = vand.u32 %v1616, 4294901760
        %v1618 = vsub.f32 %v1616, %v1617
        %v1619 = vand.u32 %v1618, 4294901760
        %1620 = vmatpush1.msra.mxu0 %v1619
        %1621 = vmatprep.subr.mxu0 0.0
        %v1622 = vand.u32 %v528, 4294901760
        %v1623 = vsub.f32 %v528, %v1622
        %v1624 = vand.u32 %v1623, 4294901760
        %v1625 = vsub.f32 %v1623, %v1624
        %v1626 = vand.u32 %v1625, 4294901760
        %1627 = vmatpush1.msra.mxu0 %v1626
        %1628 = vmatprep.subr.mxu0 0.0
        %v1629 = vand.u32 %v527, 4294901760
        %v1630 = vsub.f32 %v527, %v1629
        %v1631 = vand.u32 %v1630, 4294901760
        %v1632 = vsub.f32 %v1630, %v1631
        %v1633 = vand.u32 %v1632, 4294901760
        %1634 = vmatpush1.msra.mxu0 %v1633
        %1635 = vmatprep.subr.mxu0 0.0
        %v1636 = vand.u32 %v526, 4294901760
        %v1637 = vsub.f32 %v526, %v1636
        %v1638 = vand.u32 %v1637, 4294901760
        %v1639 = vsub.f32 %v1637, %v1638
        %v1640 = vand.u32 %v1639, 4294901760
        %1641 = vmatpush1.msra.mxu0 %v1640
        %1642 = vmatprep.subr.mxu0 0.0
        %1643 = vmatpush2.msra.mxu0 0.0
        %1644 = vmatprep.subr.mxu0 0.0
        %1645 = vmatpush2.msra.mxu0 0.0
        %1646 = vmatprep.subr.mxu0 0.0
        %1647 = vmatpush2.msra.mxu0 0.0
        %1648 = vmatprep.subr.mxu0 0.0
        %1649 = vmatpush2.msra.mxu0 0.0
        %1650 = vmatprep.subr.mxu0 0.0
        %1651 = vmatpush2.msra.mxu0 0.0
        %1652 = vmatprep.subr.mxu0 0.0
        %1653 = vmatpush2.msra.mxu0 0.0
        %1654 = vmatprep.subr.mxu0 0.0
        %1655 = vmatpush2.msra.mxu0 0.0
        %1656 = vmatprep.subr.mxu0 0.0
        %1657 = vmatpush2.msra.mxu0 0.0
        %1658 = vmatprep.subr.mxu0 0.0
        %1659 = vmatpush2.msra.mxu0 0.0
        %1660 = vmatprep.subr.mxu0 0.0
        %1661 = vmatpush2.msra.mxu0 0.0
        %1662 = vmatprep.subr.mxu0 0.0
        %1663 = vmatpush2.msra.mxu0 0.0
        %1664 = vmatprep.subr.mxu0 0.0
        %1665 = vmatpush2.msra.mxu0 0.0
        %1666 = vmatprep.subr.mxu0 0.0
        %1667 = vmatpush2.msra.mxu0 0.0
        %1668 = vmatprep.subr.mxu0 0.0
        %1669 = vmatpush2.msra.mxu0 0.0
        %1670 = vmatprep.subr.mxu0 0.0
        %1671 = vmatpush2.msra.mxu0 0.0
        %1672 = vmatprep.subr.mxu0 0.0
        %1673 = vmatpush2.msra.mxu0 0.0
        %1674 = vmatprep.mubr.f32.mxu0 0.0
        %v1675 = vand.u32 %v1509, 4294901760
        %1676 = vmatmul.mubr.f32.gmra.mxu0 %v1675
        %v1677 = vpop.f32.mrf.mxu0
        %v1678 = vadd.f32 %v1587, %v1677
        %v1679 = vpop.f32.mrf.mxu0
        %1680 = vdwg.mxu0
        %1681 = vmatprep.subr.mxu0 0.0
        %1682 = vmatpush1.msra.mxu0 0.0
        %1683 = vmatprep.subr.mxu0 0.0
        %1684 = vmatpush1.msra.mxu0 0.0
        %1685 = vmatprep.subr.mxu0 0.0
        %1686 = vmatpush1.msra.mxu0 0.0
        %1687 = vmatprep.subr.mxu0 0.0
        %1688 = vmatpush1.msra.mxu0 0.0
        %1689 = vmatprep.subr.mxu0 0.0
        %1690 = vmatpush1.msra.mxu0 0.0
        %1691 = vmatprep.subr.mxu0 0.0
        %1692 = vmatpush1.msra.mxu0 0.0
        %1693 = vmatprep.subr.mxu0 0.0
        %1694 = vmatpush1.msra.mxu0 0.0
        %1695 = vmatprep.subr.mxu0 0.0
        %1696 = vmatpush1.msra.mxu0 0.0
        %1697 = vmatprep.subr.mxu0 0.0
        %1698 = vmatpush1.msra.mxu0 0.0
        %1699 = vmatprep.subr.mxu0 0.0
        %1700 = vmatpush1.msra.mxu0 0.0
        %1701 = vmatprep.subr.mxu0 0.0
        %1702 = vmatpush1.msra.mxu0 0.0
        %1703 = vmatprep.subr.mxu0 0.0
        %1704 = vmatpush1.msra.mxu0 0.0
        %1705 = vmatprep.subr.mxu0 0.0
        %v1706 = vand.u32 %v529, 4294901760
        %v1707 = vsub.f32 %v529, %v1706
        %1708 = vmatpush1.msra.mxu0 %v1707
        %1709 = vmatprep.subr.mxu0 0.0
        %v1710 = vand.u32 %v528, 4294901760
        %v1711 = vsub.f32 %v528, %v1710
        %1712 = vmatpush1.msra.mxu0 %v1711
        %1713 = vmatprep.subr.mxu0 0.0
        %v1714 = vand.u32 %v527, 4294901760
        %v1715 = vsub.f32 %v527, %v1714
        %1716 = vmatpush1.msra.mxu0 %v1715
        %1717 = vmatprep.subr.mxu0 0.0
        %v1718 = vand.u32 %v526, 4294901760
        %v1719 = vsub.f32 %v526, %v1718
        %1720 = vmatpush1.msra.mxu0 %v1719
        %1721 = vmatprep.subr.mxu0 0.0
        %1722 = vmatpush2.msra.mxu0 0.0
        %1723 = vmatprep.subr.mxu0 0.0
        %1724 = vmatpush2.msra.mxu0 0.0
        %1725 = vmatprep.subr.mxu0 0.0
        %1726 = vmatpush2.msra.mxu0 0.0
        %1727 = vmatprep.subr.mxu0 0.0
        %1728 = vmatpush2.msra.mxu0 0.0
        %1729 = vmatprep.subr.mxu0 0.0
        %1730 = vmatpush2.msra.mxu0 0.0
        %1731 = vmatprep.subr.mxu0 0.0
        %1732 = vmatpush2.msra.mxu0 0.0
        %1733 = vmatprep.subr.mxu0 0.0
        %1734 = vmatpush2.msra.mxu0 0.0
        %1735 = vmatprep.subr.mxu0 0.0
        %1736 = vmatpush2.msra.mxu0 0.0
        %1737 = vmatprep.subr.mxu0 0.0
        %1738 = vmatpush2.msra.mxu0 0.0
        %1739 = vmatprep.subr.mxu0 0.0
        %1740 = vmatpush2.msra.mxu0 0.0
        %1741 = vmatprep.subr.mxu0 0.0
        %1742 = vmatpush2.msra.mxu0 0.0
        %1743 = vmatprep.subr.mxu0 0.0
        %1744 = vmatpush2.msra.mxu0 0.0
        %1745 = vmatprep.subr.mxu0 0.0
        %1746 = vmatpush2.msra.mxu0 0.0
        %1747 = vmatprep.subr.mxu0 0.0
        %1748 = vmatpush2.msra.mxu0 0.0
        %1749 = vmatprep.subr.mxu0 0.0
        %1750 = vmatpush2.msra.mxu0 0.0
        %1751 = vmatprep.subr.mxu0 0.0
        %1752 = vmatpush2.msra.mxu0 0.0
        %1753 = vmatprep.mubr.f32.mxu0 0.0
        %v1754 = vand.u32 %v1509, 4294901760
        %v1755 = vsub.f32 %v1509, %v1754
        %1756 = vmatmul.mubr.f32.gmra.mxu0 %v1755
        %v1757 = vpop.f32.mrf.mxu0
        %v1758 = vadd.f32 %v1678, %v1757
        %v1759 = vpop.f32.mrf.mxu0
        %1760 = vdwg.mxu0
        %1761 = vmatprep.subr.mxu0 0.0
        %1762 = vmatpush1.msra.mxu0 0.0
        %1763 = vmatprep.subr.mxu0 0.0
        %1764 = vmatpush1.msra.mxu0 0.0
        %1765 = vmatprep.subr.mxu0 0.0
        %1766 = vmatpush1.msra.mxu0 0.0
        %1767 = vmatprep.subr.mxu0 0.0
        %1768 = vmatpush1.msra.mxu0 0.0
        %1769 = vmatprep.subr.mxu0 0.0
        %1770 = vmatpush1.msra.mxu0 0.0
        %1771 = vmatprep.subr.mxu0 0.0
        %1772 = vmatpush1.msra.mxu0 0.0
        %1773 = vmatprep.subr.mxu0 0.0
        %1774 = vmatpush1.msra.mxu0 0.0
        %1775 = vmatprep.subr.mxu0 0.0
        %1776 = vmatpush1.msra.mxu0 0.0
        %1777 = vmatprep.subr.mxu0 0.0
        %1778 = vmatpush1.msra.mxu0 0.0
        %1779 = vmatprep.subr.mxu0 0.0
        %1780 = vmatpush1.msra.mxu0 0.0
        %1781 = vmatprep.subr.mxu0 0.0
        %1782 = vmatpush1.msra.mxu0 0.0
        %1783 = vmatprep.subr.mxu0 0.0
        %1784 = vmatpush1.msra.mxu0 0.0
        %1785 = vmatprep.subr.mxu0 0.0
        %v1786 = vand.u32 %v529, 4294901760
        %1787 = vmatpush1.msra.mxu0 %v1786
        %1788 = vmatprep.subr.mxu0 0.0
        %v1789 = vand.u32 %v528, 4294901760
        %1790 = vmatpush1.msra.mxu0 %v1789
        %1791 = vmatprep.subr.mxu0 0.0
        %v1792 = vand.u32 %v527, 4294901760
        %1793 = vmatpush1.msra.mxu0 %v1792
        %1794 = vmatprep.subr.mxu0 0.0
        %v1795 = vand.u32 %v526, 4294901760
        %1796 = vmatpush1.msra.mxu0 %v1795
        %1797 = vmatprep.subr.mxu0 0.0
        %1798 = vmatpush2.msra.mxu0 0.0
        %1799 = vmatprep.subr.mxu0 0.0
        %1800 = vmatpush2.msra.mxu0 0.0
        %1801 = vmatprep.subr.mxu0 0.0
        %1802 = vmatpush2.msra.mxu0 0.0
        %1803 = vmatprep.subr.mxu0 0.0
        %1804 = vmatpush2.msra.mxu0 0.0
        %1805 = vmatprep.subr.mxu0 0.0
        %1806 = vmatpush2.msra.mxu0 0.0
        %1807 = vmatprep.subr.mxu0 0.0
        %1808 = vmatpush2.msra.mxu0 0.0
        %1809 = vmatprep.subr.mxu0 0.0
        %1810 = vmatpush2.msra.mxu0 0.0
        %1811 = vmatprep.subr.mxu0 0.0
        %1812 = vmatpush2.msra.mxu0 0.0
        %1813 = vmatprep.subr.mxu0 0.0
        %1814 = vmatpush2.msra.mxu0 0.0
        %1815 = vmatprep.subr.mxu0 0.0
        %1816 = vmatpush2.msra.mxu0 0.0
        %1817 = vmatprep.subr.mxu0 0.0
        %1818 = vmatpush2.msra.mxu0 0.0
        %1819 = vmatprep.subr.mxu0 0.0
        %1820 = vmatpush2.msra.mxu0 0.0
        %1821 = vmatprep.subr.mxu0 0.0
        %1822 = vmatpush2.msra.mxu0 0.0
        %1823 = vmatprep.subr.mxu0 0.0
        %1824 = vmatpush2.msra.mxu0 0.0
        %1825 = vmatprep.subr.mxu0 0.0
        %1826 = vmatpush2.msra.mxu0 0.0
        %1827 = vmatprep.subr.mxu0 0.0
        %1828 = vmatpush2.msra.mxu0 0.0
        %1829 = vmatprep.mubr.f32.mxu0 0.0
        %v1830 = vand.u32 %v1509, 4294901760
        %v1831 = vsub.f32 %v1509, %v1830
        %v1832 = vand.u32 %v1831, 4294901760
        %1833 = vmatmul.mubr.f32.gmra.mxu0 %v1832
        %v1834 = vpop.f32.mrf.mxu0
        %v1835 = vadd.f32 %v1758, %v1834
        %v1836 = vpop.f32.mrf.mxu0
        %1837 = vdwg.mxu0
        %1838 = vmatprep.subr.mxu0 0.0
        %1839 = vmatpush1.msra.mxu0 0.0
        %1840 = vmatprep.subr.mxu0 0.0
        %1841 = vmatpush1.msra.mxu0 0.0
        %1842 = vmatprep.subr.mxu0 0.0
        %1843 = vmatpush1.msra.mxu0 0.0
        %1844 = vmatprep.subr.mxu0 0.0
        %1845 = vmatpush1.msra.mxu0 0.0
        %1846 = vmatprep.subr.mxu0 0.0
        %1847 = vmatpush1.msra.mxu0 0.0
        %1848 = vmatprep.subr.mxu0 0.0
        %1849 = vmatpush1.msra.mxu0 0.0
        %1850 = vmatprep.subr.mxu0 0.0
        %1851 = vmatpush1.msra.mxu0 0.0
        %1852 = vmatprep.subr.mxu0 0.0
        %1853 = vmatpush1.msra.mxu0 0.0
        %1854 = vmatprep.subr.mxu0 0.0
        %1855 = vmatpush1.msra.mxu0 0.0
        %1856 = vmatprep.subr.mxu0 0.0
        %1857 = vmatpush1.msra.mxu0 0.0
        %1858 = vmatprep.subr.mxu0 0.0
        %1859 = vmatpush1.msra.mxu0 0.0
        %1860 = vmatprep.subr.mxu0 0.0
        %1861 = vmatpush1.msra.mxu0 0.0
        %1862 = vmatprep.subr.mxu0 0.0
        %v1863 = vand.u32 %v529, 4294901760
        %v1864 = vsub.f32 %v529, %v1863
        %v1865 = vand.u32 %v1864, 4294901760
        %1866 = vmatpush1.msra.mxu0 %v1865
        %1867 = vmatprep.subr.mxu0 0.0
        %v1868 = vand.u32 %v528, 4294901760
        %v1869 = vsub.f32 %v528, %v1868
        %v1870 = vand.u32 %v1869, 4294901760
        %1871 = vmatpush1.msra.mxu0 %v1870
        %1872 = vmatprep.subr.mxu0 0.0
        %v1873 = vand.u32 %v527, 4294901760
        %v1874 = vsub.f32 %v527, %v1873
        %v1875 = vand.u32 %v1874, 4294901760
        %1876 = vmatpush1.msra.mxu0 %v1875
        %1877 = vmatprep.subr.mxu0 0.0
        %v1878 = vand.u32 %v526, 4294901760
        %v1879 = vsub.f32 %v526, %v1878
        %v1880 = vand.u32 %v1879, 4294901760
        %1881 = vmatpush1.msra.mxu0 %v1880
        %1882 = vmatprep.subr.mxu0 0.0
        %1883 = vmatpush2.msra.mxu0 0.0
        %1884 = vmatprep.subr.mxu0 0.0
        %1885 = vmatpush2.msra.mxu0 0.0
        %1886 = vmatprep.subr.mxu0 0.0
        %1887 = vmatpush2.msra.mxu0 0.0
        %1888 = vmatprep.subr.mxu0 0.0
        %1889 = vmatpush2.msra.mxu0 0.0
        %1890 = vmatprep.subr.mxu0 0.0
        %1891 = vmatpush2.msra.mxu0 0.0
        %1892 = vmatprep.subr.mxu0 0.0
        %1893 = vmatpush2.msra.mxu0 0.0
        %1894 = vmatprep.subr.mxu0 0.0
        %1895 = vmatpush2.msra.mxu0 0.0
        %1896 = vmatprep.subr.mxu0 0.0
        %1897 = vmatpush2.msra.mxu0 0.0
        %1898 = vmatprep.subr.mxu0 0.0
        %1899 = vmatpush2.msra.mxu0 0.0
        %1900 = vmatprep.subr.mxu0 0.0
        %1901 = vmatpush2.msra.mxu0 0.0
        %1902 = vmatprep.subr.mxu0 0.0
        %1903 = vmatpush2.msra.mxu0 0.0
        %1904 = vmatprep.subr.mxu0 0.0
        %1905 = vmatpush2.msra.mxu0 0.0
        %1906 = vmatprep.subr.mxu0 0.0
        %1907 = vmatpush2.msra.mxu0 0.0
        %1908 = vmatprep.subr.mxu0 0.0
        %1909 = vmatpush2.msra.mxu0 0.0
        %1910 = vmatprep.subr.mxu0 0.0
        %1911 = vmatpush2.msra.mxu0 0.0
        %1912 = vmatprep.subr.mxu0 0.0
        %1913 = vmatpush2.msra.mxu0 0.0
        %1914 = vmatprep.mubr.f32.mxu0 0.0
        %v1915 = vand.u32 %v1509, 4294901760
        %1916 = vmatmul.mubr.f32.gmra.mxu0 %v1915
        %v1917 = vpop.f32.mrf.mxu0
        %v1918 = vadd.f32 %v1835, %v1917
        %v1919 = vpop.f32.mrf.mxu0
        %1920 = vdwg.mxu0
        %1921 = vmatprep.subr.mxu0 0.0
        %1922 = vmatpush1.msra.mxu0 0.0
        %1923 = vmatprep.subr.mxu0 0.0
        %1924 = vmatpush1.msra.mxu0 0.0
        %1925 = vmatprep.subr.mxu0 0.0
        %1926 = vmatpush1.msra.mxu0 0.0
        %1927 = vmatprep.subr.mxu0 0.0
        %1928 = vmatpush1.msra.mxu0 0.0
        %1929 = vmatprep.subr.mxu0 0.0
        %1930 = vmatpush1.msra.mxu0 0.0
        %1931 = vmatprep.subr.mxu0 0.0
        %1932 = vmatpush1.msra.mxu0 0.0
        %1933 = vmatprep.subr.mxu0 0.0
        %1934 = vmatpush1.msra.mxu0 0.0
        %1935 = vmatprep.subr.mxu0 0.0
        %1936 = vmatpush1.msra.mxu0 0.0
        %1937 = vmatprep.subr.mxu0 0.0
        %1938 = vmatpush1.msra.mxu0 0.0
        %1939 = vmatprep.subr.mxu0 0.0
        %1940 = vmatpush1.msra.mxu0 0.0
        %1941 = vmatprep.subr.mxu0 0.0
        %1942 = vmatpush1.msra.mxu0 0.0
        %1943 = vmatprep.subr.mxu0 0.0
        %1944 = vmatpush1.msra.mxu0 0.0
        %1945 = vmatprep.subr.mxu0 0.0
        %v1946 = vand.u32 %v529, 4294901760
        %1947 = vmatpush1.msra.mxu0 %v1946
        %1948 = vmatprep.subr.mxu0 0.0
        %v1949 = vand.u32 %v528, 4294901760
        %1950 = vmatpush1.msra.mxu0 %v1949
        %1951 = vmatprep.subr.mxu0 0.0
        %v1952 = vand.u32 %v527, 4294901760
        %1953 = vmatpush1.msra.mxu0 %v1952
        %1954 = vmatprep.subr.mxu0 0.0
        %v1955 = vand.u32 %v526, 4294901760
        %1956 = vmatpush1.msra.mxu0 %v1955
        %1957 = vmatprep.subr.mxu0 0.0
        %1958 = vmatpush2.msra.mxu0 0.0
        %1959 = vmatprep.subr.mxu0 0.0
        %1960 = vmatpush2.msra.mxu0 0.0
        %1961 = vmatprep.subr.mxu0 0.0
        %1962 = vmatpush2.msra.mxu0 0.0
        %1963 = vmatprep.subr.mxu0 0.0
        %1964 = vmatpush2.msra.mxu0 0.0
        %1965 = vmatprep.subr.mxu0 0.0
        %1966 = vmatpush2.msra.mxu0 0.0
        %1967 = vmatprep.subr.mxu0 0.0
        %1968 = vmatpush2.msra.mxu0 0.0
        %1969 = vmatprep.subr.mxu0 0.0
        %1970 = vmatpush2.msra.mxu0 0.0
        %1971 = vmatprep.subr.mxu0 0.0
        %1972 = vmatpush2.msra.mxu0 0.0
        %1973 = vmatprep.subr.mxu0 0.0
        %1974 = vmatpush2.msra.mxu0 0.0
        %1975 = vmatprep.subr.mxu0 0.0
        %1976 = vmatpush2.msra.mxu0 0.0
        %1977 = vmatprep.subr.mxu0 0.0
        %1978 = vmatpush2.msra.mxu0 0.0
        %1979 = vmatprep.subr.mxu0 0.0
        %1980 = vmatpush2.msra.mxu0 0.0
        %1981 = vmatprep.subr.mxu0 0.0
        %1982 = vmatpush2.msra.mxu0 0.0
        %1983 = vmatprep.subr.mxu0 0.0
        %1984 = vmatpush2.msra.mxu0 0.0
        %1985 = vmatprep.subr.mxu0 0.0
        %1986 = vmatpush2.msra.mxu0 0.0
        %1987 = vmatprep.subr.mxu0 0.0
        %1988 = vmatpush2.msra.mxu0 0.0
        %1989 = vmatprep.mubr.f32.mxu0 0.0
        %v1990 = vand.u32 %v1509, 4294901760
        %1991 = vmatmul.mubr.f32.gmra.mxu0 %v1990
        %v1992 = vpop.f32.mrf.mxu0
        %v1993 = vadd.f32 %v1918, %v1992
        %v1994 = vpop.f32.mrf.mxu0
        %1995 = vdwg.mxu0
        %vm1996 = vcmask 64512
        %v1998 = vsel %vm1996, %v1017, 0
        %v2001 = vsel %vm1996, %v1505, 0
        %2003 = vmatprep.subr.mxu0 0.0
        %2004 = vmatpush1.xpose.msra.mxu0 0.0
        %2005 = vmatprep.subr.mxu0 0.0
        %2006 = vmatpush1.xpose.msra.mxu0 0.0
        %2007 = vmatprep.subr.mxu0 0.0
        %2008 = vmatpush1.xpose.msra.mxu0 0.0
        %2009 = vmatprep.subr.mxu0 0.0
        %2010 = vmatpush1.xpose.msra.mxu0 0.0
        %2011 = vmatprep.subr.mxu0 0.0
        %2012 = vmatpush1.xpose.msra.mxu0 0.0
        %2013 = vmatprep.subr.mxu0 0.0
        %2014 = vmatpush1.xpose.msra.mxu0 0.0
        %2015 = vmatprep.subr.mxu0 0.0
        %2016 = vmatpush1.xpose.msra.mxu0 0.0
        %2017 = vmatprep.subr.mxu0 0.0
        %2018 = vmatpush1.xpose.msra.mxu0 0.0
        %2019 = vmatprep.subr.mxu0 0.0
        %2020 = vmatpush1.xpose.msra.mxu0 0.0
        %2021 = vmatprep.subr.mxu0 0.0
        %2022 = vmatpush1.xpose.msra.mxu0 0.0
        %2023 = vmatprep.subr.mxu0 0.0
        %2024 = vmatpush1.xpose.msra.mxu0 0.0
        %2025 = vmatprep.subr.mxu0 0.0
        %2026 = vmatpush1.xpose.msra.mxu0 0.0
        %2027 = vmatprep.subr.mxu0 0.0
        %2028 = vmatpush1.xpose.msra.mxu0 0.0
        %2029 = vmatprep.subr.mxu0 0.0
        %2030 = vmatpush1.xpose.msra.mxu0 0.0
        %2031 = vmatprep.subr.mxu0 0.0
        %2032 = vmatpush1.xpose.msra.mxu0 0.0
        %2033 = vmatprep.subr.mxu0 0.0
        %v2034 = vand.u32 %v2001, 4294901760
        %2035 = vmatpush1.xpose.msra.mxu0 %v2034
        %2036 = vmatprep.subr.mxu0 0.0
        %2037 = vmatpush2.xpose.msra.mxu0 0.0
        %2038 = vmatprep.subr.mxu0 0.0
        %2039 = vmatpush2.xpose.msra.mxu0 0.0
        %2040 = vmatprep.subr.mxu0 0.0
        %2041 = vmatpush2.xpose.msra.mxu0 0.0
        %2042 = vmatprep.subr.mxu0 0.0
        %2043 = vmatpush2.xpose.msra.mxu0 0.0
        %2044 = vmatprep.subr.mxu0 0.0
        %2045 = vmatpush2.xpose.msra.mxu0 0.0
        %2046 = vmatprep.subr.mxu0 0.0
        %2047 = vmatpush2.xpose.msra.mxu0 0.0
        %2048 = vmatprep.subr.mxu0 0.0
        %2049 = vmatpush2.xpose.msra.mxu0 0.0
        %2050 = vmatprep.subr.mxu0 0.0
        %2051 = vmatpush2.xpose.msra.mxu0 0.0
        %2052 = vmatprep.subr.mxu0 0.0
        %2053 = vmatpush2.xpose.msra.mxu0 0.0
        %2054 = vmatprep.subr.mxu0 0.0
        %2055 = vmatpush2.xpose.msra.mxu0 0.0
        %2056 = vmatprep.subr.mxu0 0.0
        %2057 = vmatpush2.xpose.msra.mxu0 0.0
        %2058 = vmatprep.subr.mxu0 0.0
        %2059 = vmatpush2.xpose.msra.mxu0 0.0
        %2060 = vmatprep.subr.mxu0 0.0
        %2061 = vmatpush2.xpose.msra.mxu0 0.0
        %2062 = vmatprep.subr.mxu0 0.0
        %2063 = vmatpush2.xpose.msra.mxu0 0.0
        %2064 = vmatprep.subr.mxu0 0.0
        %2065 = vmatpush2.xpose.msra.mxu0 0.0
        %2066 = vmatprep.subr.mxu0 0.0
        %2067 = vmatpush2.xpose.msra.mxu0 0.0
        %2068 = vmatprep.mubr.f32.mxu0 0.0
        %v2069 = vand.u32 %v1998, 4294901760
        %v2070 = vsub.f32 %v1998, %v2069
        %v2071 = vand.u32 %v2070, 4294901760
        %v2072 = vsub.f32 %v2070, %v2071
        %v2073 = vand.u32 %v2072, 4294901760
        %2074 = vmatmul.mubr.f32.gmra.mxu0 %v2073
        %v2075 = vpop.f32.mrf.mxu0
        %v2076 = vadd.f32 0.0, %v2075
        %v2077 = vpop.f32.mrf.mxu0
        %2078 = vdwg.mxu0
        %2079 = vmatprep.subr.mxu0 0.0
        %2080 = vmatpush1.xpose.msra.mxu0 0.0
        %2081 = vmatprep.subr.mxu0 0.0
        %2082 = vmatpush1.xpose.msra.mxu0 0.0
        %2083 = vmatprep.subr.mxu0 0.0
        %2084 = vmatpush1.xpose.msra.mxu0 0.0
        %2085 = vmatprep.subr.mxu0 0.0
        %2086 = vmatpush1.xpose.msra.mxu0 0.0
        %2087 = vmatprep.subr.mxu0 0.0
        %2088 = vmatpush1.xpose.msra.mxu0 0.0
        %2089 = vmatprep.subr.mxu0 0.0
        %2090 = vmatpush1.xpose.msra.mxu0 0.0
        %2091 = vmatprep.subr.mxu0 0.0
        %2092 = vmatpush1.xpose.msra.mxu0 0.0
        %2093 = vmatprep.subr.mxu0 0.0
        %2094 = vmatpush1.xpose.msra.mxu0 0.0
        %2095 = vmatprep.subr.mxu0 0.0
        %2096 = vmatpush1.xpose.msra.mxu0 0.0
        %2097 = vmatprep.subr.mxu0 0.0
        %2098 = vmatpush1.xpose.msra.mxu0 0.0
        %2099 = vmatprep.subr.mxu0 0.0
        %2100 = vmatpush1.xpose.msra.mxu0 0.0
        %2101 = vmatprep.subr.mxu0 0.0
        %2102 = vmatpush1.xpose.msra.mxu0 0.0
        %2103 = vmatprep.subr.mxu0 0.0
        %2104 = vmatpush1.xpose.msra.mxu0 0.0
        %2105 = vmatprep.subr.mxu0 0.0
        %2106 = vmatpush1.xpose.msra.mxu0 0.0
        %2107 = vmatprep.subr.mxu0 0.0
        %2108 = vmatpush1.xpose.msra.mxu0 0.0
        %2109 = vmatprep.subr.mxu0 0.0
        %v2110 = vand.u32 %v2001, 4294901760
        %v2111 = vsub.f32 %v2001, %v2110
        %v2112 = vand.u32 %v2111, 4294901760
        %v2113 = vsub.f32 %v2111, %v2112
        %v2114 = vand.u32 %v2113, 4294901760
        %2115 = vmatpush1.xpose.msra.mxu0 %v2114
        %2116 = vmatprep.subr.mxu0 0.0
        %2117 = vmatpush2.xpose.msra.mxu0 0.0
        %2118 = vmatprep.subr.mxu0 0.0
        %2119 = vmatpush2.xpose.msra.mxu0 0.0
        %2120 = vmatprep.subr.mxu0 0.0
        %2121 = vmatpush2.xpose.msra.mxu0 0.0
        %2122 = vmatprep.subr.mxu0 0.0
        %2123 = vmatpush2.xpose.msra.mxu0 0.0
        %2124 = vmatprep.subr.mxu0 0.0
        %2125 = vmatpush2.xpose.msra.mxu0 0.0
        %2126 = vmatprep.subr.mxu0 0.0
        %2127 = vmatpush2.xpose.msra.mxu0 0.0
        %2128 = vmatprep.subr.mxu0 0.0
        %2129 = vmatpush2.xpose.msra.mxu0 0.0
        %2130 = vmatprep.subr.mxu0 0.0
        %2131 = vmatpush2.xpose.msra.mxu0 0.0
        %2132 = vmatprep.subr.mxu0 0.0
        %2133 = vmatpush2.xpose.msra.mxu0 0.0
        %2134 = vmatprep.subr.mxu0 0.0
        %2135 = vmatpush2.xpose.msra.mxu0 0.0
        %2136 = vmatprep.subr.mxu0 0.0
        %2137 = vmatpush2.xpose.msra.mxu0 0.0
        %2138 = vmatprep.subr.mxu0 0.0
        %2139 = vmatpush2.xpose.msra.mxu0 0.0
        %2140 = vmatprep.subr.mxu0 0.0
        %2141 = vmatpush2.xpose.msra.mxu0 0.0
        %2142 = vmatprep.subr.mxu0 0.0
        %2143 = vmatpush2.xpose.msra.mxu0 0.0
        %2144 = vmatprep.subr.mxu0 0.0
        %2145 = vmatpush2.xpose.msra.mxu0 0.0
        %2146 = vmatprep.subr.mxu0 0.0
        %2147 = vmatpush2.xpose.msra.mxu0 0.0
        %2148 = vmatprep.mubr.f32.mxu0 0.0
        %v2149 = vand.u32 %v1998, 4294901760
        %2150 = vmatmul.mubr.f32.gmra.mxu0 %v2149
        %v2151 = vpop.f32.mrf.mxu0
        %v2152 = vadd.f32 %v2076, %v2151
        %v2153 = vpop.f32.mrf.mxu0
        %2154 = vdwg.mxu0
        %2155 = vmatprep.subr.mxu0 0.0
        %2156 = vmatpush1.xpose.msra.mxu0 0.0
        %2157 = vmatprep.subr.mxu0 0.0
        %2158 = vmatpush1.xpose.msra.mxu0 0.0
        %2159 = vmatprep.subr.mxu0 0.0
        %2160 = vmatpush1.xpose.msra.mxu0 0.0
        %2161 = vmatprep.subr.mxu0 0.0
        %2162 = vmatpush1.xpose.msra.mxu0 0.0
        %2163 = vmatprep.subr.mxu0 0.0
        %2164 = vmatpush1.xpose.msra.mxu0 0.0
        %2165 = vmatprep.subr.mxu0 0.0
        %2166 = vmatpush1.xpose.msra.mxu0 0.0
        %2167 = vmatprep.subr.mxu0 0.0
        %2168 = vmatpush1.xpose.msra.mxu0 0.0
        %2169 = vmatprep.subr.mxu0 0.0
        %2170 = vmatpush1.xpose.msra.mxu0 0.0
        %2171 = vmatprep.subr.mxu0 0.0
        %2172 = vmatpush1.xpose.msra.mxu0 0.0
        %2173 = vmatprep.subr.mxu0 0.0
        %2174 = vmatpush1.xpose.msra.mxu0 0.0
        %2175 = vmatprep.subr.mxu0 0.0
        %2176 = vmatpush1.xpose.msra.mxu0 0.0
        %2177 = vmatprep.subr.mxu0 0.0
        %2178 = vmatpush1.xpose.msra.mxu0 0.0
        %2179 = vmatprep.subr.mxu0 0.0
        %2180 = vmatpush1.xpose.msra.mxu0 0.0
        %2181 = vmatprep.subr.mxu0 0.0
        %2182 = vmatpush1.xpose.msra.mxu0 0.0
        %2183 = vmatprep.subr.mxu0 0.0
        %2184 = vmatpush1.xpose.msra.mxu0 0.0
        %2185 = vmatprep.subr.mxu0 0.0
        %v2186 = vand.u32 %v2001, 4294901760
        %v2187 = vsub.f32 %v2001, %v2186
        %2188 = vmatpush1.xpose.msra.mxu0 %v2187
        %2189 = vmatprep.subr.mxu0 0.0
        %2190 = vmatpush2.xpose.msra.mxu0 0.0
        %2191 = vmatprep.subr.mxu0 0.0
        %2192 = vmatpush2.xpose.msra.mxu0 0.0
        %2193 = vmatprep.subr.mxu0 0.0
        %2194 = vmatpush2.xpose.msra.mxu0 0.0
        %2195 = vmatprep.subr.mxu0 0.0
        %2196 = vmatpush2.xpose.msra.mxu0 0.0
        %2197 = vmatprep.subr.mxu0 0.0
        %2198 = vmatpush2.xpose.msra.mxu0 0.0
        %2199 = vmatprep.subr.mxu0 0.0
        %2200 = vmatpush2.xpose.msra.mxu0 0.0
        %2201 = vmatprep.subr.mxu0 0.0
        %2202 = vmatpush2.xpose.msra.mxu0 0.0
        %2203 = vmatprep.subr.mxu0 0.0
        %2204 = vmatpush2.xpose.msra.mxu0 0.0
        %2205 = vmatprep.subr.mxu0 0.0
        %2206 = vmatpush2.xpose.msra.mxu0 0.0
        %2207 = vmatprep.subr.mxu0 0.0
        %2208 = vmatpush2.xpose.msra.mxu0 0.0
        %2209 = vmatprep.subr.mxu0 0.0
        %2210 = vmatpush2.xpose.msra.mxu0 0.0
        %2211 = vmatprep.subr.mxu0 0.0
        %2212 = vmatpush2.xpose.msra.mxu0 0.0
        %2213 = vmatprep.subr.mxu0 0.0
        %2214 = vmatpush2.xpose.msra.mxu0 0.0
        %2215 = vmatprep.subr.mxu0 0.0
        %2216 = vmatpush2.xpose.msra.mxu0 0.0
        %2217 = vmatprep.subr.mxu0 0.0
        %2218 = vmatpush2.xpose.msra.mxu0 0.0
        %2219 = vmatprep.subr.mxu0 0.0
        %2220 = vmatpush2.xpose.msra.mxu0 0.0
        %2221 = vmatprep.mubr.f32.mxu0 0.0
        %v2222 = vand.u32 %v1998, 4294901760
        %v2223 = vsub.f32 %v1998, %v2222
        %2224 = vmatmul.mubr.f32.gmra.mxu0 %v2223
        %v2225 = vpop.f32.mrf.mxu0
        %v2226 = vadd.f32 %v2152, %v2225
        %v2227 = vpop.f32.mrf.mxu0
        %2228 = vdwg.mxu0
        %2229 = vmatprep.subr.mxu0 0.0
        %2230 = vmatpush1.xpose.msra.mxu0 0.0
        %2231 = vmatprep.subr.mxu0 0.0
        %2232 = vmatpush1.xpose.msra.mxu0 0.0
        %2233 = vmatprep.subr.mxu0 0.0
        %2234 = vmatpush1.xpose.msra.mxu0 0.0
        %2235 = vmatprep.subr.mxu0 0.0
        %2236 = vmatpush1.xpose.msra.mxu0 0.0
        %2237 = vmatprep.subr.mxu0 0.0
        %2238 = vmatpush1.xpose.msra.mxu0 0.0
        %2239 = vmatprep.subr.mxu0 0.0
        %2240 = vmatpush1.xpose.msra.mxu0 0.0
        %2241 = vmatprep.subr.mxu0 0.0
        %2242 = vmatpush1.xpose.msra.mxu0 0.0
        %2243 = vmatprep.subr.mxu0 0.0
        %2244 = vmatpush1.xpose.msra.mxu0 0.0
        %2245 = vmatprep.subr.mxu0 0.0
        %2246 = vmatpush1.xpose.msra.mxu0 0.0
        %2247 = vmatprep.subr.mxu0 0.0
        %2248 = vmatpush1.xpose.msra.mxu0 0.0
        %2249 = vmatprep.subr.mxu0 0.0
        %2250 = vmatpush1.xpose.msra.mxu0 0.0
        %2251 = vmatprep.subr.mxu0 0.0
        %2252 = vmatpush1.xpose.msra.mxu0 0.0
        %2253 = vmatprep.subr.mxu0 0.0
        %2254 = vmatpush1.xpose.msra.mxu0 0.0
        %2255 = vmatprep.subr.mxu0 0.0
        %2256 = vmatpush1.xpose.msra.mxu0 0.0
        %2257 = vmatprep.subr.mxu0 0.0
        %2258 = vmatpush1.xpose.msra.mxu0 0.0
        %2259 = vmatprep.subr.mxu0 0.0
        %v2260 = vand.u32 %v2001, 4294901760
        %2261 = vmatpush1.xpose.msra.mxu0 %v2260
        %2262 = vmatprep.subr.mxu0 0.0
        %2263 = vmatpush2.xpose.msra.mxu0 0.0
        %2264 = vmatprep.subr.mxu0 0.0
        %2265 = vmatpush2.xpose.msra.mxu0 0.0
        %2266 = vmatprep.subr.mxu0 0.0
        %2267 = vmatpush2.xpose.msra.mxu0 0.0
        %2268 = vmatprep.subr.mxu0 0.0
        %2269 = vmatpush2.xpose.msra.mxu0 0.0
        %2270 = vmatprep.subr.mxu0 0.0
        %2271 = vmatpush2.xpose.msra.mxu0 0.0
        %2272 = vmatprep.subr.mxu0 0.0
        %2273 = vmatpush2.xpose.msra.mxu0 0.0
        %2274 = vmatprep.subr.mxu0 0.0
        %2275 = vmatpush2.xpose.msra.mxu0 0.0
        %2276 = vmatprep.subr.mxu0 0.0
        %2277 = vmatpush2.xpose.msra.mxu0 0.0
        %2278 = vmatprep.subr.mxu0 0.0
        %2279 = vmatpush2.xpose.msra.mxu0 0.0
        %2280 = vmatprep.subr.mxu0 0.0
        %2281 = vmatpush2.xpose.msra.mxu0 0.0
        %2282 = vmatprep.subr.mxu0 0.0
        %2283 = vmatpush2.xpose.msra.mxu0 0.0
        %2284 = vmatprep.subr.mxu0 0.0
        %2285 = vmatpush2.xpose.msra.mxu0 0.0
        %2286 = vmatprep.subr.mxu0 0.0
        %2287 = vmatpush2.xpose.msra.mxu0 0.0
        %2288 = vmatprep.subr.mxu0 0.0
        %2289 = vmatpush2.xpose.msra.mxu0 0.0
        %2290 = vmatprep.subr.mxu0 0.0
        %2291 = vmatpush2.xpose.msra.mxu0 0.0
        %2292 = vmatprep.subr.mxu0 0.0
        %2293 = vmatpush2.xpose.msra.mxu0 0.0
        %2294 = vmatprep.mubr.f32.mxu0 0.0
        %v2295 = vand.u32 %v1998, 4294901760
        %v2296 = vsub.f32 %v1998, %v2295
        %v2297 = vand.u32 %v2296, 4294901760
        %2298 = vmatmul.mubr.f32.gmra.mxu0 %v2297
        %v2299 = vpop.f32.mrf.mxu0
        %v2300 = vadd.f32 %v2226, %v2299
        %v2301 = vpop.f32.mrf.mxu0
        %2302 = vdwg.mxu0
        %2303 = vmatprep.subr.mxu0 0.0
        %2304 = vmatpush1.xpose.msra.mxu0 0.0
        %2305 = vmatprep.subr.mxu0 0.0
        %2306 = vmatpush1.xpose.msra.mxu0 0.0
        %2307 = vmatprep.subr.mxu0 0.0
        %2308 = vmatpush1.xpose.msra.mxu0 0.0
        %2309 = vmatprep.subr.mxu0 0.0
        %2310 = vmatpush1.xpose.msra.mxu0 0.0
        %2311 = vmatprep.subr.mxu0 0.0
        %2312 = vmatpush1.xpose.msra.mxu0 0.0
        %2313 = vmatprep.subr.mxu0 0.0
        %2314 = vmatpush1.xpose.msra.mxu0 0.0
        %2315 = vmatprep.subr.mxu0 0.0
        %2316 = vmatpush1.xpose.msra.mxu0 0.0
        %2317 = vmatprep.subr.mxu0 0.0
        %2318 = vmatpush1.xpose.msra.mxu0 0.0
        %2319 = vmatprep.subr.mxu0 0.0
        %2320 = vmatpush1.xpose.msra.mxu0 0.0
        %2321 = vmatprep.subr.mxu0 0.0
        %2322 = vmatpush1.xpose.msra.mxu0 0.0
        %2323 = vmatprep.subr.mxu0 0.0
        %2324 = vmatpush1.xpose.msra.mxu0 0.0
        %2325 = vmatprep.subr.mxu0 0.0
        %2326 = vmatpush1.xpose.msra.mxu0 0.0
        %2327 = vmatprep.subr.mxu0 0.0
        %2328 = vmatpush1.xpose.msra.mxu0 0.0
        %2329 = vmatprep.subr.mxu0 0.0
        %2330 = vmatpush1.xpose.msra.mxu0 0.0
        %2331 = vmatprep.subr.mxu0 0.0
        %2332 = vmatpush1.xpose.msra.mxu0 0.0
        %2333 = vmatprep.subr.mxu0 0.0
        %v2334 = vand.u32 %v2001, 4294901760
        %v2335 = vsub.f32 %v2001, %v2334
        %v2336 = vand.u32 %v2335, 4294901760
        %2337 = vmatpush1.xpose.msra.mxu0 %v2336
        %2338 = vmatprep.subr.mxu0 0.0
        %2339 = vmatpush2.xpose.msra.mxu0 0.0
        %2340 = vmatprep.subr.mxu0 0.0
        %2341 = vmatpush2.xpose.msra.mxu0 0.0
        %2342 = vmatprep.subr.mxu0 0.0
        %2343 = vmatpush2.xpose.msra.mxu0 0.0
        %2344 = vmatprep.subr.mxu0 0.0
        %2345 = vmatpush2.xpose.msra.mxu0 0.0
        %2346 = vmatprep.subr.mxu0 0.0
        %2347 = vmatpush2.xpose.msra.mxu0 0.0
        %2348 = vmatprep.subr.mxu0 0.0
        %2349 = vmatpush2.xpose.msra.mxu0 0.0
        %2350 = vmatprep.subr.mxu0 0.0
        %2351 = vmatpush2.xpose.msra.mxu0 0.0
        %2352 = vmatprep.subr.mxu0 0.0
        %2353 = vmatpush2.xpose.msra.mxu0 0.0
        %2354 = vmatprep.subr.mxu0 0.0
        %2355 = vmatpush2.xpose.msra.mxu0 0.0
        %2356 = vmatprep.subr.mxu0 0.0
        %2357 = vmatpush2.xpose.msra.mxu0 0.0
        %2358 = vmatprep.subr.mxu0 0.0
        %2359 = vmatpush2.xpose.msra.mxu0 0.0
        %2360 = vmatprep.subr.mxu0 0.0
        %2361 = vmatpush2.xpose.msra.mxu0 0.0
        %2362 = vmatprep.subr.mxu0 0.0
        %2363 = vmatpush2.xpose.msra.mxu0 0.0
        %2364 = vmatprep.subr.mxu0 0.0
        %2365 = vmatpush2.xpose.msra.mxu0 0.0
        %2366 = vmatprep.subr.mxu0 0.0
        %2367 = vmatpush2.xpose.msra.mxu0 0.0
        %2368 = vmatprep.subr.mxu0 0.0
        %2369 = vmatpush2.xpose.msra.mxu0 0.0
        %2370 = vmatprep.mubr.f32.mxu0 0.0
        %v2371 = vand.u32 %v1998, 4294901760
        %2372 = vmatmul.mubr.f32.gmra.mxu0 %v2371
        %v2373 = vpop.f32.mrf.mxu0
        %v2374 = vadd.f32 %v2300, %v2373
        %v2375 = vpop.f32.mrf.mxu0
        %2376 = vdwg.mxu0
        %2377 = vmatprep.subr.mxu0 0.0
        %2378 = vmatpush1.xpose.msra.mxu0 0.0
        %2379 = vmatprep.subr.mxu0 0.0
        %2380 = vmatpush1.xpose.msra.mxu0 0.0
        %2381 = vmatprep.subr.mxu0 0.0
        %2382 = vmatpush1.xpose.msra.mxu0 0.0
        %2383 = vmatprep.subr.mxu0 0.0
        %2384 = vmatpush1.xpose.msra.mxu0 0.0
        %2385 = vmatprep.subr.mxu0 0.0
        %2386 = vmatpush1.xpose.msra.mxu0 0.0
        %2387 = vmatprep.subr.mxu0 0.0
        %2388 = vmatpush1.xpose.msra.mxu0 0.0
        %2389 = vmatprep.subr.mxu0 0.0
        %2390 = vmatpush1.xpose.msra.mxu0 0.0
        %2391 = vmatprep.subr.mxu0 0.0
        %2392 = vmatpush1.xpose.msra.mxu0 0.0
        %2393 = vmatprep.subr.mxu0 0.0
        %2394 = vmatpush1.xpose.msra.mxu0 0.0
        %2395 = vmatprep.subr.mxu0 0.0
        %2396 = vmatpush1.xpose.msra.mxu0 0.0
        %2397 = vmatprep.subr.mxu0 0.0
        %2398 = vmatpush1.xpose.msra.mxu0 0.0
        %2399 = vmatprep.subr.mxu0 0.0
        %2400 = vmatpush1.xpose.msra.mxu0 0.0
        %2401 = vmatprep.subr.mxu0 0.0
        %2402 = vmatpush1.xpose.msra.mxu0 0.0
        %2403 = vmatprep.subr.mxu0 0.0
        %2404 = vmatpush1.xpose.msra.mxu0 0.0
        %2405 = vmatprep.subr.mxu0 0.0
        %2406 = vmatpush1.xpose.msra.mxu0 0.0
        %2407 = vmatprep.subr.mxu0 0.0
        %v2408 = vand.u32 %v2001, 4294901760
        %2409 = vmatpush1.xpose.msra.mxu0 %v2408
        %2410 = vmatprep.subr.mxu0 0.0
        %2411 = vmatpush2.xpose.msra.mxu0 0.0
        %2412 = vmatprep.subr.mxu0 0.0
        %2413 = vmatpush2.xpose.msra.mxu0 0.0
        %2414 = vmatprep.subr.mxu0 0.0
        %2415 = vmatpush2.xpose.msra.mxu0 0.0
        %2416 = vmatprep.subr.mxu0 0.0
        %2417 = vmatpush2.xpose.msra.mxu0 0.0
        %2418 = vmatprep.subr.mxu0 0.0
        %2419 = vmatpush2.xpose.msra.mxu0 0.0
        %2420 = vmatprep.subr.mxu0 0.0
        %2421 = vmatpush2.xpose.msra.mxu0 0.0
        %2422 = vmatprep.subr.mxu0 0.0
        %2423 = vmatpush2.xpose.msra.mxu0 0.0
        %2424 = vmatprep.subr.mxu0 0.0
        %2425 = vmatpush2.xpose.msra.mxu0 0.0
        %2426 = vmatprep.subr.mxu0 0.0
        %2427 = vmatpush2.xpose.msra.mxu0 0.0
        %2428 = vmatprep.subr.mxu0 0.0
        %2429 = vmatpush2.xpose.msra.mxu0 0.0
        %2430 = vmatprep.subr.mxu0 0.0
        %2431 = vmatpush2.xpose.msra.mxu0 0.0
        %2432 = vmatprep.subr.mxu0 0.0
        %2433 = vmatpush2.xpose.msra.mxu0 0.0
        %2434 = vmatprep.subr.mxu0 0.0
        %2435 = vmatpush2.xpose.msra.mxu0 0.0
        %2436 = vmatprep.subr.mxu0 0.0
        %2437 = vmatpush2.xpose.msra.mxu0 0.0
        %2438 = vmatprep.subr.mxu0 0.0
        %2439 = vmatpush2.xpose.msra.mxu0 0.0
        %2440 = vmatprep.subr.mxu0 0.0
        %2441 = vmatpush2.xpose.msra.mxu0 0.0
        %2442 = vmatprep.mubr.f32.mxu0 0.0
        %v2443 = vand.u32 %v1998, 4294901760
        %2444 = vmatmul.mubr.f32.gmra.mxu0 %v2443
        %v2445 = vpop.f32.mrf.mxu0
        %v2446 = vadd.f32 %v2374, %v2445
        %v2447 = vpop.f32.mrf.mxu0
        %2448 = vdwg.mxu0
        %v2449 = vmul.f32 %v2446, 0.125
        %v2450 = vld [vmem:[%s474] sm:$0xff]
        %v2451 = vld [vmem:[%s477] sm:$0x1]
        %2453 = vset.pattern.permute.xlu0 0
        %2454 = vperm.xlu0 %2453, %v2450
        %v2455 = vpop.permute.xlu0 %2454
        %v2458 = vlaneseq
        %v2459 = vshrl.u32 %v2458, 7
        %v2460 = vsub.s32 0, %v2459
        %v2461 = vrot.slane %v2451, %v2460
        %v2463 = vmul.f32 %v2455, %v2461
        %v2464 = vmul.f32 %v2449, %v2463
        %vm2465 = vcmp.eq.f32.partialorder %v2464, 0.0
        %v2466 = vsel %vm2465, 1e-10, %v2464
        %v2467 = vlaneseq
        %v2468 = vshrl.u32 %v2467, 7
        %v2469 = vlaneseq
        %v2470 = vand.u32 %v2469, 127
        %vm2471 = vcmp.gt.s32.totalorder %v2470, %v2468
        %v2472 = vsel %vm2471, -inf, %v2466
        %v2473 = vsel %vm1996, %v2472, -inf
        %2474 = vmax.xlane.f32.xlu0 %v2473
        %v2475 = vpop.xlane.xlu0 %2474
        %v2476 = vsub.f32 %v2472, %v2475
        %v2477 = vmul.f32 %v2476, 1.442695
        %v2478 = vpow.pop %v2477
        %v2479 = vsel %vm1996, %v2478, 0.0
        %2480 = vadd.xlane.f32.xlu0 %v2479
        %v2481 = vpop.xlane.xlu0 %2480
        %v2482 = vrcp.pop %v2481
        %v2483 = vmul.f32 %v2478, %v2482
        %v2485 = vsel %vm1996, %v2483, 0
        %2487 = vmatprep.subr.mxu0 0.0
        %2488 = vmatpush1.msra.mxu0 0.0
        %2489 = vmatprep.subr.mxu0 0.0
        %2490 = vmatpush1.msra.mxu0 0.0
        %2491 = vmatprep.subr.mxu0 0.0
        %2492 = vmatpush1.msra.mxu0 0.0
        %2493 = vmatprep.subr.mxu0 0.0
        %2494 = vmatpush1.msra.mxu0 0.0
        %2495 = vmatprep.subr.mxu0 0.0
        %2496 = vmatpush1.msra.mxu0 0.0
        %2497 = vmatprep.subr.mxu0 0.0
        %2498 = vmatpush1.msra.mxu0 0.0
        %2499 = vmatprep.subr.mxu0 0.0
        %2500 = vmatpush1.msra.mxu0 0.0
        %2501 = vmatprep.subr.mxu0 0.0
        %2502 = vmatpush1.msra.mxu0 0.0
        %2503 = vmatprep.subr.mxu0 0.0
        %2504 = vmatpush1.msra.mxu0 0.0
        %2505 = vmatprep.subr.mxu0 0.0
        %2506 = vmatpush1.msra.mxu0 0.0
        %2507 = vmatprep.subr.mxu0 0.0
        %2508 = vmatpush1.msra.mxu0 0.0
        %2509 = vmatprep.subr.mxu0 0.0
        %2510 = vmatpush1.msra.mxu0 0.0
        %2511 = vmatprep.subr.mxu0 0.0
        %2512 = vmatpush1.msra.mxu0 0.0
        %2513 = vmatprep.subr.mxu0 0.0
        %2514 = vmatpush1.msra.mxu0 0.0
        %2515 = vmatprep.subr.mxu0 0.0
        %2516 = vmatpush1.msra.mxu0 0.0
        %2517 = vmatprep.subr.mxu0 0.0
        %v2518 = vand.u32 %v1993, 4294901760
        %2519 = vmatpush1.msra.mxu0 %v2518
        %2520 = vmatprep.subr.mxu0 0.0
        %2521 = vmatpush2.msra.mxu0 0.0
        %2522 = vmatprep.subr.mxu0 0.0
        %2523 = vmatpush2.msra.mxu0 0.0
        %2524 = vmatprep.subr.mxu0 0.0
        %2525 = vmatpush2.msra.mxu0 0.0
        %2526 = vmatprep.subr.mxu0 0.0
        %2527 = vmatpush2.msra.mxu0 0.0
        %2528 = vmatprep.subr.mxu0 0.0
        %2529 = vmatpush2.msra.mxu0 0.0
        %2530 = vmatprep.subr.mxu0 0.0
        %2531 = vmatpush2.msra.mxu0 0.0
        %2532 = vmatprep.subr.mxu0 0.0
        %2533 = vmatpush2.msra.mxu0 0.0
        %2534 = vmatprep.subr.mxu0 0.0
        %2535 = vmatpush2.msra.mxu0 0.0
        %2536 = vmatprep.subr.mxu0 0.0
        %2537 = vmatpush2.msra.mxu0 0.0
        %2538 = vmatprep.subr.mxu0 0.0
        %2539 = vmatpush2.msra.mxu0 0.0
        %2540 = vmatprep.subr.mxu0 0.0
        %2541 = vmatpush2.msra.mxu0 0.0
        %2542 = vmatprep.subr.mxu0 0.0
        %2543 = vmatpush2.msra.mxu0 0.0
        %2544 = vmatprep.subr.mxu0 0.0
        %2545 = vmatpush2.msra.mxu0 0.0
        %2546 = vmatprep.subr.mxu0 0.0
        %2547 = vmatpush2.msra.mxu0 0.0
        %2548 = vmatprep.subr.mxu0 0.0
        %2549 = vmatpush2.msra.mxu0 0.0
        %2550 = vmatprep.subr.mxu0 0.0
        %2551 = vmatpush2.msra.mxu0 0.0
        %2552 = vmatprep.mubr.f32.mxu0 0.0
        %v2553 = vand.u32 %v2485, 4294901760
        %v2554 = vsub.f32 %v2485, %v2553
        %v2555 = vand.u32 %v2554, 4294901760
        %v2556 = vsub.f32 %v2554, %v2555
        %v2557 = vand.u32 %v2556, 4294901760
        %2558 = vmatmul.mubr.f32.gmra.mxu0 %v2557
        %v2559 = vpop.f32.mrf.mxu0
        %v2560 = vadd.f32 0.0, %v2559
        %v2561 = vpop.f32.mrf.mxu0
        %2562 = vdwg.mxu0
        %2563 = vmatprep.subr.mxu0 0.0
        %2564 = vmatpush1.msra.mxu0 0.0
        %2565 = vmatprep.subr.mxu0 0.0
        %2566 = vmatpush1.msra.mxu0 0.0
        %2567 = vmatprep.subr.mxu0 0.0
        %2568 = vmatpush1.msra.mxu0 0.0
        %2569 = vmatprep.subr.mxu0 0.0
        %2570 = vmatpush1.msra.mxu0 0.0
        %2571 = vmatprep.subr.mxu0 0.0
        %2572 = vmatpush1.msra.mxu0 0.0
        %2573 = vmatprep.subr.mxu0 0.0
        %2574 = vmatpush1.msra.mxu0 0.0
        %2575 = vmatprep.subr.mxu0 0.0
        %2576 = vmatpush1.msra.mxu0 0.0
        %2577 = vmatprep.subr.mxu0 0.0
        %2578 = vmatpush1.msra.mxu0 0.0
        %2579 = vmatprep.subr.mxu0 0.0
        %2580 = vmatpush1.msra.mxu0 0.0
        %2581 = vmatprep.subr.mxu0 0.0
        %2582 = vmatpush1.msra.mxu0 0.0
        %2583 = vmatprep.subr.mxu0 0.0
        %2584 = vmatpush1.msra.mxu0 0.0
        %2585 = vmatprep.subr.mxu0 0.0
        %2586 = vmatpush1.msra.mxu0 0.0
        %2587 = vmatprep.subr.mxu0 0.0
        %2588 = vmatpush1.msra.mxu0 0.0
        %2589 = vmatprep.subr.mxu0 0.0
        %2590 = vmatpush1.msra.mxu0 0.0
        %2591 = vmatprep.subr.mxu0 0.0
        %2592 = vmatpush1.msra.mxu0 0.0
        %2593 = vmatprep.subr.mxu0 0.0
        %v2594 = vand.u32 %v1993, 4294901760
        %v2595 = vsub.f32 %v1993, %v2594
        %v2596 = vand.u32 %v2595, 4294901760
        %v2597 = vsub.f32 %v2595, %v2596
        %v2598 = vand.u32 %v2597, 4294901760
        %2599 = vmatpush1.msra.mxu0 %v2598
        %2600 = vmatprep.subr.mxu0 0.0
        %2601 = vmatpush2.msra.mxu0 0.0
        %2602 = vmatprep.subr.mxu0 0.0
        %2603 = vmatpush2.msra.mxu0 0.0
        %2604 = vmatprep.subr.mxu0 0.0
        %2605 = vmatpush2.msra.mxu0 0.0
        %2606 = vmatprep.subr.mxu0 0.0
        %2607 = vmatpush2.msra.mxu0 0.0
        %2608 = vmatprep.subr.mxu0 0.0
        %2609 = vmatpush2.msra.mxu0 0.0
        %2610 = vmatprep.subr.mxu0 0.0
        %2611 = vmatpush2.msra.mxu0 0.0
        %2612 = vmatprep.subr.mxu0 0.0
        %2613 = vmatpush2.msra.mxu0 0.0
        %2614 = vmatprep.subr.mxu0 0.0
        %2615 = vmatpush2.msra.mxu0 0.0
        %2616 = vmatprep.subr.mxu0 0.0
        %2617 = vmatpush2.msra.mxu0 0.0
        %2618 = vmatprep.subr.mxu0 0.0
        %2619 = vmatpush2.msra.mxu0 0.0
        %2620 = vmatprep.subr.mxu0 0.0
        %2621 = vmatpush2.msra.mxu0 0.0
        %2622 = vmatprep.subr.mxu0 0.0
        %2623 = vmatpush2.msra.mxu0 0.0
        %2624 = vmatprep.subr.mxu0 0.0
        %2625 = vmatpush2.msra.mxu0 0.0
        %2626 = vmatprep.subr.mxu0 0.0
        %2627 = vmatpush2.msra.mxu0 0.0
        %2628 = vmatprep.subr.mxu0 0.0
        %2629 = vmatpush2.msra.mxu0 0.0
        %2630 = vmatprep.subr.mxu0 0.0
        %2631 = vmatpush2.msra.mxu0 0.0
        %2632 = vmatprep.mubr.f32.mxu0 0.0
        %v2633 = vand.u32 %v2485, 4294901760
        %2634 = vmatmul.mubr.f32.gmra.mxu0 %v2633
        %v2635 = vpop.f32.mrf.mxu0
        %v2636 = vadd.f32 %v2560, %v2635
        %v2637 = vpop.f32.mrf.mxu0
        %2638 = vdwg.mxu0
        %2639 = vmatprep.subr.mxu0 0.0
        %2640 = vmatpush1.msra.mxu0 0.0
        %2641 = vmatprep.subr.mxu0 0.0
        %2642 = vmatpush1.msra.mxu0 0.0
        %2643 = vmatprep.subr.mxu0 0.0
        %2644 = vmatpush1.msra.mxu0 0.0
        %2645 = vmatprep.subr.mxu0 0.0
        %2646 = vmatpush1.msra.mxu0 0.0
        %2647 = vmatprep.subr.mxu0 0.0
        %2648 = vmatpush1.msra.mxu0 0.0
        %2649 = vmatprep.subr.mxu0 0.0
        %2650 = vmatpush1.msra.mxu0 0.0
        %2651 = vmatprep.subr.mxu0 0.0
        %2652 = vmatpush1.msra.mxu0 0.0
        %2653 = vmatprep.subr.mxu0 0.0
        %2654 = vmatpush1.msra.mxu0 0.0
        %2655 = vmatprep.subr.mxu0 0.0
        %2656 = vmatpush1.msra.mxu0 0.0
        %2657 = vmatprep.subr.mxu0 0.0
        %2658 = vmatpush1.msra.mxu0 0.0
        %2659 = vmatprep.subr.mxu0 0.0
        %2660 = vmatpush1.msra.mxu0 0.0
        %2661 = vmatprep.subr.mxu0 0.0
        %2662 = vmatpush1.msra.mxu0 0.0
        %2663 = vmatprep.subr.mxu0 0.0
        %2664 = vmatpush1.msra.mxu0 0.0
        %2665 = vmatprep.subr.mxu0 0.0
        %2666 = vmatpush1.msra.mxu0 0.0
        %2667 = vmatprep.subr.mxu0 0.0
        %2668 = vmatpush1.msra.mxu0 0.0
        %2669 = vmatprep.subr.mxu0 0.0
        %v2670 = vand.u32 %v1993, 4294901760
        %v2671 = vsub.f32 %v1993, %v2670
        %2672 = vmatpush1.msra.mxu0 %v2671
        %2673 = vmatprep.subr.mxu0 0.0
        %2674 = vmatpush2.msra.mxu0 0.0
        %2675 = vmatprep.subr.mxu0 0.0
        %2676 = vmatpush2.msra.mxu0 0.0
        %2677 = vmatprep.subr.mxu0 0.0
        %2678 = vmatpush2.msra.mxu0 0.0
        %2679 = vmatprep.subr.mxu0 0.0
        %2680 = vmatpush2.msra.mxu0 0.0
        %2681 = vmatprep.subr.mxu0 0.0
        %2682 = vmatpush2.msra.mxu0 0.0
        %2683 = vmatprep.subr.mxu0 0.0
        %2684 = vmatpush2.msra.mxu0 0.0
        %2685 = vmatprep.subr.mxu0 0.0
        %2686 = vmatpush2.msra.mxu0 0.0
        %2687 = vmatprep.subr.mxu0 0.0
        %2688 = vmatpush2.msra.mxu0 0.0
        %2689 = vmatprep.subr.mxu0 0.0
        %2690 = vmatpush2.msra.mxu0 0.0
        %2691 = vmatprep.subr.mxu0 0.0
        %2692 = vmatpush2.msra.mxu0 0.0
        %2693 = vmatprep.subr.mxu0 0.0
        %2694 = vmatpush2.msra.mxu0 0.0
        %2695 = vmatprep.subr.mxu0 0.0
        %2696 = vmatpush2.msra.mxu0 0.0
        %2697 = vmatprep.subr.mxu0 0.0
        %2698 = vmatpush2.msra.mxu0 0.0
        %2699 = vmatprep.subr.mxu0 0.0
        %2700 = vmatpush2.msra.mxu0 0.0
        %2701 = vmatprep.subr.mxu0 0.0
        %2702 = vmatpush2.msra.mxu0 0.0
        %2703 = vmatprep.subr.mxu0 0.0
        %2704 = vmatpush2.msra.mxu0 0.0
        %2705 = vmatprep.mubr.f32.mxu0 0.0
        %v2706 = vand.u32 %v2485, 4294901760
        %v2707 = vsub.f32 %v2485, %v2706
        %2708 = vmatmul.mubr.f32.gmra.mxu0 %v2707
        %v2709 = vpop.f32.mrf.mxu0
        %v2710 = vadd.f32 %v2636, %v2709
        %v2711 = vpop.f32.mrf.mxu0
        %2712 = vdwg.mxu0
        %2713 = vmatprep.subr.mxu0 0.0
        %2714 = vmatpush1.msra.mxu0 0.0
        %2715 = vmatprep.subr.mxu0 0.0
        %2716 = vmatpush1.msra.mxu0 0.0
        %2717 = vmatprep.subr.mxu0 0.0
        %2718 = vmatpush1.msra.mxu0 0.0
        %2719 = vmatprep.subr.mxu0 0.0
        %2720 = vmatpush1.msra.mxu0 0.0
        %2721 = vmatprep.subr.mxu0 0.0
        %2722 = vmatpush1.msra.mxu0 0.0
        %2723 = vmatprep.subr.mxu0 0.0
        %2724 = vmatpush1.msra.mxu0 0.0
        %2725 = vmatprep.subr.mxu0 0.0
        %2726 = vmatpush1.msra.mxu0 0.0
        %2727 = vmatprep.subr.mxu0 0.0
        %2728 = vmatpush1.msra.mxu0 0.0
        %2729 = vmatprep.subr.mxu0 0.0
        %2730 = vmatpush1.msra.mxu0 0.0
        %2731 = vmatprep.subr.mxu0 0.0
        %2732 = vmatpush1.msra.mxu0 0.0
        %2733 = vmatprep.subr.mxu0 0.0
        %2734 = vmatpush1.msra.mxu0 0.0
        %2735 = vmatprep.subr.mxu0 0.0
        %2736 = vmatpush1.msra.mxu0 0.0
        %2737 = vmatprep.subr.mxu0 0.0
        %2738 = vmatpush1.msra.mxu0 0.0
        %2739 = vmatprep.subr.mxu0 0.0
        %2740 = vmatpush1.msra.mxu0 0.0
        %2741 = vmatprep.subr.mxu0 0.0
        %2742 = vmatpush1.msra.mxu0 0.0
        %2743 = vmatprep.subr.mxu0 0.0
        %v2744 = vand.u32 %v1993, 4294901760
        %2745 = vmatpush1.msra.mxu0 %v2744
        %2746 = vmatprep.subr.mxu0 0.0
        %2747 = vmatpush2.msra.mxu0 0.0
        %2748 = vmatprep.subr.mxu0 0.0
        %2749 = vmatpush2.msra.mxu0 0.0
        %2750 = vmatprep.subr.mxu0 0.0
        %2751 = vmatpush2.msra.mxu0 0.0
        %2752 = vmatprep.subr.mxu0 0.0
        %2753 = vmatpush2.msra.mxu0 0.0
        %2754 = vmatprep.subr.mxu0 0.0
        %2755 = vmatpush2.msra.mxu0 0.0
        %2756 = vmatprep.subr.mxu0 0.0
        %2757 = vmatpush2.msra.mxu0 0.0
        %2758 = vmatprep.subr.mxu0 0.0
        %2759 = vmatpush2.msra.mxu0 0.0
        %2760 = vmatprep.subr.mxu0 0.0
        %2761 = vmatpush2.msra.mxu0 0.0
        %2762 = vmatprep.subr.mxu0 0.0
        %2763 = vmatpush2.msra.mxu0 0.0
        %2764 = vmatprep.subr.mxu0 0.0
        %2765 = vmatpush2.msra.mxu0 0.0
        %2766 = vmatprep.subr.mxu0 0.0
        %2767 = vmatpush2.msra.mxu0 0.0
        %2768 = vmatprep.subr.mxu0 0.0
        %2769 = vmatpush2.msra.mxu0 0.0
        %2770 = vmatprep.subr.mxu0 0.0
        %2771 = vmatpush2.msra.mxu0 0.0
        %2772 = vmatprep.subr.mxu0 0.0
        %2773 = vmatpush2.msra.mxu0 0.0
        %2774 = vmatprep.subr.mxu0 0.0
        %2775 = vmatpush2.msra.mxu0 0.0
        %2776 = vmatprep.subr.mxu0 0.0
        %2777 = vmatpush2.msra.mxu0 0.0
        %2778 = vmatprep.mubr.f32.mxu0 0.0
        %v2779 = vand.u32 %v2485, 4294901760
        %v2780 = vsub.f32 %v2485, %v2779
        %v2781 = vand.u32 %v2780, 4294901760
        %2782 = vmatmul.mubr.f32.gmra.mxu0 %v2781
        %v2783 = vpop.f32.mrf.mxu0
        %v2784 = vadd.f32 %v2710, %v2783
        %v2785 = vpop.f32.mrf.mxu0
        %2786 = vdwg.mxu0
        %2787 = vmatprep.subr.mxu0 0.0
        %2788 = vmatpush1.msra.mxu0 0.0
        %2789 = vmatprep.subr.mxu0 0.0
        %2790 = vmatpush1.msra.mxu0 0.0
        %2791 = vmatprep.subr.mxu0 0.0
        %2792 = vmatpush1.msra.mxu0 0.0
        %2793 = vmatprep.subr.mxu0 0.0
        %2794 = vmatpush1.msra.mxu0 0.0
        %2795 = vmatprep.subr.mxu0 0.0
        %2796 = vmatpush1.msra.mxu0 0.0
        %2797 = vmatprep.subr.mxu0 0.0
        %2798 = vmatpush1.msra.mxu0 0.0
        %2799 = vmatprep.subr.mxu0 0.0
        %2800 = vmatpush1.msra.mxu0 0.0
        %2801 = vmatprep.subr.mxu0 0.0
        %2802 = vmatpush1.msra.mxu0 0.0
        %2803 = vmatprep.subr.mxu0 0.0
        %2804 = vmatpush1.msra.mxu0 0.0
        %2805 = vmatprep.subr.mxu0 0.0
        %2806 = vmatpush1.msra.mxu0 0.0
        %2807 = vmatprep.subr.mxu0 0.0
        %2808 = vmatpush1.msra.mxu0 0.0
        %2809 = vmatprep.subr.mxu0 0.0
        %2810 = vmatpush1.msra.mxu0 0.0
        %2811 = vmatprep.subr.mxu0 0.0
        %2812 = vmatpush1.msra.mxu0 0.0
        %2813 = vmatprep.subr.mxu0 0.0
        %2814 = vmatpush1.msra.mxu0 0.0
        %2815 = vmatprep.subr.mxu0 0.0
        %2816 = vmatpush1.msra.mxu0 0.0
        %2817 = vmatprep.subr.mxu0 0.0
        %v2818 = vand.u32 %v1993, 4294901760
        %v2819 = vsub.f32 %v1993, %v2818
        %v2820 = vand.u32 %v2819, 4294901760
        %2821 = vmatpush1.msra.mxu0 %v2820
        %2822 = vmatprep.subr.mxu0 0.0
        %2823 = vmatpush2.msra.mxu0 0.0
        %2824 = vmatprep.subr.mxu0 0.0
        %2825 = vmatpush2.msra.mxu0 0.0
        %2826 = vmatprep.subr.mxu0 0.0
        %2827 = vmatpush2.msra.mxu0 0.0
        %2828 = vmatprep.subr.mxu0 0.0
        %2829 = vmatpush2.msra.mxu0 0.0
        %2830 = vmatprep.subr.mxu0 0.0
        %2831 = vmatpush2.msra.mxu0 0.0
        %2832 = vmatprep.subr.mxu0 0.0
        %2833 = vmatpush2.msra.mxu0 0.0
        %2834 = vmatprep.subr.mxu0 0.0
        %2835 = vmatpush2.msra.mxu0 0.0
        %2836 = vmatprep.subr.mxu0 0.0
        %2837 = vmatpush2.msra.mxu0 0.0
        %2838 = vmatprep.subr.mxu0 0.0
        %2839 = vmatpush2.msra.mxu0 0.0
        %2840 = vmatprep.subr.mxu0 0.0
        %2841 = vmatpush2.msra.mxu0 0.0
        %2842 = vmatprep.subr.mxu0 0.0
        %2843 = vmatpush2.msra.mxu0 0.0
        %2844 = vmatprep.subr.mxu0 0.0
        %2845 = vmatpush2.msra.mxu0 0.0
        %2846 = vmatprep.subr.mxu0 0.0
        %2847 = vmatpush2.msra.mxu0 0.0
        %2848 = vmatprep.subr.mxu0 0.0
        %2849 = vmatpush2.msra.mxu0 0.0
        %2850 = vmatprep.subr.mxu0 0.0
        %2851 = vmatpush2.msra.mxu0 0.0
        %2852 = vmatprep.subr.mxu0 0.0
        %2853 = vmatpush2.msra.mxu0 0.0
        %2854 = vmatprep.mubr.f32.mxu0 0.0
        %v2855 = vand.u32 %v2485, 4294901760
        %2856 = vmatmul.mubr.f32.gmra.mxu0 %v2855
        %v2857 = vpop.f32.mrf.mxu0
        %v2858 = vadd.f32 %v2784, %v2857
        %v2859 = vpop.f32.mrf.mxu0
        %2860 = vdwg.mxu0
        %2861 = vmatprep.subr.mxu0 0.0
        %2862 = vmatpush1.msra.mxu0 0.0
        %2863 = vmatprep.subr.mxu0 0.0
        %2864 = vmatpush1.msra.mxu0 0.0
        %2865 = vmatprep.subr.mxu0 0.0
        %2866 = vmatpush1.msra.mxu0 0.0
        %2867 = vmatprep.subr.mxu0 0.0
        %2868 = vmatpush1.msra.mxu0 0.0
        %2869 = vmatprep.subr.mxu0 0.0
        %2870 = vmatpush1.msra.mxu0 0.0
        %2871 = vmatprep.subr.mxu0 0.0
        %2872 = vmatpush1.msra.mxu0 0.0
        %2873 = vmatprep.subr.mxu0 0.0
        %2874 = vmatpush1.msra.mxu0 0.0
        %2875 = vmatprep.subr.mxu0 0.0
        %2876 = vmatpush1.msra.mxu0 0.0
        %2877 = vmatprep.subr.mxu0 0.0
        %2878 = vmatpush1.msra.mxu0 0.0
        %2879 = vmatprep.subr.mxu0 0.0
        %2880 = vmatpush1.msra.mxu0 0.0
        %2881 = vmatprep.subr.mxu0 0.0
        %2882 = vmatpush1.msra.mxu0 0.0
        %2883 = vmatprep.subr.mxu0 0.0
        %2884 = vmatpush1.msra.mxu0 0.0
        %2885 = vmatprep.subr.mxu0 0.0
        %2886 = vmatpush1.msra.mxu0 0.0
        %2887 = vmatprep.subr.mxu0 0.0
        %2888 = vmatpush1.msra.mxu0 0.0
        %2889 = vmatprep.subr.mxu0 0.0
        %2890 = vmatpush1.msra.mxu0 0.0
        %2891 = vmatprep.subr.mxu0 0.0
        %v2892 = vand.u32 %v1993, 4294901760
        %2893 = vmatpush1.msra.mxu0 %v2892
        %2894 = vmatprep.subr.mxu0 0.0
        %2895 = vmatpush2.msra.mxu0 0.0
        %2896 = vmatprep.subr.mxu0 0.0
        %2897 = vmatpush2.msra.mxu0 0.0
        %2898 = vmatprep.subr.mxu0 0.0
        %2899 = vmatpush2.msra.mxu0 0.0
        %2900 = vmatprep.subr.mxu0 0.0
        %2901 = vmatpush2.msra.mxu0 0.0
        %2902 = vmatprep.subr.mxu0 0.0
        %2903 = vmatpush2.msra.mxu0 0.0
        %2904 = vmatprep.subr.mxu0 0.0
        %2905 = vmatpush2.msra.mxu0 0.0
        %2906 = vmatprep.subr.mxu0 0.0
        %2907 = vmatpush2.msra.mxu0 0.0
        %2908 = vmatprep.subr.mxu0 0.0
        %2909 = vmatpush2.msra.mxu0 0.0
        %2910 = vmatprep.subr.mxu0 0.0
        %2911 = vmatpush2.msra.mxu0 0.0
        %2912 = vmatprep.subr.mxu0 0.0
        %2913 = vmatpush2.msra.mxu0 0.0
        %2914 = vmatprep.subr.mxu0 0.0
        %2915 = vmatpush2.msra.mxu0 0.0
        %2916 = vmatprep.subr.mxu0 0.0
        %2917 = vmatpush2.msra.mxu0 0.0
        %2918 = vmatprep.subr.mxu0 0.0
        %2919 = vmatpush2.msra.mxu0 0.0
        %2920 = vmatprep.subr.mxu0 0.0
        %2921 = vmatpush2.msra.mxu0 0.0
        %2922 = vmatprep.subr.mxu0 0.0
        %2923 = vmatpush2.msra.mxu0 0.0
        %2924 = vmatprep.subr.mxu0 0.0
        %2925 = vmatpush2.msra.mxu0 0.0
        %2926 = vmatprep.mubr.f32.mxu0 0.0
        %v2927 = vand.u32 %v2485, 4294901760
        %2928 = vmatmul.mubr.f32.gmra.mxu0 %v2927
        %v2929 = vpop.f32.mrf.mxu0
        %v2930 = vadd.f32 %v2858, %v2929
        %v2931 = vpop.f32.mrf.mxu0
        %2932 = vdwg.mxu0
        %v2933 = vld [vmem:[#allocation2] sm:$0xff]
        %v2935 = vsel %vm1996, %v2930, 0
        %2937 = vmatprep.subr.mxu0 0.0
        %2938 = vmatpush1.msra.mxu0 0.0
        %2939 = vmatprep.subr.mxu0 0.0
        %2940 = vmatpush1.msra.mxu0 0.0
        %2941 = vmatprep.subr.mxu0 0.0
        %2942 = vmatpush1.msra.mxu0 0.0
        %2943 = vmatprep.subr.mxu0 0.0
        %2944 = vmatpush1.msra.mxu0 0.0
        %2945 = vmatprep.subr.mxu0 0.0
        %2946 = vmatpush1.msra.mxu0 0.0
        %2947 = vmatprep.subr.mxu0 0.0
        %2948 = vmatpush1.msra.mxu0 0.0
        %2949 = vmatprep.subr.mxu0 0.0
        %2950 = vmatpush1.msra.mxu0 0.0
        %2951 = vmatprep.subr.mxu0 0.0
        %2952 = vmatpush1.msra.mxu0 0.0
        %2953 = vmatprep.subr.mxu0 0.0
        %2954 = vmatpush1.msra.mxu0 0.0
        %2955 = vmatprep.subr.mxu0 0.0
        %2956 = vmatpush1.msra.mxu0 0.0
        %2957 = vmatprep.subr.mxu0 0.0
        %2958 = vmatpush1.msra.mxu0 0.0
        %2959 = vmatprep.subr.mxu0 0.0
        %2960 = vmatpush1.msra.mxu0 0.0
        %2961 = vmatprep.subr.mxu0 0.0
        %2962 = vmatpush1.msra.mxu0 0.0
        %2963 = vmatprep.subr.mxu0 0.0
        %2964 = vmatpush1.msra.mxu0 0.0
        %2965 = vmatprep.subr.mxu0 0.0
        %2966 = vmatpush1.msra.mxu0 0.0
        %2967 = vmatprep.subr.mxu0 0.0
        %v2968 = vand.u32 %v530, 4294901760
        %2969 = vmatpush1.msra.mxu0 %v2968
        %2970 = vmatprep.subr.mxu0 0.0
        %2971 = vmatpush2.msra.mxu0 0.0
        %2972 = vmatprep.subr.mxu0 0.0
        %2973 = vmatpush2.msra.mxu0 0.0
        %2974 = vmatprep.subr.mxu0 0.0
        %2975 = vmatpush2.msra.mxu0 0.0
        %2976 = vmatprep.subr.mxu0 0.0
        %2977 = vmatpush2.msra.mxu0 0.0
        %2978 = vmatprep.subr.mxu0 0.0
        %2979 = vmatpush2.msra.mxu0 0.0
        %2980 = vmatprep.subr.mxu0 0.0
        %2981 = vmatpush2.msra.mxu0 0.0
        %2982 = vmatprep.subr.mxu0 0.0
        %2983 = vmatpush2.msra.mxu0 0.0
        %2984 = vmatprep.subr.mxu0 0.0
        %2985 = vmatpush2.msra.mxu0 0.0
        %2986 = vmatprep.subr.mxu0 0.0
        %2987 = vmatpush2.msra.mxu0 0.0
        %2988 = vmatprep.subr.mxu0 0.0
        %2989 = vmatpush2.msra.mxu0 0.0
        %2990 = vmatprep.subr.mxu0 0.0
        %2991 = vmatpush2.msra.mxu0 0.0
        %2992 = vmatprep.subr.mxu0 0.0
        %2993 = vmatpush2.msra.mxu0 0.0
        %2994 = vmatprep.subr.mxu0 0.0
        %2995 = vmatpush2.msra.mxu0 0.0
        %2996 = vmatprep.subr.mxu0 0.0
        %2997 = vmatpush2.msra.mxu0 0.0
        %2998 = vmatprep.subr.mxu0 0.0
        %2999 = vmatpush2.msra.mxu0 0.0
        %3000 = vmatprep.subr.mxu0 0.0
        %3001 = vmatpush2.msra.mxu0 0.0
        %3002 = vmatprep.mubr.f32.mxu0 0.0
        %v3003 = vand.u32 %v2935, 4294901760
        %v3004 = vsub.f32 %v2935, %v3003
        %v3005 = vand.u32 %v3004, 4294901760
        %v3006 = vsub.f32 %v3004, %v3005
        %v3007 = vand.u32 %v3006, 4294901760
        %3008 = vmatmul.mubr.f32.gmra.mxu0 %v3007
        %v3009 = vpop.f32.mrf.mxu0
        %v3010 = vadd.f32 0.0, %v3009
        %v3011 = vpop.f32.mrf.mxu0
        %3012 = vdwg.mxu0
        %3013 = vmatprep.subr.mxu0 0.0
        %3014 = vmatpush1.msra.mxu0 0.0
        %3015 = vmatprep.subr.mxu0 0.0
        %3016 = vmatpush1.msra.mxu0 0.0
        %3017 = vmatprep.subr.mxu0 0.0
        %3018 = vmatpush1.msra.mxu0 0.0
        %3019 = vmatprep.subr.mxu0 0.0
        %3020 = vmatpush1.msra.mxu0 0.0
        %3021 = vmatprep.subr.mxu0 0.0
        %3022 = vmatpush1.msra.mxu0 0.0
        %3023 = vmatprep.subr.mxu0 0.0
        %3024 = vmatpush1.msra.mxu0 0.0
        %3025 = vmatprep.subr.mxu0 0.0
        %3026 = vmatpush1.msra.mxu0 0.0
        %3027 = vmatprep.subr.mxu0 0.0
        %3028 = vmatpush1.msra.mxu0 0.0
        %3029 = vmatprep.subr.mxu0 0.0
        %3030 = vmatpush1.msra.mxu0 0.0
        %3031 = vmatprep.subr.mxu0 0.0
        %3032 = vmatpush1.msra.mxu0 0.0
        %3033 = vmatprep.subr.mxu0 0.0
        %3034 = vmatpush1.msra.mxu0 0.0
        %3035 = vmatprep.subr.mxu0 0.0
        %3036 = vmatpush1.msra.mxu0 0.0
        %3037 = vmatprep.subr.mxu0 0.0
        %3038 = vmatpush1.msra.mxu0 0.0
        %3039 = vmatprep.subr.mxu0 0.0
        %3040 = vmatpush1.msra.mxu0 0.0
        %3041 = vmatprep.subr.mxu0 0.0
        %3042 = vmatpush1.msra.mxu0 0.0
        %3043 = vmatprep.subr.mxu0 0.0
        %v3044 = vand.u32 %v530, 4294901760
        %v3045 = vsub.f32 %v530, %v3044
        %v3046 = vand.u32 %v3045, 4294901760
        %v3047 = vsub.f32 %v3045, %v3046
        %v3048 = vand.u32 %v3047, 4294901760
        %3049 = vmatpush1.msra.mxu0 %v3048
        %3050 = vmatprep.subr.mxu0 0.0
        %3051 = vmatpush2.msra.mxu0 0.0
        %3052 = vmatprep.subr.mxu0 0.0
        %3053 = vmatpush2.msra.mxu0 0.0
        %3054 = vmatprep.subr.mxu0 0.0
        %3055 = vmatpush2.msra.mxu0 0.0
        %3056 = vmatprep.subr.mxu0 0.0
        %3057 = vmatpush2.msra.mxu0 0.0
        %3058 = vmatprep.subr.mxu0 0.0
        %3059 = vmatpush2.msra.mxu0 0.0
        %3060 = vmatprep.subr.mxu0 0.0
        %3061 = vmatpush2.msra.mxu0 0.0
        %3062 = vmatprep.subr.mxu0 0.0
        %3063 = vmatpush2.msra.mxu0 0.0
        %3064 = vmatprep.subr.mxu0 0.0
        %3065 = vmatpush2.msra.mxu0 0.0
        %3066 = vmatprep.subr.mxu0 0.0
        %3067 = vmatpush2.msra.mxu0 0.0
        %3068 = vmatprep.subr.mxu0 0.0
        %3069 = vmatpush2.msra.mxu0 0.0
        %3070 = vmatprep.subr.mxu0 0.0
        %3071 = vmatpush2.msra.mxu0 0.0
        %3072 = vmatprep.subr.mxu0 0.0
        %3073 = vmatpush2.msra.mxu0 0.0
        %3074 = vmatprep.subr.mxu0 0.0
        %3075 = vmatpush2.msra.mxu0 0.0
        %3076 = vmatprep.subr.mxu0 0.0
        %3077 = vmatpush2.msra.mxu0 0.0
        %3078 = vmatprep.subr.mxu0 0.0
        %3079 = vmatpush2.msra.mxu0 0.0
        %3080 = vmatprep.subr.mxu0 0.0
        %3081 = vmatpush2.msra.mxu0 0.0
        %3082 = vmatprep.mubr.f32.mxu0 0.0
        %v3083 = vand.u32 %v2935, 4294901760
        %3084 = vmatmul.mubr.f32.gmra.mxu0 %v3083
        %v3085 = vpop.f32.mrf.mxu0
        %v3086 = vadd.f32 %v3010, %v3085
        %v3087 = vpop.f32.mrf.mxu0
        %3088 = vdwg.mxu0
        %3089 = vmatprep.subr.mxu0 0.0
        %3090 = vmatpush1.msra.mxu0 0.0
        %3091 = vmatprep.subr.mxu0 0.0
        %3092 = vmatpush1.msra.mxu0 0.0
        %3093 = vmatprep.subr.mxu0 0.0
        %3094 = vmatpush1.msra.mxu0 0.0
        %3095 = vmatprep.subr.mxu0 0.0
        %3096 = vmatpush1.msra.mxu0 0.0
        %3097 = vmatprep.subr.mxu0 0.0
        %3098 = vmatpush1.msra.mxu0 0.0
        %3099 = vmatprep.subr.mxu0 0.0
        %3100 = vmatpush1.msra.mxu0 0.0
        %3101 = vmatprep.subr.mxu0 0.0
        %3102 = vmatpush1.msra.mxu0 0.0
        %3103 = vmatprep.subr.mxu0 0.0
        %3104 = vmatpush1.msra.mxu0 0.0
        %3105 = vmatprep.subr.mxu0 0.0
        %3106 = vmatpush1.msra.mxu0 0.0
        %3107 = vmatprep.subr.mxu0 0.0
        %3108 = vmatpush1.msra.mxu0 0.0
        %3109 = vmatprep.subr.mxu0 0.0
        %3110 = vmatpush1.msra.mxu0 0.0
        %3111 = vmatprep.subr.mxu0 0.0
        %3112 = vmatpush1.msra.mxu0 0.0
        %3113 = vmatprep.subr.mxu0 0.0
        %3114 = vmatpush1.msra.mxu0 0.0
        %3115 = vmatprep.subr.mxu0 0.0
        %3116 = vmatpush1.msra.mxu0 0.0
        %3117 = vmatprep.subr.mxu0 0.0
        %3118 = vmatpush1.msra.mxu0 0.0
        %3119 = vmatprep.subr.mxu0 0.0
        %v3120 = vand.u32 %v530, 4294901760
        %v3121 = vsub.f32 %v530, %v3120
        %3122 = vmatpush1.msra.mxu0 %v3121
        %3123 = vmatprep.subr.mxu0 0.0
        %3124 = vmatpush2.msra.mxu0 0.0
        %3125 = vmatprep.subr.mxu0 0.0
        %3126 = vmatpush2.msra.mxu0 0.0
        %3127 = vmatprep.subr.mxu0 0.0
        %3128 = vmatpush2.msra.mxu0 0.0
        %3129 = vmatprep.subr.mxu0 0.0
        %3130 = vmatpush2.msra.mxu0 0.0
        %3131 = vmatprep.subr.mxu0 0.0
        %3132 = vmatpush2.msra.mxu0 0.0
        %3133 = vmatprep.subr.mxu0 0.0
        %3134 = vmatpush2.msra.mxu0 0.0
        %3135 = vmatprep.subr.mxu0 0.0
        %3136 = vmatpush2.msra.mxu0 0.0
        %3137 = vmatprep.subr.mxu0 0.0
        %3138 = vmatpush2.msra.mxu0 0.0
        %3139 = vmatprep.subr.mxu0 0.0
        %3140 = vmatpush2.msra.mxu0 0.0
        %3141 = vmatprep.subr.mxu0 0.0
        %3142 = vmatpush2.msra.mxu0 0.0
        %3143 = vmatprep.subr.mxu0 0.0
        %3144 = vmatpush2.msra.mxu0 0.0
        %3145 = vmatprep.subr.mxu0 0.0
        %3146 = vmatpush2.msra.mxu0 0.0
        %3147 = vmatprep.subr.mxu0 0.0
        %3148 = vmatpush2.msra.mxu0 0.0
        %3149 = vmatprep.subr.mxu0 0.0
        %3150 = vmatpush2.msra.mxu0 0.0
        %3151 = vmatprep.subr.mxu0 0.0
        %3152 = vmatpush2.msra.mxu0 0.0
        %3153 = vmatprep.subr.mxu0 0.0
        %3154 = vmatpush2.msra.mxu0 0.0
        %3155 = vmatprep.mubr.f32.mxu0 0.0
        %v3156 = vand.u32 %v2935, 4294901760
        %v3157 = vsub.f32 %v2935, %v3156
        %3158 = vmatmul.mubr.f32.gmra.mxu0 %v3157
        %v3159 = vpop.f32.mrf.mxu0
        %v3160 = vadd.f32 %v3086, %v3159
        %v3161 = vpop.f32.mrf.mxu0
        %3162 = vdwg.mxu0
        %3163 = vmatprep.subr.mxu0 0.0
        %3164 = vmatpush1.msra.mxu0 0.0
        %3165 = vmatprep.subr.mxu0 0.0
        %3166 = vmatpush1.msra.mxu0 0.0
        %3167 = vmatprep.subr.mxu0 0.0
        %3168 = vmatpush1.msra.mxu0 0.0
        %3169 = vmatprep.subr.mxu0 0.0
        %3170 = vmatpush1.msra.mxu0 0.0
        %3171 = vmatprep.subr.mxu0 0.0
        %3172 = vmatpush1.msra.mxu0 0.0
        %3173 = vmatprep.subr.mxu0 0.0
        %3174 = vmatpush1.msra.mxu0 0.0
        %3175 = vmatprep.subr.mxu0 0.0
        %3176 = vmatpush1.msra.mxu0 0.0
        %3177 = vmatprep.subr.mxu0 0.0
        %3178 = vmatpush1.msra.mxu0 0.0
        %3179 = vmatprep.subr.mxu0 0.0
        %3180 = vmatpush1.msra.mxu0 0.0
        %3181 = vmatprep.subr.mxu0 0.0
        %3182 = vmatpush1.msra.mxu0 0.0
        %3183 = vmatprep.subr.mxu0 0.0
        %3184 = vmatpush1.msra.mxu0 0.0
        %3185 = vmatprep.subr.mxu0 0.0
        %3186 = vmatpush1.msra.mxu0 0.0
        %3187 = vmatprep.subr.mxu0 0.0
        %3188 = vmatpush1.msra.mxu0 0.0
        %3189 = vmatprep.subr.mxu0 0.0
        %3190 = vmatpush1.msra.mxu0 0.0
        %3191 = vmatprep.subr.mxu0 0.0
        %3192 = vmatpush1.msra.mxu0 0.0
        %3193 = vmatprep.subr.mxu0 0.0
        %v3194 = vand.u32 %v530, 4294901760
        %3195 = vmatpush1.msra.mxu0 %v3194
        %3196 = vmatprep.subr.mxu0 0.0
        %3197 = vmatpush2.msra.mxu0 0.0
        %3198 = vmatprep.subr.mxu0 0.0
        %3199 = vmatpush2.msra.mxu0 0.0
        %3200 = vmatprep.subr.mxu0 0.0
        %3201 = vmatpush2.msra.mxu0 0.0
        %3202 = vmatprep.subr.mxu0 0.0
        %3203 = vmatpush2.msra.mxu0 0.0
        %3204 = vmatprep.subr.mxu0 0.0
        %3205 = vmatpush2.msra.mxu0 0.0
        %3206 = vmatprep.subr.mxu0 0.0
        %3207 = vmatpush2.msra.mxu0 0.0
        %3208 = vmatprep.subr.mxu0 0.0
        %3209 = vmatpush2.msra.mxu0 0.0
        %3210 = vmatprep.subr.mxu0 0.0
        %3211 = vmatpush2.msra.mxu0 0.0
        %3212 = vmatprep.subr.mxu0 0.0
        %3213 = vmatpush2.msra.mxu0 0.0
        %3214 = vmatprep.subr.mxu0 0.0
        %3215 = vmatpush2.msra.mxu0 0.0
        %3216 = vmatprep.subr.mxu0 0.0
        %3217 = vmatpush2.msra.mxu0 0.0
        %3218 = vmatprep.subr.mxu0 0.0
        %3219 = vmatpush2.msra.mxu0 0.0
        %3220 = vmatprep.subr.mxu0 0.0
        %3221 = vmatpush2.msra.mxu0 0.0
        %3222 = vmatprep.subr.mxu0 0.0
        %3223 = vmatpush2.msra.mxu0 0.0
        %3224 = vmatprep.subr.mxu0 0.0
        %3225 = vmatpush2.msra.mxu0 0.0
        %3226 = vmatprep.subr.mxu0 0.0
        %3227 = vmatpush2.msra.mxu0 0.0
        %3228 = vmatprep.mubr.f32.mxu0 0.0
        %v3229 = vand.u32 %v2935, 4294901760
        %v3230 = vsub.f32 %v2935, %v3229
        %v3231 = vand.u32 %v3230, 4294901760
        %3232 = vmatmul.mubr.f32.gmra.mxu0 %v3231
        %v3233 = vpop.f32.mrf.mxu0
        %v3234 = vadd.f32 %v3160, %v3233
        %v3235 = vpop.f32.mrf.mxu0
        %3236 = vdwg.mxu0
        %3237 = vmatprep.subr.mxu0 0.0
        %3238 = vmatpush1.msra.mxu0 0.0
        %3239 = vmatprep.subr.mxu0 0.0
        %3240 = vmatpush1.msra.mxu0 0.0
        %3241 = vmatprep.subr.mxu0 0.0
        %3242 = vmatpush1.msra.mxu0 0.0
        %3243 = vmatprep.subr.mxu0 0.0
        %3244 = vmatpush1.msra.mxu0 0.0
        %3245 = vmatprep.subr.mxu0 0.0
        %3246 = vmatpush1.msra.mxu0 0.0
        %3247 = vmatprep.subr.mxu0 0.0
        %3248 = vmatpush1.msra.mxu0 0.0
        %3249 = vmatprep.subr.mxu0 0.0
        %3250 = vmatpush1.msra.mxu0 0.0
        %3251 = vmatprep.subr.mxu0 0.0
        %3252 = vmatpush1.msra.mxu0 0.0
        %3253 = vmatprep.subr.mxu0 0.0
        %3254 = vmatpush1.msra.mxu0 0.0
        %3255 = vmatprep.subr.mxu0 0.0
        %3256 = vmatpush1.msra.mxu0 0.0
        %3257 = vmatprep.subr.mxu0 0.0
        %3258 = vmatpush1.msra.mxu0 0.0
        %3259 = vmatprep.subr.mxu0 0.0
        %3260 = vmatpush1.msra.mxu0 0.0
        %3261 = vmatprep.subr.mxu0 0.0
        %3262 = vmatpush1.msra.mxu0 0.0
        %3263 = vmatprep.subr.mxu0 0.0
        %3264 = vmatpush1.msra.mxu0 0.0
        %3265 = vmatprep.subr.mxu0 0.0
        %3266 = vmatpush1.msra.mxu0 0.0
        %3267 = vmatprep.subr.mxu0 0.0
        %v3268 = vand.u32 %v530, 4294901760
        %v3269 = vsub.f32 %v530, %v3268
        %v3270 = vand.u32 %v3269, 4294901760
        %3271 = vmatpush1.msra.mxu0 %v3270
        %3272 = vmatprep.subr.mxu0 0.0
        %3273 = vmatpush2.msra.mxu0 0.0
        %3274 = vmatprep.subr.mxu0 0.0
        %3275 = vmatpush2.msra.mxu0 0.0
        %3276 = vmatprep.subr.mxu0 0.0
        %3277 = vmatpush2.msra.mxu0 0.0
        %3278 = vmatprep.subr.mxu0 0.0
        %3279 = vmatpush2.msra.mxu0 0.0
        %3280 = vmatprep.subr.mxu0 0.0
        %3281 = vmatpush2.msra.mxu0 0.0
        %3282 = vmatprep.subr.mxu0 0.0
        %3283 = vmatpush2.msra.mxu0 0.0
        %3284 = vmatprep.subr.mxu0 0.0
        %3285 = vmatpush2.msra.mxu0 0.0
        %3286 = vmatprep.subr.mxu0 0.0
        %3287 = vmatpush2.msra.mxu0 0.0
        %3288 = vmatprep.subr.mxu0 0.0
        %3289 = vmatpush2.msra.mxu0 0.0
        %3290 = vmatprep.subr.mxu0 0.0
        %3291 = vmatpush2.msra.mxu0 0.0
        %3292 = vmatprep.subr.mxu0 0.0
        %3293 = vmatpush2.msra.mxu0 0.0
        %3294 = vmatprep.subr.mxu0 0.0
        %3295 = vmatpush2.msra.mxu0 0.0
        %3296 = vmatprep.subr.mxu0 0.0
        %3297 = vmatpush2.msra.mxu0 0.0
        %3298 = vmatprep.subr.mxu0 0.0
        %3299 = vmatpush2.msra.mxu0 0.0
        %3300 = vmatprep.subr.mxu0 0.0
        %3301 = vmatpush2.msra.mxu0 0.0
        %3302 = vmatprep.subr.mxu0 0.0
        %3303 = vmatpush2.msra.mxu0 0.0
        %3304 = vmatprep.mubr.f32.mxu0 0.0
        %v3305 = vand.u32 %v2935, 4294901760
        %3306 = vmatmul.mubr.f32.gmra.mxu0 %v3305
        %v3307 = vpop.f32.mrf.mxu0
        %v3308 = vadd.f32 %v3234, %v3307
        %v3309 = vpop.f32.mrf.mxu0
        %3310 = vdwg.mxu0
        %3311 = vmatprep.subr.mxu0 0.0
        %3312 = vmatpush1.msra.mxu0 0.0
        %3313 = vmatprep.subr.mxu0 0.0
        %3314 = vmatpush1.msra.mxu0 0.0
        %3315 = vmatprep.subr.mxu0 0.0
        %3316 = vmatpush1.msra.mxu0 0.0
        %3317 = vmatprep.subr.mxu0 0.0
        %3318 = vmatpush1.msra.mxu0 0.0
        %3319 = vmatprep.subr.mxu0 0.0
        %3320 = vmatpush1.msra.mxu0 0.0
        %3321 = vmatprep.subr.mxu0 0.0
        %3322 = vmatpush1.msra.mxu0 0.0
        %3323 = vmatprep.subr.mxu0 0.0
        %3324 = vmatpush1.msra.mxu0 0.0
        %3325 = vmatprep.subr.mxu0 0.0
        %3326 = vmatpush1.msra.mxu0 0.0
        %3327 = vmatprep.subr.mxu0 0.0
        %3328 = vmatpush1.msra.mxu0 0.0
        %3329 = vmatprep.subr.mxu0 0.0
        %3330 = vmatpush1.msra.mxu0 0.0
        %3331 = vmatprep.subr.mxu0 0.0
        %3332 = vmatpush1.msra.mxu0 0.0
        %3333 = vmatprep.subr.mxu0 0.0
        %3334 = vmatpush1.msra.mxu0 0.0
        %3335 = vmatprep.subr.mxu0 0.0
        %3336 = vmatpush1.msra.mxu0 0.0
        %3337 = vmatprep.subr.mxu0 0.0
        %3338 = vmatpush1.msra.mxu0 0.0
        %3339 = vmatprep.subr.mxu0 0.0
        %3340 = vmatpush1.msra.mxu0 0.0
        %3341 = vmatprep.subr.mxu0 0.0
        %v3342 = vand.u32 %v530, 4294901760
        %3343 = vmatpush1.msra.mxu0 %v3342
        %3344 = vmatprep.subr.mxu0 0.0
        %3345 = vmatpush2.msra.mxu0 0.0
        %3346 = vmatprep.subr.mxu0 0.0
        %3347 = vmatpush2.msra.mxu0 0.0
        %3348 = vmatprep.subr.mxu0 0.0
        %3349 = vmatpush2.msra.mxu0 0.0
        %3350 = vmatprep.subr.mxu0 0.0
        %3351 = vmatpush2.msra.mxu0 0.0
        %3352 = vmatprep.subr.mxu0 0.0
        %3353 = vmatpush2.msra.mxu0 0.0
        %3354 = vmatprep.subr.mxu0 0.0
        %3355 = vmatpush2.msra.mxu0 0.0
        %3356 = vmatprep.subr.mxu0 0.0
        %3357 = vmatpush2.msra.mxu0 0.0
        %3358 = vmatprep.subr.mxu0 0.0
        %3359 = vmatpush2.msra.mxu0 0.0
        %3360 = vmatprep.subr.mxu0 0.0
        %3361 = vmatpush2.msra.mxu0 0.0
        %3362 = vmatprep.subr.mxu0 0.0
        %3363 = vmatpush2.msra.mxu0 0.0
        %3364 = vmatprep.subr.mxu0 0.0
        %3365 = vmatpush2.msra.mxu0 0.0
        %3366 = vmatprep.subr.mxu0 0.0
        %3367 = vmatpush2.msra.mxu0 0.0
        %3368 = vmatprep.subr.mxu0 0.0
        %3369 = vmatpush2.msra.mxu0 0.0
        %3370 = vmatprep.subr.mxu0 0.0
        %3371 = vmatpush2.msra.mxu0 0.0
        %3372 = vmatprep.subr.mxu0 0.0
        %3373 = vmatpush2.msra.mxu0 0.0
        %3374 = vmatprep.subr.mxu0 0.0
        %3375 = vmatpush2.msra.mxu0 0.0
        %3376 = vmatprep.mubr.f32.mxu0 0.0
        %v3377 = vand.u32 %v2935, 4294901760
        %3378 = vmatmul.mubr.f32.gmra.mxu0 %v3377
        %v3379 = vpop.f32.mrf.mxu0
        %v3380 = vadd.f32 %v3308, %v3379
        %v3381 = vpop.f32.mrf.mxu0
        %3382 = vdwg.mxu0
        %v3383 = vadd.f32 %v2933, %v3380
        %3384 = vst.msk [vmem:[#allocation2] sm:$0xff] %vm531, %v3383
        %p3385 = scmp.eq.s32.totalorder %s29, 1
        // Predicated region
        $region65: #{tpu_custom_call.1} parent=59 // pred_check
          %p3386 = pneg %p3385
        $region66: #{tpu_custom_call.1} parent=59 // pred_check_branch
          %3388 = sbr.rel (%p3386) target = $region68
        $region67: #{tpu_custom_call.1} parent=59 // pred_region
          %v3389 = vld [vmem:[#allocation2] sm:$0xff]
          %v3390 = vld [vmem:[%s9] sm:$0x1]
          %v3392 = vlaneseq
          %v3393 = vshrl.u32 %v3392, 7
          %v3394 = vsub.s32 0, %v3393
          %v3395 = vrot.slane %v3390, %v3394
          %v3397 = vadd.f32 %v3389, %v3395
          %3398 = vst.msk [vmem:[%s470] sm:$0xff] %vm531, %v3397
        $region68: #{tpu_custom_call.1} parent=59 // pred_fallthru
          _
        %s3399 = sand.u32 %s299, 1
        %s3400 = scalar_lea.sflag [#allocation4], %s3399
        %s3401 = sand.u32 %s299, 1
        %s3402 = smul.addr %s3401, 8
        %s3403 = scalar_lea.vmem [#allocation3], %s3402
        // Predicated region
        $region69: #{tpu_custom_call.1} parent=59 // pred_check
          %p3404 = pneg %p309
        $region70: #{tpu_custom_call.1} parent=59 // pred_check_branch
          %3406 = sbr.rel (%p3404) target = $region72
        $region71: #{tpu_custom_call.1} parent=59 // pred_region
          %s3408 = ssub.s32 128, 128
          %3409 = vsyncadd %s3400, %s3408
          %s3410 = smul.addr %s28, 128
          %s3411 = scalar_lea.hbm %s10, %s3410
          %s3413 = sshll.u32 %s3403, 4
          %s3414 = int_to_ptr.vmem [resolvable:$true] %s3413
          %3416 = dma.vmem_to_hbm [thread:$0]  %s3414, 128, %s3411, %s3400
        $region72: #{tpu_custom_call.1} parent=59 // pred_fallthru
          _
      $region60: #{tpu_custom_call.1} parent=5 // pred_fallthru
        _
      %p3417 = scmp.le.s32.totalorder 2, %s19
      // Predicated region
      $region73: #{tpu_custom_call.1} parent=5 // pred_check
        %p3418 = pneg %p3417
      $region74: #{tpu_custom_call.1} parent=5 // pred_check_branch
        %3420 = sbr.rel (%p3418) target = $region76
      $region75: #{tpu_custom_call.1} parent=5 // pred_region
        %s3421 = ssub.s32 %s19, 2
        // Predicated region
        $region77: #{tpu_custom_call.1} parent=75 // pred_check
          %p3422 = pneg %p315
        $region78: #{tpu_custom_call.1} parent=75 // pred_check_branch
          %3424 = sbr.rel (%p3422) target = $region80
        $region79: #{tpu_custom_call.1} parent=75 // pred_region
          %s3425 = sand.u32 %s300, 1
          %s3426 = scalar_lea.sflag [#allocation4], %s3425
          %s3427 = sand.u32 %s300, 1
          %s3428 = smul.addr %s3427, 8
          %s3429 = scalar_lea.vmem [#allocation3], %s3428
          %3430 = dma.done %s3426, 128
        $region80: #{tpu_custom_call.1} parent=75 // pred_fallthru
          _
      $region76: #{tpu_custom_call.1} parent=5 // pred_fallthru
        _
    $region6: #{tpu_custom_call.1} parent=1 // loop_footer
      %s23 = sadd.s32 1, %s19
    $region7: #{tpu_custom_call.1} parent=1 // loop_footer_branch
      %18 = sbr.rel target = $region3
    $region8: #{tpu_custom_call.1} parent=1 // loop_exit
      _
    %3431 = vsyncpa [#allocation4], 1
    %s3432 = scalar_lea.sflag [#allocation4], 1
    %3433 = vsyncpa %s3432, 1

</llo_original>
